<compile_context>
chip_gen: v6e
topology: v6e:2x2x1
jax: 0.10.0
libtpu: 0.0.40
codegen_flags: <defaults>
</compile_context>

<pallas_src>
import sys
import numpy as np
import jax
import jax.numpy as jnp
from jax.experimental import pallas as pl
from jax.experimental.pallas import tpu as pltpu

EPS = sys.float_info.epsilon  # matches the torch code's sys.float_info.epsilon


def _round_up(x, m):
    return ((x + m - 1) // m) * m


def _device_vmem_and_cores():
    """(physical VMEM bytes per TensorCore, #TensorCores per chip)."""
    kind = ""
    try:
        kind = jax.devices()[0].device_kind.lower()
    except Exception:
        pass
    vmem = None
    try:
        vmem = int(pltpu.get_tpu_info().vmem_capacity_bytes)
    except Exception:
        vmem = None
    is_v7 = "v7" in kind
    if vmem is None:
        vmem = (64 << 20) if is_v7 else (128 << 20)
    if is_v7:
        vmem = min(vmem, 64 << 20)      # per-TensorCore VMEM on v7x
    cores = 2 if is_v7 else 1
    return vmem, cores


def _step_vmem_bytes(blk, t_k, t_k_pad, n, enc_itemsize):
    """Approximate VMEM needed for one grid step (pipelined blocks + body temps)."""
    big_in = 2 * blk * t_k * n * enc_itemsize           # enc_out + enc_feat (1 buffer)
    small_in = blk * n * 4 + 2 * blk * t_k * 4          # s_t_hat, mask, coverage
    outs = blk * n * 4 + 2 * blk * t_k_pad * 4          # c_t, attn, new coverage
    weights = (n * n + 3 * n + t_k * t_k_pad) * 4       # decode_proj, bias, W_c, v, embed
    io = 2 * (big_in + small_in + outs + weights)       # x2: double-buffered pipeline
    interm = 3 * blk * t_k * n * 4                      # f32 (B,t_k,n) body temporaries
    return io + interm


def _pick_b_blk(b, t_k, t_k_pad, n, enc_itemsize, budget, cores):
    """Batch block: one big block on single-TC chips if it fits, otherwise the
    largest multiple of 8 under `budget` (capped so v7x's 2 TCs both get work)."""
    if cores == 1 and _step_vmem_bytes(b, t_k, t_k_pad, n, enc_itemsize) <= budget:
        return b                              # single grid step, full batch
    blk = _round_up(b, 8)
    if cores > 1 and b > 8:
        blk = min(blk, _round_up(pl.cdiv(b, cores), 8))   # >= `cores` grid steps
    while blk > 8 and _step_vmem_bytes(blk, t_k, t_k_pad, n, enc_itemsize) > budget:
        blk -= 8
    return b if blk >= b else blk


def _make_kernel(t_k, t_k_pad):
    pad = t_k_pad != t_k

    def kernel(s_ref, enc_out_ref, enc_feat_ref, mask_ref, cov_ref,
               wdp_ref, bdp_ref, wc_ref, v_ref, *rest):
        # Block shapes (per grid step, B = batch block):
        #   s_ref        (B, n)         decoder state s_t_hat
        #   enc_out_ref  (B, t_k, n)    encoder outputs            (bf16 or f32)
        #   enc_feat_ref (B, t_k, n)    precomputed W_h h_i        (bf16 or f32)
        #   mask_ref     (B, t_k)       padding mask
        #   cov_ref      (B, t_k)       coverage
        #   wdp_ref      (n, n)         decode_proj.weight^T
        #   bdp_ref      (1, n)         decode_proj.bias
        #   wc_ref       (1, n)         W_c.weight as a row
        #   v_ref        (1, n)         v.weight as a row
        #   [emb_ref]    (t_k, t_k_pad) 0/1 lane-embedding matrix (only if pad)
        if pad:
            emb_ref, ct_ref, attn_ref, cov_out_ref = rest
        else:
            ct_ref, attn_ref, cov_out_ref = rest
            emb_ref = None

        s = s_ref[...].astype(jnp.float32)                                   # (B, n)
        dec_fea = jnp.dot(s, wdp_ref[...].astype(jnp.float32),
                          preferred_element_type=jnp.float32)
        dec_fea = dec_fea + bdp_ref[...].astype(jnp.float32)                 # (B, n)

        cov = cov_ref[...].astype(jnp.float32)                               # (B, t_k)
        enc_feat = enc_feat_ref[...].astype(jnp.float32)                     # (B, t_k, n)
        att = (enc_feat + dec_fea[:, None, :]
               + cov[:, :, None] * wc_ref[...].astype(jnp.float32))
        e = jnp.tanh(att)                                                    # (B, t_k, n)

        # scores over the feature axis (lane reduce)
        scores = jnp.sum(e * v_ref[...].astype(jnp.float32), axis=-1)        # (B, t_k)

        # softmax over t_k, then mask and renormalize (matches the torch code)
        m = jnp.max(scores, axis=-1, keepdims=True)
        ex = jnp.exp(scores - m)
        sm = ex * pl.reciprocal(jnp.sum(ex, axis=-1, keepdims=True), approx=False)
        attn_masked = sm * mask_ref[...].astype(jnp.float32)
        norm = jnp.sum(attn_masked, axis=-1, keepdims=True)
        attn = attn_masked * pl.reciprocal(norm + EPS, approx=False)         # (B, t_k)

        # context vector on the MXU: (B,1,t_k) @ (B,t_k,n) -> (B,n)
        enc_out = enc_out_ref[...].astype(jnp.float32)
        c_t = jnp.einsum('bqt,btn->bqn', attn[:, None, :], enc_out,
                         preferred_element_type=jnp.float32)[:, 0, :]        # (B, n)

        cov_new = cov + attn                                                 # (B, t_k)

        if pad:
            # Exact lane-dense embedding (B,t_k) -> (B,t_k_pad) via a 0/1
            # selection matmul on the otherwise idle MXU; HIGHEST precision so
            # the values pass through untouched (f32 accurate).
            emb = emb_ref[...]
            attn_out = jnp.dot(attn, emb, preferred_element_type=jnp.float32,
                               precision=jax.lax.Precision.HIGHEST)
            cov_out = jnp.dot(cov_new, emb, preferred_element_type=jnp.float32,
                              precision=jax.lax.Precision.HIGHEST)
        else:
            attn_out = attn
            cov_out = cov_new

        ct_ref[...] = c_t.astype(ct_ref.dtype)
        attn_ref[...] = attn_out.astype(attn_ref.dtype)
        cov_out_ref[...] = cov_out.astype(cov_out_ref.dtype)

    return kernel


def attention_pallas(s_t_hat, encoder_outputs, encoder_feature,
                     enc_padding_mask, coverage,
                     W_dp, b_dp, W_c, v_w, *, b_blk=None):
    """Shapes follow the PyTorch module:
       s_t_hat (b, n), encoder_outputs (b, t_k, n), encoder_feature (b*t_k, n),
       enc_padding_mask (b, t_k), coverage (b, t_k),
       W_dp (n, n), b_dp (n,), W_c (n, 1), v_w (1, n)   [nn.Linear layouts].
       encoder_outputs / encoder_feature may be stored in bf16."""
    b, t_k, n = encoder_outputs.shape
    enc_itemsize = np.dtype(encoder_outputs.dtype).itemsize
    t_k_pad = _round_up(t_k, 128)      # lane-dense stores for attn / coverage

    vmem_phys, cores = _device_vmem_and_cores()
    budget = min((vmem_phys * 5) // 8, 64 << 20)   # ~40 MiB on v7x, 64 MiB on v5e/v6e
    if b_blk is None:
        b_blk = _pick_b_blk(b, t_k, t_k_pad, n, enc_itemsize, budget, cores)

    enc_feat3 = encoder_feature.reshape(b, t_k, n)

    wdp_T = jnp.asarray(W_dp).T                                # (n, n): s @ W^T + b
    bdp = jnp.asarray(b_dp).reshape(1, n).astype(jnp.float32)
    wc_row = jnp.asarray(W_c).reshape(1, n).astype(jnp.float32)
    v_row = jnp.asarray(v_w).reshape(1, n).astype(jnp.float32)

    in_specs = [
        pl.BlockSpec((b_blk, n), lambda i: (i, 0)),            # s_t_hat
        pl.BlockSpec((b_blk, t_k, n), lambda i: (i, 0, 0)),    # encoder_outputs
        pl.BlockSpec((b_blk, t_k, n), lambda i: (i, 0, 0)),    # encoder_feature
        pl.BlockSpec((b_blk, t_k), lambda i: (i, 0)),          # padding mask
        pl.BlockSpec((b_blk, t_k), lambda i: (i, 0)),          # coverage
        pl.BlockSpec((n, n), lambda i: (0, 0)),                # decode_proj W^T
        pl.BlockSpec((1, n), lambda i: (0, 0)),                # decode_proj bias
        pl.BlockSpec((1, n), lambda i: (0, 0)),                # W_c (row)
        pl.BlockSpec((1, n), lambda i: (0, 0)),                # v (row)
    ]
    args = [s_t_hat, encoder_outputs, enc_feat3, enc_padding_mask, coverage,
            wdp_T, bdp, wc_row, v_row]
    if t_k_pad != t_k:
        emb = jnp.eye(t_k, t_k_pad, dtype=jnp.float32)         # 0/1 lane embedding
        in_specs.append(pl.BlockSpec((t_k, t_k_pad), lambda i: (0, 0)))
        args.append(emb)

    out_specs = [
        pl.BlockSpec((b_blk, n), lambda i: (i, 0)),            # c_t
        pl.BlockSpec((b_blk, t_k_pad), lambda i: (i, 0)),      # attn_dist (padded)
        pl.BlockSpec((b_blk, t_k_pad), lambda i: (i, 0)),      # new coverage (padded)
    ]
    out_shape = (
        jax.ShapeDtypeStruct((b, n), jnp.float32),
        jax.ShapeDtypeStruct((b, t_k_pad), jnp.float32),
        jax.ShapeDtypeStruct((b, t_k_pad), jnp.float32),
    )

    grid = (pl.cdiv(b, b_blk),)
    grid_spec = pltpu.PrefetchScalarGridSpec(
        num_scalar_prefetch=0, grid=grid,
        in_specs=in_specs, out_specs=out_specs)

    step_bytes = _step_vmem_bytes(b_blk, t_k, t_k_pad, n, enc_itemsize)
    vmem_limit = int(min(max(step_bytes + (16 << 20), 32 << 20),
                         vmem_phys - (2 << 20)))

    kernel = _make_kernel(t_k, t_k_pad)
    c_t, attn_dist, coverage_new = pl.pallas_call(
        kernel,
        out_shape=out_shape,
        grid_spec=grid_spec,
        compiler_params=pltpu.CompilerParams(
            dimension_semantics=("parallel",),
            vmem_limit_bytes=vmem_limit),
    )(*args)

    if t_k_pad != t_k:
        attn_dist = attn_dist[:, :t_k]
        coverage_new = coverage_new[:, :t_k]
    return c_t, attn_dist, coverage_new


def attention_ref(s_t_hat, encoder_outputs, encoder_feature,
                  enc_padding_mask, coverage, W_dp, b_dp, W_c, v_w):
    """Pure-JAX reference mirroring the PyTorch forward (is_coverage=True)."""
    b, t_k, n = encoder_outputs.shape
    dec_fea = s_t_hat @ W_dp.T + b_dp                            # (b, n)
    att = encoder_feature.reshape(b, t_k, n) + dec_fea[:, None, :]
    att = att + coverage[..., None] * W_c.reshape(1, 1, n)       # coverage feature
    e = jnp.tanh(att)
    scores = jnp.einsum('btn,n->bt', e, v_w.reshape(n))
    attn_ = jax.nn.softmax(scores, axis=1) * enc_padding_mask
    norm = attn_.sum(1, keepdims=True)
    attn = attn_ / (norm + EPS)
    c_t = jnp.einsum('bt,btn->bn', attn, encoder_outputs)
    cov_new = coverage + attn
    return c_t, attn, cov_new


if __name__ == "__main__":
    b, t_k, hidden_dim = 16, 16, 64
    n = 2 * hidden_dim  # 128 -> lane aligned

    key = jax.random.PRNGKey(0)
    ks = jax.random.split(key, 8)
    s_t_hat = jax.random.normal(ks[0], (b, n), jnp.float32)
    # Per perf review: store the two big encoder streams in bf16 in HBM
    # (the kernel upcasts to f32 at load).
    encoder_outputs = jax.random.normal(ks[1], (b, t_k, n), jnp.float32).astype(jnp.bfloat16)
    encoder_feature = jax.random.normal(ks[2], (b * t_k, n), jnp.float32).astype(jnp.bfloat16)
    coverage = jax.random.uniform(ks[3], (b, t_k), jnp.float32)
    lengths = jnp.array([t_k] * (b // 2) + [t_k // 2 + 3] * (b - b // 2), jnp.int32)
    enc_padding_mask = (jnp.arange(t_k)[None, :] < lengths[:, None]).astype(jnp.float32)

    # deterministic "parameters" matching nn.Linear shapes
    W_dp = 0.1 * jax.random.normal(ks[4], (n, n), jnp.float32)   # decode_proj.weight
    b_dp = 0.1 * jax.random.normal(ks[5], (n,), jnp.float32)     # decode_proj.bias
    W_c = 0.1 * jax.random.normal(ks[6], (n, 1), jnp.float32)    # W_c.weight
    v_w = 0.1 * jax.random.normal(ks[7], (1, n), jnp.float32)    # v.weight

    c_t, attn_dist, cov_new = attention_pallas(
        s_t_hat, encoder_outputs, encoder_feature, enc_padding_mask, coverage,
        W_dp, b_dp, W_c, v_w)
    jax.block_until_ready((c_t, attn_dist, cov_new))

    c_t_r, attn_r, cov_r = attention_ref(
        s_t_hat, encoder_outputs, encoder_feature, enc_padding_mask, coverage,
        W_dp, b_dp, W_c, v_w)
    np.testing.assert_allclose(np.asarray(c_t), np.asarray(c_t_r), rtol=1e-5, atol=1e-5)
    np.testing.assert_allclose(np.asarray(attn_dist), np.asarray(attn_r), rtol=1e-5, atol=1e-5)
    np.testing.assert_allclose(np.asarray(cov_new), np.asarray(cov_r), rtol=1e-5, atol=1e-5)

    print("KERNEL_OK")
</pallas_src>

<mosaic_0001>
module attributes {stable_mosaic.version = 11 : i64} {
  func.func @kernel(%arg0: i32, %arg1: memref<16x128xf32, #tpu.memory_space<vmem>>, %arg2: memref<16x16x128xbf16, #tpu.memory_space<vmem>>, %arg3: memref<16x16x128xbf16, #tpu.memory_space<vmem>>, %arg4: memref<16x16xf32, #tpu.memory_space<vmem>>, %arg5: memref<16x16xf32, #tpu.memory_space<vmem>>, %arg6: memref<128x128xf32, #tpu.memory_space<vmem>>, %arg7: memref<1x128xf32, #tpu.memory_space<vmem>>, %arg8: memref<1x128xf32, #tpu.memory_space<vmem>>, %arg9: memref<1x128xf32, #tpu.memory_space<vmem>>, %arg10: memref<16x128xf32, #tpu.memory_space<vmem>>, %arg11: memref<16x128xf32, #tpu.memory_space<vmem>>, %arg12: memref<16x128xf32, #tpu.memory_space<vmem>>, %arg13: memref<16x128xf32, #tpu.memory_space<vmem>>) attributes {dimension_semantics = [#tpu.dimension_semantics<parallel>], iteration_bounds = array<i64: 1>, scalar_prefetch = 0 : i64, scratch_operands = 0 : i64, tpu.core_type = #tpu.core_type<tc>, window_params = [{transform_indices = @transform_0, window_bounds = array<i64: 16, 128>}, {transform_indices = @transform_1, window_bounds = array<i64: 16, 16, 128>}, {transform_indices = @transform_2, window_bounds = array<i64: 16, 16, 128>}, {transform_indices = @transform_3, window_bounds = array<i64: 16, 16>}, {transform_indices = @transform_4, window_bounds = array<i64: 16, 16>}, {pipeline_mode = #tpu.pipeline_mode<synchronous>, transform_indices = @transform_5, window_bounds = array<i64: 128, 128>}, {pipeline_mode = #tpu.pipeline_mode<synchronous>, transform_indices = @transform_6, window_bounds = array<i64: 1, 128>}, {pipeline_mode = #tpu.pipeline_mode<synchronous>, transform_indices = @transform_7, window_bounds = array<i64: 1, 128>}, {pipeline_mode = #tpu.pipeline_mode<synchronous>, transform_indices = @transform_8, window_bounds = array<i64: 1, 128>}, {pipeline_mode = #tpu.pipeline_mode<synchronous>, transform_indices = @transform_9, window_bounds = array<i64: 16, 128>}, {transform_indices = @transform_10, window_bounds = array<i64: 16, 128>}, {transform_indices = @transform_11, window_bounds = array<i64: 16, 128>}, {transform_indices = @transform_12, window_bounds = array<i64: 16, 128>}]} {
    %c0 = arith.constant 0 : index
    %c0_0 = arith.constant 0 : index
    %0 = vector.load %arg1[%c0, %c0_0] : memref<16x128xf32, #tpu.memory_space<vmem>>, vector<16x128xf32>
    %c0_1 = arith.constant 0 : index
    %c0_2 = arith.constant 0 : index
    %1 = vector.load %arg6[%c0_1, %c0_2] : memref<128x128xf32, #tpu.memory_space<vmem>>, vector<128x128xf32>
    %cst = arith.constant dense<0.000000e+00> : vector<16x128xf32>
    %2 = tpu.matmul %0, %1, %cst {dimension_numbers = #tpu.dot_dimension_numbers<[1], [0], [0], [1], [0, 0, 1, 1], [], []>} : vector<16x128xf32>, vector<128x128xf32>, vector<16x128xf32> -> vector<16x128xf32>
    %c0_3 = arith.constant 0 : index
    %c0_4 = arith.constant 0 : index
    %3 = vector.load %arg7[%c0_3, %c0_4] : memref<1x128xf32, #tpu.memory_space<vmem>>, vector<1x128xf32>
    %4 = vector.broadcast %3 : vector<1x128xf32> to vector<16x128xf32>
    %5 = arith.addf %2, %4 : vector<16x128xf32>
    %c0_5 = arith.constant 0 : index
    %c0_6 = arith.constant 0 : index
    %6 = vector.load %arg5[%c0_5, %c0_6] : memref<16x16xf32, #tpu.memory_space<vmem>>, vector<16x16xf32>
    %c0_7 = arith.constant 0 : index
    %c0_8 = arith.constant 0 : index
    %c0_9 = arith.constant 0 : index
    %7 = vector.load %arg3[%c0_7, %c0_8, %c0_9] : memref<16x16x128xbf16, #tpu.memory_space<vmem>>, vector<16x16x128xbf16>
    %8 = arith.extf %7 : vector<16x16x128xbf16> to vector<16x16x128xf32>
    %9 = vector.shape_cast %5 : vector<16x128xf32> to vector<16x1x128xf32>
    %10 = vector.broadcast %9 : vector<16x1x128xf32> to vector<16x16x128xf32>
    %11 = arith.addf %8, %10 : vector<16x16x128xf32>
    %12 = vector.shape_cast %6 : vector<16x16xf32> to vector<16x16x1xf32>
    %c0_10 = arith.constant 0 : index
    %c0_11 = arith.constant 0 : index
    %13 = vector.load %arg8[%c0_10, %c0_11] : memref<1x128xf32, #tpu.memory_space<vmem>>, vector<1x128xf32>
    %14 = vector.shape_cast %13 : vector<1x128xf32> to vector<1x1x128xf32>
    %15 = vector.broadcast %12 : vector<16x16x1xf32> to vector<16x16x128xf32>
    %16 = vector.broadcast %14 : vector<1x1x128xf32> to vector<16x16x128xf32>
    %17 = arith.mulf %15, %16 : vector<16x16x128xf32>
    %18 = arith.addf %11, %17 : vector<16x16x128xf32>
    %19 = math.tanh %18 : vector<16x16x128xf32>
    %c0_12 = arith.constant 0 : index
    %c0_13 = arith.constant 0 : index
    %20 = vector.load %arg9[%c0_12, %c0_13] : memref<1x128xf32, #tpu.memory_space<vmem>>, vector<1x128xf32>
    %21 = vector.shape_cast %20 : vector<1x128xf32> to vector<1x1x128xf32>
    %22 = vector.broadcast %21 : vector<1x1x128xf32> to vector<16x16x128xf32>
    %23 = arith.mulf %19, %22 : vector<16x16x128xf32>
    %cst_14 = arith.constant dense<0.000000e+00> : vector<16x16xf32>
    %24 = vector.multi_reduction <add>, %23, %cst_14 [2] : vector<16x16x128xf32> to vector<16x16xf32>
    %cst_15 = arith.constant dense<0xFF800000> : vector<16xf32>
    %25 = vector.multi_reduction <maximumf>, %24, %cst_15 [1] : vector<16x16xf32> to vector<16xf32>
    %26 = vector.shape_cast %25 : vector<16xf32> to vector<16x1xf32>
    %27 = vector.broadcast %26 : vector<16x1xf32> to vector<16x16xf32>
    %28 = arith.subf %24, %27 : vector<16x16xf32>
    %29 = math.exp %28 : vector<16x16xf32>
    %cst_16 = arith.constant dense<0.000000e+00> : vector<16xf32>
    %30 = vector.multi_reduction <add>, %29, %cst_16 [1] : vector<16x16xf32> to vector<16xf32>
    %31 = vector.shape_cast %30 : vector<16xf32> to vector<16x1xf32>
    %32 = tpu.reciprocal %31 : vector<16x1xf32> -> vector<16x1xf32>
    %33 = vector.broadcast %32 : vector<16x1xf32> to vector<16x16xf32>
    %34 = arith.mulf %29, %33 : vector<16x16xf32>
    %c0_17 = arith.constant 0 : index
    %c0_18 = arith.constant 0 : index
    %35 = vector.load %arg4[%c0_17, %c0_18] : memref<16x16xf32, #tpu.memory_space<vmem>>, vector<16x16xf32>
    %36 = arith.mulf %34, %35 : vector<16x16xf32>
    %cst_19 = arith.constant dense<0.000000e+00> : vector<16xf32>
    %37 = vector.multi_reduction <add>, %36, %cst_19 [1] : vector<16x16xf32> to vector<16xf32>
    %38 = vector.shape_cast %37 : vector<16xf32> to vector<16x1xf32>
    %cst_20 = arith.constant 2.22044605E-16 : f32
    %39 = vector.broadcast %cst_20 : f32 to vector<16x1xf32>
    %40 = arith.addf %38, %39 : vector<16x1xf32>
    %41 = tpu.reciprocal %40 : vector<16x1xf32> -> vector<16x1xf32>
    %42 = vector.broadcast %41 : vector<16x1xf32> to vector<16x16xf32>
    %43 = arith.mulf %36, %42 : vector<16x16xf32>
    %c0_21 = arith.constant 0 : index
    %c0_22 = arith.constant 0 : index
    %c0_23 = arith.constant 0 : index
    %44 = vector.load %arg2[%c0_21, %c0_22, %c0_23] : memref<16x16x128xbf16, #tpu.memory_space<vmem>>, vector<16x16x128xbf16>
    %45 = arith.extf %44 : vector<16x16x128xbf16> to vector<16x16x128xf32>
    %46 = vector.shape_cast %43 : vector<16x16xf32> to vector<16x1x16xf32>
    "tpu.trace_start"() <{level = 10 : i32, message = "bqt,btn->bqn"}> : () -> ()
    %cst_24 = arith.constant dense<0.000000e+00> : vector<16x1x128xf32>
    %47 = tpu.matmul %46, %45, %cst_24 {dimension_numbers = #tpu.dot_dimension_numbers<[2], [1], [1], [2], [0, 0, 0, 1, 1, 2], [0], [0]>} : vector<16x1x16xf32>, vector<16x16x128xf32>, vector<16x1x128xf32> -> vector<16x1x128xf32>
    "tpu.trace_stop"() : () -> ()
    %48 = vector.shape_cast %47 : vector<16x1x128xf32> to vector<16x128xf32>
    %49 = arith.addf %6, %43 : vector<16x16xf32>
    %c0_25 = arith.constant 0 : index
    %c0_26 = arith.constant 0 : index
    %50 = vector.load %arg10[%c0_25, %c0_26] : memref<16x128xf32, #tpu.memory_space<vmem>>, vector<16x128xf32>
    %cst_27 = arith.constant dense<0.000000e+00> : vector<16x128xf32>
    %51 = tpu.matmul %43, %50, %cst_27 {dimension_numbers = #tpu.dot_dimension_numbers<[1], [0], [0], [1], [0, 0, 1, 1], [], []>, precision = #tpu.contract_precision<fp32>} : vector<16x16xf32>, vector<16x128xf32>, vector<16x128xf32> -> vector<16x128xf32>
    %cst_28 = arith.constant dense<0.000000e+00> : vector<16x128xf32>
    %52 = tpu.matmul %49, %50, %cst_28 {dimension_numbers = #tpu.dot_dimension_numbers<[1], [0], [0], [1], [0, 0, 1, 1], [], []>, precision = #tpu.contract_precision<fp32>} : vector<16x16xf32>, vector<16x128xf32>, vector<16x128xf32> -> vector<16x128xf32>
    %c0_29 = arith.constant 0 : index
    %c0_30 = arith.constant 0 : index
    %53 = vector.load %arg11[%c0_29, %c0_30] : memref<16x128xf32, #tpu.memory_space<vmem>>, vector<16x128xf32>
    tpu.vector_store %arg11[%c0_29, %c0_30], %48 {strides = array<i32>} : memref<16x128xf32, #tpu.memory_space<vmem>>, vector<16x128xf32>,
    %c0_31 = arith.constant 0 : index
    %c0_32 = arith.constant 0 : index
    %54 = vector.load %arg12[%c0_31, %c0_32] : memref<16x128xf32, #tpu.memory_space<vmem>>, vector<16x128xf32>
    tpu.vector_store %arg12[%c0_31, %c0_32], %51 {strides = array<i32>} : memref<16x128xf32, #tpu.memory_space<vmem>>, vector<16x128xf32>,
    %c0_33 = arith.constant 0 : index
    %c0_34 = arith.constant 0 : index
    %55 = vector.load %arg13[%c0_33, %c0_34] : memref<16x128xf32, #tpu.memory_space<vmem>>, vector<16x128xf32>
    tpu.vector_store %arg13[%c0_33, %c0_34], %52 {strides = array<i32>} : memref<16x128xf32, #tpu.memory_space<vmem>>, vector<16x128xf32>,
    return
  }
  func.func @transform_0(%arg0: i32) -> (i32, i32) {
    %c0_i32 = arith.constant 0 : i32
    %c0_i32_0 = arith.constant 0 : i32
    return %arg0, %c0_i32 : i32, i32
  }
  func.func @transform_1(%arg0: i32) -> (i32, i32, i32) {
    %c0_i32 = arith.constant 0 : i32
    %c0_i32_0 = arith.constant 0 : i32
    %c0_i32_1 = arith.constant 0 : i32
    return %arg0, %c0_i32, %c0_i32_0 : i32, i32, i32
  }
  func.func @transform_2(%arg0: i32) -> (i32, i32, i32) {
    %c0_i32 = arith.constant 0 : i32
    %c0_i32_0 = arith.constant 0 : i32
    %c0_i32_1 = arith.constant 0 : i32
    return %arg0, %c0_i32, %c0_i32_0 : i32, i32, i32
  }
  func.func @transform_3(%arg0: i32) -> (i32, i32) {
    %c0_i32 = arith.constant 0 : i32
    %c0_i32_0 = arith.constant 0 : i32
    return %arg0, %c0_i32 : i32, i32
  }
  func.func @transform_4(%arg0: i32) -> (i32, i32) {
    %c0_i32 = arith.constant 0 : i32
    %c0_i32_0 = arith.constant 0 : i32
    return %arg0, %c0_i32 : i32, i32
  }
  func.func @transform_5(%arg0: i32) -> (i32, i32) {
    %c0_i32 = arith.constant 0 : i32
    %c0_i32_0 = arith.constant 0 : i32
    %c0_i32_1 = arith.constant 0 : i32
    return %c0_i32, %c0_i32_0 : i32, i32
  }
  func.func @transform_6(%arg0: i32) -> (i32, i32) {
    %c0_i32 = arith.constant 0 : i32
    %c0_i32_0 = arith.constant 0 : i32
    %c0_i32_1 = arith.constant 0 : i32
    return %c0_i32, %c0_i32_0 : i32, i32
  }
  func.func @transform_7(%arg0: i32) -> (i32, i32) {
    %c0_i32 = arith.constant 0 : i32
    %c0_i32_0 = arith.constant 0 : i32
    %c0_i32_1 = arith.constant 0 : i32
    return %c0_i32, %c0_i32_0 : i32, i32
  }
  func.func @transform_8(%arg0: i32) -> (i32, i32) {
    %c0_i32 = arith.constant 0 : i32
    %c0_i32_0 = arith.constant 0 : i32
    %c0_i32_1 = arith.constant 0 : i32
    return %c0_i32, %c0_i32_0 : i32, i32
  }
  func.func @transform_9(%arg0: i32) -> (i32, i32) {
    %c0_i32 = arith.constant 0 : i32
    %c0_i32_0 = arith.constant 0 : i32
    %c0_i32_1 = arith.constant 0 : i32
    return %c0_i32, %c0_i32_0 : i32, i32
  }
  func.func @transform_10(%arg0: i32) -> (i32, i32) {
    %c0_i32 = arith.constant 0 : i32
    %c0_i32_0 = arith.constant 0 : i32
    return %arg0, %c0_i32 : i32, i32
  }
  func.func @transform_11(%arg0: i32) -> (i32, i32) {
    %c0_i32 = arith.constant 0 : i32
    %c0_i32_0 = arith.constant 0 : i32
    return %arg0, %c0_i32 : i32, i32
  }
  func.func @transform_12(%arg0: i32) -> (i32, i32) {
    %c0_i32 = arith.constant 0 : i32
    %c0_i32_0 = arith.constant 0 : i32
    return %arg0, %c0_i32 : i32, i32
  }
}

</mosaic_0001>

<llo_original>
// kernel: tpu_custom_call.1
$region0: #{tpu_custom_call.1}
  #allocation0 [shape = 'u32[]', space=smem, size = 0x4, offset = 0x4, fixed_abs, tag = 'smem constant byte address 0x4 - core index']
  #allocation1 [shape = 'u32[144,128]{1,0:T(1,128)}', space=vmem, size = 0x12000, scoped, tag = 'internal scratch']
  %s0 = inlined_call_operand.hbm [shape: f32[16,128], index: 0, kind: input, shape index: {}]
  %s1 = inlined_call_operand.hbm [shape: bf16[16,16,128], index: 1, kind: input, shape index: {}]
  %s2 = inlined_call_operand.hbm [shape: bf16[16,16,128], index: 2, kind: input, shape index: {}]
  %s3 = inlined_call_operand.hbm [shape: f32[16,16], index: 3, kind: input, shape index: {}]
  %s4 = inlined_call_operand.hbm [shape: f32[16,16], index: 4, kind: input, shape index: {}]
  %s5 = inlined_call_operand.hbm [shape: f32[128,128], index: 5, kind: input, shape index: {}]
  %s6 = inlined_call_operand.hbm [shape: f32[1,128], index: 6, kind: input, shape index: {}]
  %s7 = inlined_call_operand.hbm [shape: f32[1,128], index: 7, kind: input, shape index: {}]
  %s8 = inlined_call_operand.hbm [shape: f32[1,128], index: 8, kind: input, shape index: {}]
  %s9 = inlined_call_operand.vmem [shape: f32[16,128], index: 9, kind: input, shape index: {}]
  %s10 = inlined_call_operand.hbm [shape: f32[16,128], index: 10, kind: output, shape index: {0}]
  %s11 = inlined_call_operand.hbm [shape: f32[16,128], index: 11, kind: output, shape index: {1}]
  %s12 = inlined_call_operand.hbm [shape: f32[16,128], index: 12, kind: output, shape index: {2}]
  %13 = xla_tuple %s10, %s11, %s12
  %s14 = sld [smem:[#allocation0]]
  $region102: #{tpu_custom_call.1} parent=0
    _
  %s16 = ssub.s32 1, %s14
  %s17 = scalar_select 0, %s16, %s14
  $region1: #{tpu_custom_call.1} parent=0
    #allocation2 [shape = 'u8[8192]{0}', space=vmem, size = 0x2000, scoped, tag = 'input window, operand 0, single buffered']
    #allocation3 [shape = 's32[1]{0}', space=sflag, size = 0x4, scoped, tag = 'scoped memory for tpu_custom_call.1']
    #allocation4 [shape = 's32[1]{0}', space=sflag, size = 0x4, scoped, tag = 'scoped memory for tpu_custom_call.1']
    #allocation5 [shape = 'u8[65536]{0}', space=vmem, size = 0x10000, scoped, tag = 'input window, operand 1, single buffered']
    #allocation6 [shape = 's32[1]{0}', space=sflag, size = 0x4, scoped, tag = 'scoped memory for tpu_custom_call.1']
    #allocation7 [shape = 'u8[65536]{0}', space=vmem, size = 0x10000, scoped, tag = 'input window, operand 2, single buffered']
    #allocation8 [shape = 'u8[8192]{0}', space=vmem, size = 0x2000, scoped, tag = 'input window, operand 3, single buffered']
    #allocation9 [shape = 's32[1]{0}', space=sflag, size = 0x4, scoped, tag = 'scoped memory for tpu_custom_call.1']
    #allocation10 [shape = 'u8[8192]{0}', space=vmem, size = 0x2000, scoped, tag = 'input window, operand 4, single buffered']
    #allocation11 [shape = 'u8[65536]{0}', space=vmem, size = 0x10000, scoped, tag = 'input window, operand 5, single buffered']
    #allocation12 [shape = 's32[1]{0}', space=sflag, size = 0x4, scoped, tag = 'scoped memory for tpu_custom_call.1']
    #allocation13 [shape = 'u8[512]{0}', space=vmem, size = 0x400, scoped, tag = 'input window, operand 6, single buffered']
    #allocation14 [shape = 'u8[512]{0}', space=vmem, size = 0x400, scoped, tag = 'input window, operand 7, single buffered']
    #allocation15 [shape = 's32[1]{0}', space=sflag, size = 0x4, scoped, tag = 'scoped memory for tpu_custom_call.1']
    #allocation16 [shape = 'u8[512]{0}', space=vmem, size = 0x400, scoped, tag = 'input window, operand 8, single buffered']
    #allocation17 [shape = 'u8[8192]{0}', space=vmem, size = 0x2000, scoped, tag = 'output window, operand 0, single buffered']
    #allocation18 [shape = 'u8[8192]{0}', space=vmem, size = 0x2000, scoped, tag = 'output window, operand 1, single buffered']
    #allocation19 [shape = 's32[1]{0}', space=sflag, size = 0x4, scoped, tag = 'scoped memory for tpu_custom_call.1']
    #allocation20 [shape = 'u8[8192]{0}', space=vmem, size = 0x2000, scoped, tag = 'output window, operand 2, single buffered']
    %18 = vsyncpa [#allocation3], 0
    %19 = vsyncpa [#allocation6], 0
    %20 = vsyncpa [#allocation9], 0
    %21 = vsyncpa [#allocation12], 0
    %22 = vsyncpa [#allocation15], 0
    %23 = vsyncpa [#allocation4], 0
    %24 = vsyncpa [#allocation19], 0
    // Predicated region
    $region2: #{tpu_custom_call.1} parent=1 // pred_check
      _
    $region3: #{tpu_custom_call.1} parent=1 // pred_check_branch
      %26 = sbr.rel (0) target = $region5
    $region4: #{tpu_custom_call.1} parent=1 // pred_region
      %s28 = ssub.s32 256, 256
      %29 = vsyncadd [#allocation3], %s28
      %s30 = sshll.u32 [#allocation2], 4
      %s31 = int_to_ptr.vmem [resolvable:$true] %s30
      %36 = dma.hbm_to_vmem [thread:$0]  %s0, 256, %s31, [#allocation3], 128, 128, 8
    $region5: #{tpu_custom_call.1} parent=1 // pred_fallthru
      _
    // Predicated region
    $region6: #{tpu_custom_call.1} parent=1 // pred_check
      _
    $region7: #{tpu_custom_call.1} parent=1 // pred_check_branch
      %38 = sbr.rel (0) target = $region9
    $region8: #{tpu_custom_call.1} parent=1 // pred_region
      %s40 = ssub.s32 2048, 2048
      %41 = vsyncadd [#allocation6], %s40
      %s42 = sshll.u32 [#allocation5], 4
      %s43 = int_to_ptr.vmem [resolvable:$true] %s42
      %48 = dma.hbm_to_vmem [thread:$0]  %s1, 2048, %s43, [#allocation6], 64, 64, 4
    $region9: #{tpu_custom_call.1} parent=1 // pred_fallthru
      _
    // Predicated region
    $region10: #{tpu_custom_call.1} parent=1 // pred_check
      _
    $region11: #{tpu_custom_call.1} parent=1 // pred_check_branch
      %50 = sbr.rel (0) target = $region13
    $region12: #{tpu_custom_call.1} parent=1 // pred_region
      %s52 = ssub.s32 2048, 2048
      %53 = vsyncadd [#allocation6], %s52
      %s54 = sshll.u32 [#allocation7], 4
      %s55 = int_to_ptr.vmem [resolvable:$true] %s54
      %60 = dma.hbm_to_vmem [thread:$0]  %s2, 2048, %s55, [#allocation6], 64, 64, 4
    $region13: #{tpu_custom_call.1} parent=1 // pred_fallthru
      _
    // Predicated region
    $region14: #{tpu_custom_call.1} parent=1 // pred_check
      _
    $region15: #{tpu_custom_call.1} parent=1 // pred_check_branch
      %62 = sbr.rel (0) target = $region17
    $region16: #{tpu_custom_call.1} parent=1 // pred_region
      %s64 = ssub.s32 256, 256
      %65 = vsyncadd [#allocation9], %s64
      %s66 = sshll.u32 [#allocation8], 4
      %s67 = int_to_ptr.vmem [resolvable:$true] %s66
      %72 = dma.hbm_to_vmem [thread:$0]  %s3, 256, %s67, [#allocation9], 128, 128, 8
    $region17: #{tpu_custom_call.1} parent=1 // pred_fallthru
      _
    // Predicated region
    $region18: #{tpu_custom_call.1} parent=1 // pred_check
      _
    $region19: #{tpu_custom_call.1} parent=1 // pred_check_branch
      %74 = sbr.rel (0) target = $region21
    $region20: #{tpu_custom_call.1} parent=1 // pred_region
      %s76 = ssub.s32 256, 256
      %77 = vsyncadd [#allocation9], %s76
      %s78 = sshll.u32 [#allocation10], 4
      %s79 = int_to_ptr.vmem [resolvable:$true] %s78
      %84 = dma.hbm_to_vmem [thread:$0]  %s4, 256, %s79, [#allocation9], 128, 128, 8
    $region21: #{tpu_custom_call.1} parent=1 // pred_fallthru
      _
    // Predicated region
    $region22: #{tpu_custom_call.1} parent=1 // pred_check
      _
    $region23: #{tpu_custom_call.1} parent=1 // pred_check_branch
      %86 = sbr.rel (0) target = $region25
    $region24: #{tpu_custom_call.1} parent=1 // pred_region
      %s88 = ssub.s32 2048, 2048
      %89 = vsyncadd [#allocation12], %s88
      %s90 = sshll.u32 [#allocation11], 4
      %s91 = int_to_ptr.vmem [resolvable:$true] %s90
      %96 = dma.hbm_to_vmem [thread:$0]  %s5, 2048, %s91, [#allocation12], 128, 128, 8
    $region25: #{tpu_custom_call.1} parent=1 // pred_fallthru
      _
    // Predicated region
    $region26: #{tpu_custom_call.1} parent=1 // pred_check
      _
    $region27: #{tpu_custom_call.1} parent=1 // pred_check_branch
      %98 = sbr.rel (0) target = $region29
    $region28: #{tpu_custom_call.1} parent=1 // pred_region
      %s100 = ssub.s32 16, 16
      %101 = vsyncadd [#allocation12], %s100
      %s103 = sshll.u32 [#allocation13], 4
      %s104 = int_to_ptr.vmem [resolvable:$true] %s103
      %106 = dma.hbm_to_vmem [thread:$0]  %s6, 16, %s104, [#allocation12]
    $region29: #{tpu_custom_call.1} parent=1 // pred_fallthru
      _
    // Predicated region
    $region30: #{tpu_custom_call.1} parent=1 // pred_check
      _
    $region31: #{tpu_custom_call.1} parent=1 // pred_check_branch
      %108 = sbr.rel (0) target = $region33
    $region32: #{tpu_custom_call.1} parent=1 // pred_region
      %s110 = ssub.s32 16, 16
      %111 = vsyncadd [#allocation15], %s110
      %s113 = sshll.u32 [#allocation14], 4
      %s114 = int_to_ptr.vmem [resolvable:$true] %s113
      %116 = dma.hbm_to_vmem [thread:$0]  %s7, 16, %s114, [#allocation15]
    $region33: #{tpu_custom_call.1} parent=1 // pred_fallthru
      _
    // Predicated region
    $region34: #{tpu_custom_call.1} parent=1 // pred_check
      _
    $region35: #{tpu_custom_call.1} parent=1 // pred_check_branch
      %118 = sbr.rel (0) target = $region37
    $region36: #{tpu_custom_call.1} parent=1 // pred_region
      %s120 = ssub.s32 16, 16
      %121 = vsyncadd [#allocation15], %s120
      %s123 = sshll.u32 [#allocation16], 4
      %s124 = int_to_ptr.vmem [resolvable:$true] %s123
      %126 = dma.hbm_to_vmem [thread:$0]  %s8, 16, %s124, [#allocation15]
    $region37: #{tpu_custom_call.1} parent=1 // pred_fallthru
      _
    // Predicated region
    $region38: #{tpu_custom_call.1} parent=1 // pred_check
      _
    $region39: #{tpu_custom_call.1} parent=1 // pred_check_branch
      %128 = sbr.rel (0) target = $region41
    $region40: #{tpu_custom_call.1} parent=1 // pred_region
      _
    $region41: #{tpu_custom_call.1} parent=1 // pred_fallthru
      _
    // Predicated region
    $region42: #{tpu_custom_call.1} parent=1 // pred_check
      _
    $region43: #{tpu_custom_call.1} parent=1 // pred_check_branch
      %130 = sbr.rel (0) target = $region45
    $region44: #{tpu_custom_call.1} parent=1 // pred_region
      %131 = dma.done [#allocation3], 256
    $region45: #{tpu_custom_call.1} parent=1 // pred_fallthru
      _
    // Predicated region
    $region46: #{tpu_custom_call.1} parent=1 // pred_check
      _
    $region47: #{tpu_custom_call.1} parent=1 // pred_check_branch
      %133 = sbr.rel (0) target = $region49
    $region48: #{tpu_custom_call.1} parent=1 // pred_region
      %134 = dma.done [#allocation6], 2048
    $region49: #{tpu_custom_call.1} parent=1 // pred_fallthru
      _
    // Predicated region
    $region50: #{tpu_custom_call.1} parent=1 // pred_check
      _
    $region51: #{tpu_custom_call.1} parent=1 // pred_check_branch
      %136 = sbr.rel (0) target = $region53
    $region52: #{tpu_custom_call.1} parent=1 // pred_region
      %137 = dma.done [#allocation6], 2048
    $region53: #{tpu_custom_call.1} parent=1 // pred_fallthru
      _
    // Predicated region
    $region54: #{tpu_custom_call.1} parent=1 // pred_check
      _
    $region55: #{tpu_custom_call.1} parent=1 // pred_check_branch
      %139 = sbr.rel (0) target = $region57
    $region56: #{tpu_custom_call.1} parent=1 // pred_region
      %140 = dma.done [#allocation9], 256
    $region57: #{tpu_custom_call.1} parent=1 // pred_fallthru
      _
    // Predicated region
    $region58: #{tpu_custom_call.1} parent=1 // pred_check
      _
    $region59: #{tpu_custom_call.1} parent=1 // pred_check_branch
      %142 = sbr.rel (0) target = $region61
    $region60: #{tpu_custom_call.1} parent=1 // pred_region
      %143 = dma.done [#allocation9], 256
    $region61: #{tpu_custom_call.1} parent=1 // pred_fallthru
      _
    // Predicated region
    $region62: #{tpu_custom_call.1} parent=1 // pred_check
      _
    $region63: #{tpu_custom_call.1} parent=1 // pred_check_branch
      %145 = sbr.rel (0) target = $region65
    $region64: #{tpu_custom_call.1} parent=1 // pred_region
      %146 = dma.done [#allocation12], 2048
    $region65: #{tpu_custom_call.1} parent=1 // pred_fallthru
      _
    // Predicated region
    $region66: #{tpu_custom_call.1} parent=1 // pred_check
      _
    $region67: #{tpu_custom_call.1} parent=1 // pred_check_branch
      %148 = sbr.rel (0) target = $region69
    $region68: #{tpu_custom_call.1} parent=1 // pred_region
      %149 = dma.done [#allocation12], 16
    $region69: #{tpu_custom_call.1} parent=1 // pred_fallthru
      _
    // Predicated region
    $region70: #{tpu_custom_call.1} parent=1 // pred_check
      _
    $region71: #{tpu_custom_call.1} parent=1 // pred_check_branch
      %151 = sbr.rel (0) target = $region73
    $region72: #{tpu_custom_call.1} parent=1 // pred_region
      %152 = dma.done [#allocation15], 16
    $region73: #{tpu_custom_call.1} parent=1 // pred_fallthru
      _
    // Predicated region
    $region74: #{tpu_custom_call.1} parent=1 // pred_check
      _
    $region75: #{tpu_custom_call.1} parent=1 // pred_check_branch
      %154 = sbr.rel (0) target = $region77
    $region76: #{tpu_custom_call.1} parent=1 // pred_region
      %155 = dma.done [#allocation15], 16
    $region77: #{tpu_custom_call.1} parent=1 // pred_fallthru
      _
    %v156 = vld [vmem:[#allocation2] sm:$0xff]
    %v157 = vld [vmem:[#allocation2 + $0x8] sm:$0xff]
    %v158 = vld [vmem:[#allocation11] sm:$0xff]
    %v159 = vld [vmem:[#allocation11 + $0x8] sm:$0xff]
    %v160 = vld [vmem:[#allocation11 + $0x10] sm:$0xff]
    %v161 = vld [vmem:[#allocation11 + $0x18] sm:$0xff]
    %v162 = vld [vmem:[#allocation11 + $0x20] sm:$0xff]
    %v163 = vld [vmem:[#allocation11 + $0x28] sm:$0xff]
    %v164 = vld [vmem:[#allocation11 + $0x30] sm:$0xff]
    %v165 = vld [vmem:[#allocation11 + $0x38] sm:$0xff]
    %v166 = vld [vmem:[#allocation11 + $0x40] sm:$0xff]
    %v167 = vld [vmem:[#allocation11 + $0x48] sm:$0xff]
    %v168 = vld [vmem:[#allocation11 + $0x50] sm:$0xff]
    %v169 = vld [vmem:[#allocation11 + $0x58] sm:$0xff]
    %v170 = vld [vmem:[#allocation11 + $0x60] sm:$0xff]
    %v171 = vld [vmem:[#allocation11 + $0x68] sm:$0xff]
    %v172 = vld [vmem:[#allocation11 + $0x70] sm:$0xff]
    %v173 = vld [vmem:[#allocation11 + $0x78] sm:$0xff]
    %v174 = vld [vmem:[#allocation13] sm:$0x1]
    %v176 = vlaneseq
    %v177 = vshrl.u32 %v176, 7
    %v178 = vsub.s32 0, %v177
    %v179 = vrot.slane %v174, %v178
    %181 = vmatprep.subr.mxu0 0.0
    %182 = vmatpush1.msra.mxu0 %v173
    %183 = vmatprep.subr.mxu0 0.0
    %184 = vmatpush1.msra.mxu0 %v172
    %185 = vmatprep.subr.mxu0 0.0
    %186 = vmatpush1.msra.mxu0 %v171
    %187 = vmatprep.subr.mxu0 0.0
    %188 = vmatpush1.msra.mxu0 %v170
    %189 = vmatprep.subr.mxu0 0.0
    %190 = vmatpush1.msra.mxu0 %v169
    %191 = vmatprep.subr.mxu0 0.0
    %192 = vmatpush1.msra.mxu0 %v168
    %193 = vmatprep.subr.mxu0 0.0
    %194 = vmatpush1.msra.mxu0 %v167
    %195 = vmatprep.subr.mxu0 0.0
    %196 = vmatpush1.msra.mxu0 %v166
    %197 = vmatprep.subr.mxu0 0.0
    %198 = vmatpush1.msra.mxu0 %v165
    %199 = vmatprep.subr.mxu0 0.0
    %200 = vmatpush1.msra.mxu0 %v164
    %201 = vmatprep.subr.mxu0 0.0
    %202 = vmatpush1.msra.mxu0 %v163
    %203 = vmatprep.subr.mxu0 0.0
    %204 = vmatpush1.msra.mxu0 %v162
    %205 = vmatprep.subr.mxu0 0.0
    %206 = vmatpush1.msra.mxu0 %v161
    %207 = vmatprep.subr.mxu0 0.0
    %208 = vmatpush1.msra.mxu0 %v160
    %209 = vmatprep.subr.mxu0 0.0
    %210 = vmatpush1.msra.mxu0 %v159
    %211 = vmatprep.subr.mxu0 0.0
    %212 = vmatpush1.msra.mxu0 %v158
    %213 = vmatprep.subr.mxu0 0.0
    %214 = vmatpush2.msra.mxu0 0.0
    %215 = vmatprep.subr.mxu0 0.0
    %216 = vmatpush2.msra.mxu0 0.0
    %217 = vmatprep.subr.mxu0 0.0
    %218 = vmatpush2.msra.mxu0 0.0
    %219 = vmatprep.subr.mxu0 0.0
    %220 = vmatpush2.msra.mxu0 0.0
    %221 = vmatprep.subr.mxu0 0.0
    %222 = vmatpush2.msra.mxu0 0.0
    %223 = vmatprep.subr.mxu0 0.0
    %224 = vmatpush2.msra.mxu0 0.0
    %225 = vmatprep.subr.mxu0 0.0
    %226 = vmatpush2.msra.mxu0 0.0
    %227 = vmatprep.subr.mxu0 0.0
    %228 = vmatpush2.msra.mxu0 0.0
    %229 = vmatprep.subr.mxu0 0.0
    %230 = vmatpush2.msra.mxu0 0.0
    %231 = vmatprep.subr.mxu0 0.0
    %232 = vmatpush2.msra.mxu0 0.0
    %233 = vmatprep.subr.mxu0 0.0
    %234 = vmatpush2.msra.mxu0 0.0
    %235 = vmatprep.subr.mxu0 0.0
    %236 = vmatpush2.msra.mxu0 0.0
    %237 = vmatprep.subr.mxu0 0.0
    %238 = vmatpush2.msra.mxu0 0.0
    %239 = vmatprep.subr.mxu0 0.0
    %240 = vmatpush2.msra.mxu0 0.0
    %241 = vmatprep.subr.mxu0 0.0
    %242 = vmatpush2.msra.mxu0 0.0
    %243 = vmatprep.subr.mxu0 0.0
    %244 = vmatpush2.msra.mxu0 0.0
    %245 = vmatprep.mubr.f32.mxu0 0.0
    %246 = vmatmul.mubr.f32.gmra.mxu0 %v156
    %v247 = vpop.f32.mrf.mxu0
    %v248 = vadd.f32 %v179, %v247
    %v249 = vpop.f32.mrf.mxu0
    %250 = vmatprep.mubr.f32.mxu0 0.0
    %251 = vmatmul.mubr.f32.gmra.mxu0 %v157
    %v252 = vpop.f32.mrf.mxu0
    %v253 = vadd.f32 %v179, %v252
    %v254 = vpop.f32.mrf.mxu0
    %255 = vdwg.mxu0
    %v256 = vld [vmem:[#allocation10] sm:$0xff]
    %v257 = vld [vmem:[#allocation10 + $0x8] sm:$0xff]
    %v258 = vld [vmem:[#allocation7] sm:$0xf]
    %v259 = vld [vmem:[#allocation7 + $0x4] sm:$0xf]
    %v260 = vld [vmem:[#allocation7 + $0x8] sm:$0xf]
    %v261 = vld [vmem:[#allocation7 + $0xc] sm:$0xf]
    %v262 = vld [vmem:[#allocation7 + $0x10] sm:$0xf]
    %v263 = vld [vmem:[#allocation7 + $0x14] sm:$0xf]
    %v264 = vld [vmem:[#allocation7 + $0x18] sm:$0xf]
    %v265 = vld [vmem:[#allocation7 + $0x1c] sm:$0xf]
    %v266 = vld [vmem:[#allocation7 + $0x20] sm:$0xf]
    %v267 = vld [vmem:[#allocation7 + $0x24] sm:$0xf]
    %v268 = vld [vmem:[#allocation7 + $0x28] sm:$0xf]
    %v269 = vld [vmem:[#allocation7 + $0x2c] sm:$0xf]
    %v270 = vld [vmem:[#allocation7 + $0x30] sm:$0xf]
    %v271 = vld [vmem:[#allocation7 + $0x34] sm:$0xf]
    %v272 = vld [vmem:[#allocation7 + $0x38] sm:$0xf]
    %v273 = vld [vmem:[#allocation7 + $0x3c] sm:$0xf]
    %v274 = vld [vmem:[#allocation7 + $0x40] sm:$0xf]
    %v275 = vld [vmem:[#allocation7 + $0x44] sm:$0xf]
    %v276 = vld [vmem:[#allocation7 + $0x48] sm:$0xf]
    %v277 = vld [vmem:[#allocation7 + $0x4c] sm:$0xf]
    %v278 = vld [vmem:[#allocation7 + $0x50] sm:$0xf]
    %v279 = vld [vmem:[#allocation7 + $0x54] sm:$0xf]
    %v280 = vld [vmem:[#allocation7 + $0x58] sm:$0xf]
    %v281 = vld [vmem:[#allocation7 + $0x5c] sm:$0xf]
    %v282 = vld [vmem:[#allocation7 + $0x60] sm:$0xf]
    %v283 = vld [vmem:[#allocation7 + $0x64] sm:$0xf]
    %v284 = vld [vmem:[#allocation7 + $0x68] sm:$0xf]
    %v285 = vld [vmem:[#allocation7 + $0x6c] sm:$0xf]
    %v286 = vld [vmem:[#allocation7 + $0x70] sm:$0xf]
    %v287 = vld [vmem:[#allocation7 + $0x74] sm:$0xf]
    %v288 = vld [vmem:[#allocation7 + $0x78] sm:$0xf]
    %v289 = vld [vmem:[#allocation7 + $0x7c] sm:$0xf]
    %v290 = vunpack.c.l.bf16 %v258
    %v291 = vunpack.c.l.bf16 %v259
    %v292 = vunpack.c.l.bf16 %v260
    %v293 = vunpack.c.l.bf16 %v261
    %v294 = vunpack.c.l.bf16 %v262
    %v295 = vunpack.c.l.bf16 %v263
    %v296 = vunpack.c.l.bf16 %v264
    %v297 = vunpack.c.l.bf16 %v265
    %v298 = vunpack.c.l.bf16 %v266
    %v299 = vunpack.c.l.bf16 %v267
    %v300 = vunpack.c.l.bf16 %v268
    %v301 = vunpack.c.l.bf16 %v269
    %v302 = vunpack.c.l.bf16 %v270
    %v303 = vunpack.c.l.bf16 %v271
    %v304 = vunpack.c.l.bf16 %v272
    %v305 = vunpack.c.l.bf16 %v273
    %v306 = vunpack.c.l.bf16 %v274
    %v307 = vunpack.c.l.bf16 %v275
    %v308 = vunpack.c.l.bf16 %v276
    %v309 = vunpack.c.l.bf16 %v277
    %v310 = vunpack.c.l.bf16 %v278
    %v311 = vunpack.c.l.bf16 %v279
    %v312 = vunpack.c.l.bf16 %v280
    %v313 = vunpack.c.l.bf16 %v281
    %v314 = vunpack.c.l.bf16 %v282
    %v315 = vunpack.c.l.bf16 %v283
    %v316 = vunpack.c.l.bf16 %v284
    %v317 = vunpack.c.l.bf16 %v285
    %v318 = vunpack.c.l.bf16 %v286
    %v319 = vunpack.c.l.bf16 %v287
    %v320 = vunpack.c.l.bf16 %v288
    %v321 = vunpack.c.l.bf16 %v289
    %v324 = vcombine.high %v248, %v248
    %v326 = vunpack.c.l.s4 1966171168
    %v327 = vunpack.c.0.s8 %v326
    %v328 = vlaneseq
    %v329 = vshrl.u32 %v328, 7
    %v330 = vsub.s32 %v327, %v329
    %v331 = vrot.slane %v248, %v330
    %v333 = vunpack.c.l.s4 1966171168
    %v334 = vunpack.c.0.s8 %v333
    %v335 = vlaneseq
    %v336 = vshrl.u32 %v335, 7
    %v337 = vsub.s32 %v334, %v336
    %v338 = vrot.slane %v324, %v337
    %v339 = vcombine.high %v331, %v331
    %v340 = vcombine.high %v338, %v338
    %v342 = vunpack.c.l.s4 1966171168
    %v343 = vunpack.c.0.s8 %v342
    %v344 = vlaneseq
    %v345 = vshrl.u32 %v344, 7
    %v346 = vsub.s32 %v343, %v345
    %v347 = vrot.slane %v331, %v346
    %v349 = vunpack.c.l.s4 1966171168
    %v350 = vunpack.c.0.s8 %v349
    %v351 = vlaneseq
    %v352 = vshrl.u32 %v351, 7
    %v353 = vsub.s32 %v350, %v352
    %v354 = vrot.slane %v338, %v353
    %v356 = vunpack.c.l.s4 1966171168
    %v357 = vunpack.c.0.s8 %v356
    %v358 = vlaneseq
    %v359 = vshrl.u32 %v358, 7
    %v360 = vsub.s32 %v357, %v359
    %v361 = vrot.slane %v339, %v360
    %v363 = vunpack.c.l.s4 1966171168
    %v364 = vunpack.c.0.s8 %v363
    %v365 = vlaneseq
    %v366 = vshrl.u32 %v365, 7
    %v367 = vsub.s32 %v364, %v366
    %v368 = vrot.slane %v340, %v367
    %v369 = vcombine.high %v347, %v347
    %v370 = vcombine.high %v354, %v354
    %v371 = vcombine.high %v361, %v361
    %v372 = vcombine.high %v368, %v368
    %v373 = vcombine.high %v253, %v253
    %v375 = vunpack.c.l.s4 1966171168
    %v376 = vunpack.c.0.s8 %v375
    %v377 = vlaneseq
    %v378 = vshrl.u32 %v377, 7
    %v379 = vsub.s32 %v376, %v378
    %v380 = vrot.slane %v253, %v379
    %v382 = vunpack.c.l.s4 1966171168
    %v383 = vunpack.c.0.s8 %v382
    %v384 = vlaneseq
    %v385 = vshrl.u32 %v384, 7
    %v386 = vsub.s32 %v383, %v385
    %v387 = vrot.slane %v373, %v386
    %v388 = vcombine.high %v380, %v380
    %v389 = vcombine.high %v387, %v387
    %v391 = vunpack.c.l.s4 1966171168
    %v392 = vunpack.c.0.s8 %v391
    %v393 = vlaneseq
    %v394 = vshrl.u32 %v393, 7
    %v395 = vsub.s32 %v392, %v394
    %v396 = vrot.slane %v380, %v395
    %v398 = vunpack.c.l.s4 1966171168
    %v399 = vunpack.c.0.s8 %v398
    %v400 = vlaneseq
    %v401 = vshrl.u32 %v400, 7
    %v402 = vsub.s32 %v399, %v401
    %v403 = vrot.slane %v387, %v402
    %v405 = vunpack.c.l.s4 1966171168
    %v406 = vunpack.c.0.s8 %v405
    %v407 = vlaneseq
    %v408 = vshrl.u32 %v407, 7
    %v409 = vsub.s32 %v406, %v408
    %v410 = vrot.slane %v388, %v409
    %v412 = vunpack.c.l.s4 1966171168
    %v413 = vunpack.c.0.s8 %v412
    %v414 = vlaneseq
    %v415 = vshrl.u32 %v414, 7
    %v416 = vsub.s32 %v413, %v415
    %v417 = vrot.slane %v389, %v416
    %v418 = vcombine.high %v396, %v396
    %v419 = vcombine.high %v403, %v403
    %v420 = vcombine.high %v410, %v410
    %v421 = vcombine.high %v417, %v417
    %v422 = vlaneseq
    %v423 = vshrl.u32 %v422, 7
    %v424 = vsub.s32 0, %v423
    %v425 = vrot.slane %v347, %v424
    %v426 = vlaneseq
    %v427 = vshrl.u32 %v426, 7
    %v428 = vsub.s32 0, %v427
    %v429 = vrot.slane %v361, %v428
    %v430 = vlaneseq
    %v431 = vshrl.u32 %v430, 7
    %v432 = vsub.s32 0, %v431
    %v433 = vrot.slane %v369, %v432
    %v434 = vlaneseq
    %v435 = vshrl.u32 %v434, 7
    %v436 = vsub.s32 0, %v435
    %v437 = vrot.slane %v371, %v436
    %v438 = vlaneseq
    %v439 = vshrl.u32 %v438, 7
    %v440 = vsub.s32 0, %v439
    %v441 = vrot.slane %v354, %v440
    %v442 = vlaneseq
    %v443 = vshrl.u32 %v442, 7
    %v444 = vsub.s32 0, %v443
    %v445 = vrot.slane %v368, %v444
    %v446 = vlaneseq
    %v447 = vshrl.u32 %v446, 7
    %v448 = vsub.s32 0, %v447
    %v449 = vrot.slane %v370, %v448
    %v450 = vlaneseq
    %v451 = vshrl.u32 %v450, 7
    %v452 = vsub.s32 0, %v451
    %v453 = vrot.slane %v372, %v452
    %v454 = vlaneseq
    %v455 = vshrl.u32 %v454, 7
    %v456 = vsub.s32 0, %v455
    %v457 = vrot.slane %v396, %v456
    %v458 = vlaneseq
    %v459 = vshrl.u32 %v458, 7
    %v460 = vsub.s32 0, %v459
    %v461 = vrot.slane %v410, %v460
    %v462 = vlaneseq
    %v463 = vshrl.u32 %v462, 7
    %v464 = vsub.s32 0, %v463
    %v465 = vrot.slane %v418, %v464
    %v466 = vlaneseq
    %v467 = vshrl.u32 %v466, 7
    %v468 = vsub.s32 0, %v467
    %v469 = vrot.slane %v420, %v468
    %v470 = vlaneseq
    %v471 = vshrl.u32 %v470, 7
    %v472 = vsub.s32 0, %v471
    %v473 = vrot.slane %v403, %v472
    %v474 = vlaneseq
    %v475 = vshrl.u32 %v474, 7
    %v476 = vsub.s32 0, %v475
    %v477 = vrot.slane %v417, %v476
    %v478 = vlaneseq
    %v479 = vshrl.u32 %v478, 7
    %v480 = vsub.s32 0, %v479
    %v481 = vrot.slane %v419, %v480
    %v482 = vlaneseq
    %v483 = vshrl.u32 %v482, 7
    %v484 = vsub.s32 0, %v483
    %v485 = vrot.slane %v421, %v484
    %v502 = vadd.f32 %v290, %v425
    %v503 = vadd.f32 %v291, %v425
    %v504 = vadd.f32 %v292, %v429
    %v505 = vadd.f32 %v293, %v429
    %v506 = vadd.f32 %v294, %v433
    %v507 = vadd.f32 %v295, %v433
    %v508 = vadd.f32 %v296, %v437
    %v509 = vadd.f32 %v297, %v437
    %v510 = vadd.f32 %v298, %v441
    %v511 = vadd.f32 %v299, %v441
    %v512 = vadd.f32 %v300, %v445
    %v513 = vadd.f32 %v301, %v445
    %v514 = vadd.f32 %v302, %v449
    %v515 = vadd.f32 %v303, %v449
    %v516 = vadd.f32 %v304, %v453
    %v517 = vadd.f32 %v305, %v453
    %v518 = vadd.f32 %v306, %v457
    %v519 = vadd.f32 %v307, %v457
    %v520 = vadd.f32 %v308, %v461
    %v521 = vadd.f32 %v309, %v461
    %v522 = vadd.f32 %v310, %v465
    %v523 = vadd.f32 %v311, %v465
    %v524 = vadd.f32 %v312, %v469
    %v525 = vadd.f32 %v313, %v469
    %v526 = vadd.f32 %v314, %v473
    %v527 = vadd.f32 %v315, %v473
    %v528 = vadd.f32 %v316, %v477
    %v529 = vadd.f32 %v317, %v477
    %v530 = vadd.f32 %v318, %v481
    %v531 = vadd.f32 %v319, %v481
    %v532 = vadd.f32 %v320, %v485
    %v533 = vadd.f32 %v321, %v485
    %v534 = vlaneseq
    %v535 = vshrl.u32 %v534, 7
    %v536 = vsub.s32 0, %v535
    %v537 = vrot.slane %v256, %v536
    %539 = vbcast.lane.b32.xlu0 %v537, 256
    %v540 = vpop.permute.xlu0 %539
    %s542 = sor.u32 256, 8
    %543 = vbcast.lane.b32.xlu0 %v537, %s542
    %v544 = vpop.permute.xlu0 %543
    %v545 = vlaneseq
    %v546 = vshrl.u32 %v545, 7
    %v547 = vsub.s32 1, %v546
    %v548 = vrot.slane %v256, %v547
    %550 = vbcast.lane.b32.xlu0 %v548, 256
    %v551 = vpop.permute.xlu0 %550
    %s553 = sor.u32 256, 8
    %554 = vbcast.lane.b32.xlu0 %v548, %s553
    %v555 = vpop.permute.xlu0 %554
    %v556 = vlaneseq
    %v557 = vshrl.u32 %v556, 7
    %v558 = vsub.s32 2, %v557
    %v559 = vrot.slane %v256, %v558
    %561 = vbcast.lane.b32.xlu0 %v559, 256
    %v562 = vpop.permute.xlu0 %561
    %s564 = sor.u32 256, 8
    %565 = vbcast.lane.b32.xlu0 %v559, %s564
    %v566 = vpop.permute.xlu0 %565
    %v567 = vlaneseq
    %v568 = vshrl.u32 %v567, 7
    %v569 = vsub.s32 3, %v568
    %v570 = vrot.slane %v256, %v569
    %572 = vbcast.lane.b32.xlu0 %v570, 256
    %v573 = vpop.permute.xlu0 %572
    %s575 = sor.u32 256, 8
    %576 = vbcast.lane.b32.xlu0 %v570, %s575
    %v577 = vpop.permute.xlu0 %576
    %v578 = vlaneseq
    %v579 = vshrl.u32 %v578, 7
    %v580 = vsub.s32 4, %v579
    %v581 = vrot.slane %v256, %v580
    %583 = vbcast.lane.b32.xlu0 %v581, 256
    %v584 = vpop.permute.xlu0 %583
    %s586 = sor.u32 256, 8
    %587 = vbcast.lane.b32.xlu0 %v581, %s586
    %v588 = vpop.permute.xlu0 %587
    %v589 = vlaneseq
    %v590 = vshrl.u32 %v589, 7
    %v591 = vsub.s32 5, %v590
    %v592 = vrot.slane %v256, %v591
    %594 = vbcast.lane.b32.xlu0 %v592, 256
    %v595 = vpop.permute.xlu0 %594
    %s597 = sor.u32 256, 8
    %598 = vbcast.lane.b32.xlu0 %v592, %s597
    %v599 = vpop.permute.xlu0 %598
    %v600 = vlaneseq
    %v601 = vshrl.u32 %v600, 7
    %v602 = vsub.s32 6, %v601
    %v603 = vrot.slane %v256, %v602
    %605 = vbcast.lane.b32.xlu0 %v603, 256
    %v606 = vpop.permute.xlu0 %605
    %s608 = sor.u32 256, 8
    %609 = vbcast.lane.b32.xlu0 %v603, %s608
    %v610 = vpop.permute.xlu0 %609
    %v611 = vlaneseq
    %v612 = vshrl.u32 %v611, 7
    %v613 = vsub.s32 7, %v612
    %v614 = vrot.slane %v256, %v613
    %616 = vbcast.lane.b32.xlu0 %v614, 256
    %v617 = vpop.permute.xlu0 %616
    %s619 = sor.u32 256, 8
    %620 = vbcast.lane.b32.xlu0 %v614, %s619
    %v621 = vpop.permute.xlu0 %620
    %v622 = vlaneseq
    %v623 = vshrl.u32 %v622, 7
    %v624 = vsub.s32 0, %v623
    %v625 = vrot.slane %v257, %v624
    %627 = vbcast.lane.b32.xlu0 %v625, 256
    %v628 = vpop.permute.xlu0 %627
    %s630 = sor.u32 256, 8
    %631 = vbcast.lane.b32.xlu0 %v625, %s630
    %v632 = vpop.permute.xlu0 %631
    %v633 = vlaneseq
    %v634 = vshrl.u32 %v633, 7
    %v635 = vsub.s32 1, %v634
    %v636 = vrot.slane %v257, %v635
    %638 = vbcast.lane.b32.xlu0 %v636, 256
    %v639 = vpop.permute.xlu0 %638
    %s641 = sor.u32 256, 8
    %642 = vbcast.lane.b32.xlu0 %v636, %s641
    %v643 = vpop.permute.xlu0 %642
    %v644 = vlaneseq
    %v645 = vshrl.u32 %v644, 7
    %v646 = vsub.s32 2, %v645
    %v647 = vrot.slane %v257, %v646
    %649 = vbcast.lane.b32.xlu0 %v647, 256
    %v650 = vpop.permute.xlu0 %649
    %s652 = sor.u32 256, 8
    %653 = vbcast.lane.b32.xlu0 %v647, %s652
    %v654 = vpop.permute.xlu0 %653
    %v655 = vlaneseq
    %v656 = vshrl.u32 %v655, 7
    %v657 = vsub.s32 3, %v656
    %v658 = vrot.slane %v257, %v657
    %660 = vbcast.lane.b32.xlu0 %v658, 256
    %v661 = vpop.permute.xlu0 %660
    %s663 = sor.u32 256, 8
    %664 = vbcast.lane.b32.xlu0 %v658, %s663
    %v665 = vpop.permute.xlu0 %664
    %v666 = vlaneseq
    %v667 = vshrl.u32 %v666, 7
    %v668 = vsub.s32 4, %v667
    %v669 = vrot.slane %v257, %v668
    %671 = vbcast.lane.b32.xlu0 %v669, 256
    %v672 = vpop.permute.xlu0 %671
    %s674 = sor.u32 256, 8
    %675 = vbcast.lane.b32.xlu0 %v669, %s674
    %v676 = vpop.permute.xlu0 %675
    %v677 = vlaneseq
    %v678 = vshrl.u32 %v677, 7
    %v679 = vsub.s32 5, %v678
    %v680 = vrot.slane %v257, %v679
    %682 = vbcast.lane.b32.xlu0 %v680, 256
    %v683 = vpop.permute.xlu0 %682
    %s685 = sor.u32 256, 8
    %686 = vbcast.lane.b32.xlu0 %v680, %s685
    %v687 = vpop.permute.xlu0 %686
    %v688 = vlaneseq
    %v689 = vshrl.u32 %v688, 7
    %v690 = vsub.s32 6, %v689
    %v691 = vrot.slane %v257, %v690
    %693 = vbcast.lane.b32.xlu0 %v691, 256
    %v694 = vpop.permute.xlu0 %693
    %s696 = sor.u32 256, 8
    %697 = vbcast.lane.b32.xlu0 %v691, %s696
    %v698 = vpop.permute.xlu0 %697
    %v699 = vlaneseq
    %v700 = vshrl.u32 %v699, 7
    %v701 = vsub.s32 7, %v700
    %v702 = vrot.slane %v257, %v701
    %704 = vbcast.lane.b32.xlu0 %v702, 256
    %v705 = vpop.permute.xlu0 %704
    %s707 = sor.u32 256, 8
    %708 = vbcast.lane.b32.xlu0 %v702, %s707
    %v709 = vpop.permute.xlu0 %708
    %v710 = vld [vmem:[#allocation14] sm:$0x1]
    %v712 = vlaneseq
    %v713 = vshrl.u32 %v712, 7
    %v714 = vsub.s32 0, %v713
    %v715 = vrot.slane %v710, %v714
    %v717 = vmul.f32 %v540, %v715
    %v718 = vmul.f32 %v544, %v715
    %v719 = vmul.f32 %v551, %v715
    %v720 = vmul.f32 %v555, %v715
    %v721 = vmul.f32 %v562, %v715
    %v722 = vmul.f32 %v566, %v715
    %v723 = vmul.f32 %v573, %v715
    %v724 = vmul.f32 %v577, %v715
    %v725 = vmul.f32 %v584, %v715
    %v726 = vmul.f32 %v588, %v715
    %v727 = vmul.f32 %v595, %v715
    %v728 = vmul.f32 %v599, %v715
    %v729 = vmul.f32 %v606, %v715
    %v730 = vmul.f32 %v610, %v715
    %v731 = vmul.f32 %v617, %v715
    %v732 = vmul.f32 %v621, %v715
    %v733 = vmul.f32 %v628, %v715
    %v734 = vmul.f32 %v632, %v715
    %v735 = vmul.f32 %v639, %v715
    %v736 = vmul.f32 %v643, %v715
    %v737 = vmul.f32 %v650, %v715
    %v738 = vmul.f32 %v654, %v715
    %v739 = vmul.f32 %v661, %v715
    %v740 = vmul.f32 %v665, %v715
    %v741 = vmul.f32 %v672, %v715
    %v742 = vmul.f32 %v676, %v715
    %v743 = vmul.f32 %v683, %v715
    %v744 = vmul.f32 %v687, %v715
    %v745 = vmul.f32 %v694, %v715
    %v746 = vmul.f32 %v698, %v715
    %v747 = vmul.f32 %v705, %v715
    %v748 = vmul.f32 %v709, %v715
    %v749 = vadd.f32 %v502, %v717
    %v750 = vadd.f32 %v503, %v718
    %v751 = vadd.f32 %v504, %v719
    %v752 = vadd.f32 %v505, %v720
    %v753 = vadd.f32 %v506, %v721
    %v754 = vadd.f32 %v507, %v722
    %v755 = vadd.f32 %v508, %v723
    %v756 = vadd.f32 %v509, %v724
    %v757 = vadd.f32 %v510, %v725
    %v758 = vadd.f32 %v511, %v726
    %v759 = vadd.f32 %v512, %v727
    %v760 = vadd.f32 %v513, %v728
    %v761 = vadd.f32 %v514, %v729
    %v762 = vadd.f32 %v515, %v730
    %v763 = vadd.f32 %v516, %v731
    %v764 = vadd.f32 %v517, %v732
    %v765 = vadd.f32 %v518, %v733
    %v766 = vadd.f32 %v519, %v734
    %v767 = vadd.f32 %v520, %v735
    %v768 = vadd.f32 %v521, %v736
    %v769 = vadd.f32 %v522, %v737
    %v770 = vadd.f32 %v523, %v738
    %v771 = vadd.f32 %v524, %v739
    %v772 = vadd.f32 %v525, %v740
    %v773 = vadd.f32 %v526, %v741
    %v774 = vadd.f32 %v527, %v742
    %v775 = vadd.f32 %v528, %v743
    %v776 = vadd.f32 %v529, %v744
    %v777 = vadd.f32 %v530, %v745
    %v778 = vadd.f32 %v531, %v746
    %v779 = vadd.f32 %v532, %v747
    %v780 = vadd.f32 %v533, %v748
    %v781 = vtanh.pop %v749
    %v782 = vtanh.pop %v750
    %v783 = vtanh.pop %v751
    %v784 = vtanh.pop %v752
    %v785 = vtanh.pop %v753
    %v786 = vtanh.pop %v754
    %v787 = vtanh.pop %v755
    %v788 = vtanh.pop %v756
    %v789 = vtanh.pop %v757
    %v790 = vtanh.pop %v758
    %v791 = vtanh.pop %v759
    %v792 = vtanh.pop %v760
    %v793 = vtanh.pop %v761
    %v794 = vtanh.pop %v762
    %v795 = vtanh.pop %v763
    %v796 = vtanh.pop %v764
    %v797 = vtanh.pop %v765
    %v798 = vtanh.pop %v766
    %v799 = vtanh.pop %v767
    %v800 = vtanh.pop %v768
    %v801 = vtanh.pop %v769
    %v802 = vtanh.pop %v770
    %v803 = vtanh.pop %v771
    %v804 = vtanh.pop %v772
    %v805 = vtanh.pop %v773
    %v806 = vtanh.pop %v774
    %v807 = vtanh.pop %v775
    %v808 = vtanh.pop %v776
    %v809 = vtanh.pop %v777
    %v810 = vtanh.pop %v778
    %v811 = vtanh.pop %v779
    %v812 = vtanh.pop %v780
    %v813 = vld [vmem:[#allocation16] sm:$0x1]
    %v815 = vlaneseq
    %v816 = vshrl.u32 %v815, 7
    %v817 = vsub.s32 0, %v816
    %v818 = vrot.slane %v813, %v817
    %v820 = vmul.f32 %v781, %v818
    %v821 = vmul.f32 %v782, %v818
    %v822 = vmul.f32 %v783, %v818
    %v823 = vmul.f32 %v784, %v818
    %v824 = vmul.f32 %v785, %v818
    %v825 = vmul.f32 %v786, %v818
    %v826 = vmul.f32 %v787, %v818
    %v827 = vmul.f32 %v788, %v818
    %v828 = vmul.f32 %v789, %v818
    %v829 = vmul.f32 %v790, %v818
    %v830 = vmul.f32 %v791, %v818
    %v831 = vmul.f32 %v792, %v818
    %v832 = vmul.f32 %v793, %v818
    %v833 = vmul.f32 %v794, %v818
    %v834 = vmul.f32 %v795, %v818
    %v835 = vmul.f32 %v796, %v818
    %v836 = vmul.f32 %v797, %v818
    %v837 = vmul.f32 %v798, %v818
    %v838 = vmul.f32 %v799, %v818
    %v839 = vmul.f32 %v800, %v818
    %v840 = vmul.f32 %v801, %v818
    %v841 = vmul.f32 %v802, %v818
    %v842 = vmul.f32 %v803, %v818
    %v843 = vmul.f32 %v804, %v818
    %v844 = vmul.f32 %v805, %v818
    %v845 = vmul.f32 %v806, %v818
    %v846 = vmul.f32 %v807, %v818
    %v847 = vmul.f32 %v808, %v818
    %v848 = vmul.f32 %v809, %v818
    %v849 = vmul.f32 %v810, %v818
    %v850 = vmul.f32 %v811, %v818
    %v851 = vmul.f32 %v812, %v818
    %852 = vadd.xlane.f32.xlu0 %v820
    %v853 = vpop.xlane.xlu0 %852
    %854 = vadd.xlane.f32.xlu0 %v821
    %v855 = vpop.xlane.xlu0 %854
    %856 = vadd.xlane.f32.xlu0 %v822
    %v857 = vpop.xlane.xlu0 %856
    %858 = vadd.xlane.f32.xlu0 %v823
    %v859 = vpop.xlane.xlu0 %858
    %860 = vadd.xlane.f32.xlu0 %v824
    %v861 = vpop.xlane.xlu0 %860
    %862 = vadd.xlane.f32.xlu0 %v825
    %v863 = vpop.xlane.xlu0 %862
    %864 = vadd.xlane.f32.xlu0 %v826
    %v865 = vpop.xlane.xlu0 %864
    %866 = vadd.xlane.f32.xlu0 %v827
    %v867 = vpop.xlane.xlu0 %866
    %868 = vadd.xlane.f32.xlu0 %v828
    %v869 = vpop.xlane.xlu0 %868
    %870 = vadd.xlane.f32.xlu0 %v829
    %v871 = vpop.xlane.xlu0 %870
    %872 = vadd.xlane.f32.xlu0 %v830
    %v873 = vpop.xlane.xlu0 %872
    %874 = vadd.xlane.f32.xlu0 %v831
    %v875 = vpop.xlane.xlu0 %874
    %876 = vadd.xlane.f32.xlu0 %v832
    %v877 = vpop.xlane.xlu0 %876
    %878 = vadd.xlane.f32.xlu0 %v833
    %v879 = vpop.xlane.xlu0 %878
    %880 = vadd.xlane.f32.xlu0 %v834
    %v881 = vpop.xlane.xlu0 %880
    %882 = vadd.xlane.f32.xlu0 %v835
    %v883 = vpop.xlane.xlu0 %882
    %884 = vadd.xlane.f32.xlu0 %v836
    %v885 = vpop.xlane.xlu0 %884
    %886 = vadd.xlane.f32.xlu0 %v837
    %v887 = vpop.xlane.xlu0 %886
    %888 = vadd.xlane.f32.xlu0 %v838
    %v889 = vpop.xlane.xlu0 %888
    %890 = vadd.xlane.f32.xlu0 %v839
    %v891 = vpop.xlane.xlu0 %890
    %892 = vadd.xlane.f32.xlu0 %v840
    %v893 = vpop.xlane.xlu0 %892
    %894 = vadd.xlane.f32.xlu0 %v841
    %v895 = vpop.xlane.xlu0 %894
    %896 = vadd.xlane.f32.xlu0 %v842
    %v897 = vpop.xlane.xlu0 %896
    %898 = vadd.xlane.f32.xlu0 %v843
    %v899 = vpop.xlane.xlu0 %898
    %900 = vadd.xlane.f32.xlu0 %v844
    %v901 = vpop.xlane.xlu0 %900
    %902 = vadd.xlane.f32.xlu0 %v845
    %v903 = vpop.xlane.xlu0 %902
    %904 = vadd.xlane.f32.xlu0 %v846
    %v905 = vpop.xlane.xlu0 %904
    %906 = vadd.xlane.f32.xlu0 %v847
    %v907 = vpop.xlane.xlu0 %906
    %908 = vadd.xlane.f32.xlu0 %v848
    %v909 = vpop.xlane.xlu0 %908
    %910 = vadd.xlane.f32.xlu0 %v849
    %v911 = vpop.xlane.xlu0 %910
    %912 = vadd.xlane.f32.xlu0 %v850
    %v913 = vpop.xlane.xlu0 %912
    %914 = vadd.xlane.f32.xlu0 %v851
    %v915 = vpop.xlane.xlu0 %914
    %v948 = vlaneseq
    %v949 = vand.u32 %v948, 127
    %v950 = vlaneseq
    %v951 = vshrl.u32 %v950, 7
    %v952 = vsub.s32 %v949, %v951
    %v953 = vrot.slane %v853, %v952
    %v954 = vadd.s32 %v949, 4294967288
    %v955 = vlaneseq
    %v956 = vshrl.u32 %v955, 7
    %v957 = vsub.s32 %v954, %v956
    %v958 = vrot.slane %v855, %v957
    %vm959 = vcmask 130112
    %v960 = vsel %vm959, %v958, %v953
    %v961 = vlaneseq
    %v962 = vshrl.u32 %v961, 7
    %v963 = vsub.s32 %v949, %v962
    %v964 = vrot.slane %v857, %v963
    %v965 = vlaneseq
    %v966 = vshrl.u32 %v965, 7
    %v967 = vsub.s32 %v954, %v966
    %v968 = vrot.slane %v859, %v967
    %v969 = vsel %vm959, %v968, %v964
    %v970 = vlaneseq
    %v971 = vshrl.u32 %v970, 7
    %v972 = vsub.s32 %v949, %v971
    %v973 = vrot.slane %v861, %v972
    %v974 = vlaneseq
    %v975 = vshrl.u32 %v974, 7
    %v976 = vsub.s32 %v954, %v975
    %v977 = vrot.slane %v863, %v976
    %v978 = vsel %vm959, %v977, %v973
    %v979 = vlaneseq
    %v980 = vshrl.u32 %v979, 7
    %v981 = vsub.s32 %v949, %v980
    %v982 = vrot.slane %v865, %v981
    %v983 = vlaneseq
    %v984 = vshrl.u32 %v983, 7
    %v985 = vsub.s32 %v954, %v984
    %v986 = vrot.slane %v867, %v985
    %v987 = vsel %vm959, %v986, %v982
    %v988 = vlaneseq
    %v989 = vshrl.u32 %v988, 7
    %v990 = vsub.s32 %v949, %v989
    %v991 = vrot.slane %v869, %v990
    %v992 = vlaneseq
    %v993 = vshrl.u32 %v992, 7
    %v994 = vsub.s32 %v954, %v993
    %v995 = vrot.slane %v871, %v994
    %v996 = vsel %vm959, %v995, %v991
    %v997 = vlaneseq
    %v998 = vshrl.u32 %v997, 7
    %v999 = vsub.s32 %v949, %v998
    %v1000 = vrot.slane %v873, %v999
    %v1001 = vlaneseq
    %v1002 = vshrl.u32 %v1001, 7
    %v1003 = vsub.s32 %v954, %v1002
    %v1004 = vrot.slane %v875, %v1003
    %v1005 = vsel %vm959, %v1004, %v1000
    %v1006 = vlaneseq
    %v1007 = vshrl.u32 %v1006, 7
    %v1008 = vsub.s32 %v949, %v1007
    %v1009 = vrot.slane %v877, %v1008
    %v1010 = vlaneseq
    %v1011 = vshrl.u32 %v1010, 7
    %v1012 = vsub.s32 %v954, %v1011
    %v1013 = vrot.slane %v879, %v1012
    %v1014 = vsel %vm959, %v1013, %v1009
    %v1015 = vlaneseq
    %v1016 = vshrl.u32 %v1015, 7
    %v1017 = vsub.s32 %v949, %v1016
    %v1018 = vrot.slane %v881, %v1017
    %v1019 = vlaneseq
    %v1020 = vshrl.u32 %v1019, 7
    %v1021 = vsub.s32 %v954, %v1020
    %v1022 = vrot.slane %v883, %v1021
    %v1023 = vsel %vm959, %v1022, %v1018
    %v1024 = vlaneseq
    %v1025 = vshrl.u32 %v1024, 7
    %v1026 = vsub.s32 %v949, %v1025
    %v1027 = vrot.slane %v885, %v1026
    %v1028 = vlaneseq
    %v1029 = vshrl.u32 %v1028, 7
    %v1030 = vsub.s32 %v954, %v1029
    %v1031 = vrot.slane %v887, %v1030
    %v1032 = vsel %vm959, %v1031, %v1027
    %v1033 = vlaneseq
    %v1034 = vshrl.u32 %v1033, 7
    %v1035 = vsub.s32 %v949, %v1034
    %v1036 = vrot.slane %v889, %v1035
    %v1037 = vlaneseq
    %v1038 = vshrl.u32 %v1037, 7
    %v1039 = vsub.s32 %v954, %v1038
    %v1040 = vrot.slane %v891, %v1039
    %v1041 = vsel %vm959, %v1040, %v1036
    %v1042 = vlaneseq
    %v1043 = vshrl.u32 %v1042, 7
    %v1044 = vsub.s32 %v949, %v1043
    %v1045 = vrot.slane %v893, %v1044
    %v1046 = vlaneseq
    %v1047 = vshrl.u32 %v1046, 7
    %v1048 = vsub.s32 %v954, %v1047
    %v1049 = vrot.slane %v895, %v1048
    %v1050 = vsel %vm959, %v1049, %v1045
    %v1051 = vlaneseq
    %v1052 = vshrl.u32 %v1051, 7
    %v1053 = vsub.s32 %v949, %v1052
    %v1054 = vrot.slane %v897, %v1053
    %v1055 = vlaneseq
    %v1056 = vshrl.u32 %v1055, 7
    %v1057 = vsub.s32 %v954, %v1056
    %v1058 = vrot.slane %v899, %v1057
    %v1059 = vsel %vm959, %v1058, %v1054
    %v1060 = vlaneseq
    %v1061 = vshrl.u32 %v1060, 7
    %v1062 = vsub.s32 %v949, %v1061
    %v1063 = vrot.slane %v901, %v1062
    %v1064 = vlaneseq
    %v1065 = vshrl.u32 %v1064, 7
    %v1066 = vsub.s32 %v954, %v1065
    %v1067 = vrot.slane %v903, %v1066
    %v1068 = vsel %vm959, %v1067, %v1063
    %v1069 = vlaneseq
    %v1070 = vshrl.u32 %v1069, 7
    %v1071 = vsub.s32 %v949, %v1070
    %v1072 = vrot.slane %v905, %v1071
    %v1073 = vlaneseq
    %v1074 = vshrl.u32 %v1073, 7
    %v1075 = vsub.s32 %v954, %v1074
    %v1076 = vrot.slane %v907, %v1075
    %v1077 = vsel %vm959, %v1076, %v1072
    %v1078 = vlaneseq
    %v1079 = vshrl.u32 %v1078, 7
    %v1080 = vsub.s32 %v949, %v1079
    %v1081 = vrot.slane %v909, %v1080
    %v1082 = vlaneseq
    %v1083 = vshrl.u32 %v1082, 7
    %v1084 = vsub.s32 %v954, %v1083
    %v1085 = vrot.slane %v911, %v1084
    %v1086 = vsel %vm959, %v1085, %v1081
    %v1087 = vlaneseq
    %v1088 = vshrl.u32 %v1087, 7
    %v1089 = vsub.s32 %v949, %v1088
    %v1090 = vrot.slane %v913, %v1089
    %v1091 = vlaneseq
    %v1092 = vshrl.u32 %v1091, 7
    %v1093 = vsub.s32 %v954, %v1092
    %v1094 = vrot.slane %v915, %v1093
    %v1095 = vsel %vm959, %v1094, %v1090
    %vm1096 = vcmask 1041409
    %v1097 = vsel %vm1096, %v969, %v960
    %vm1098 = vcmask 1042434
    %v1099 = vsel %vm1098, %v978, %v1097
    %vm1100 = vcmask 1043459
    %v1101 = vsel %vm1100, %v987, %v1099
    %vm1102 = vcmask 1044484
    %v1103 = vsel %vm1102, %v996, %v1101
    %vm1104 = vcmask 1045509
    %v1105 = vsel %vm1104, %v1005, %v1103
    %vm1106 = vcmask 1046534
    %v1107 = vsel %vm1106, %v1014, %v1105
    %vm1108 = vcmask 1047559
    %v1109 = vsel %vm1108, %v1023, %v1107
    %v1110 = vsel %vm1096, %v1041, %v1032
    %v1111 = vsel %vm1098, %v1050, %v1110
    %v1112 = vsel %vm1100, %v1059, %v1111
    %v1113 = vsel %vm1102, %v1068, %v1112
    %v1114 = vsel %vm1104, %v1077, %v1113
    %v1115 = vsel %vm1106, %v1086, %v1114
    %v1116 = vsel %vm1108, %v1095, %v1115
    %vm1119 = vcmask 130048
    %v1120 = vsel %vm1119, %v1109, -inf
    %1121 = vmax.xlane.f32.xlu0 %v1120
    %v1122 = vpop.xlane.xlu0 %1121
    %v1123 = vsel %vm1119, %v1116, -inf
    %1124 = vmax.xlane.f32.xlu0 %v1123
    %v1125 = vpop.xlane.xlu0 %1124
    %v1128 = vlaneseq
    %v1129 = vshrl.u32 %v1128, 7
    %v1130 = vsub.s32 0, %v1129
    %v1131 = vrot.slane %v1122, %v1130
    %v1132 = vlaneseq
    %v1133 = vshrl.u32 %v1132, 7
    %v1134 = vsub.s32 1, %v1133
    %v1135 = vrot.slane %v1122, %v1134
    %v1136 = vlaneseq
    %v1137 = vshrl.u32 %v1136, 7
    %v1138 = vsub.s32 2, %v1137
    %v1139 = vrot.slane %v1122, %v1138
    %v1140 = vlaneseq
    %v1141 = vshrl.u32 %v1140, 7
    %v1142 = vsub.s32 3, %v1141
    %v1143 = vrot.slane %v1122, %v1142
    %v1144 = vlaneseq
    %v1145 = vshrl.u32 %v1144, 7
    %v1146 = vsub.s32 4, %v1145
    %v1147 = vrot.slane %v1122, %v1146
    %v1148 = vlaneseq
    %v1149 = vshrl.u32 %v1148, 7
    %v1150 = vsub.s32 5, %v1149
    %v1151 = vrot.slane %v1122, %v1150
    %v1152 = vlaneseq
    %v1153 = vshrl.u32 %v1152, 7
    %v1154 = vsub.s32 6, %v1153
    %v1155 = vrot.slane %v1122, %v1154
    %v1156 = vlaneseq
    %v1157 = vshrl.u32 %v1156, 7
    %v1158 = vsub.s32 7, %v1157
    %v1159 = vrot.slane %v1122, %v1158
    %v1160 = vlaneseq
    %v1161 = vshrl.u32 %v1160, 7
    %v1162 = vsub.s32 0, %v1161
    %v1163 = vrot.slane %v1125, %v1162
    %v1164 = vlaneseq
    %v1165 = vshrl.u32 %v1164, 7
    %v1166 = vsub.s32 1, %v1165
    %v1167 = vrot.slane %v1125, %v1166
    %v1168 = vlaneseq
    %v1169 = vshrl.u32 %v1168, 7
    %v1170 = vsub.s32 2, %v1169
    %v1171 = vrot.slane %v1125, %v1170
    %v1172 = vlaneseq
    %v1173 = vshrl.u32 %v1172, 7
    %v1174 = vsub.s32 3, %v1173
    %v1175 = vrot.slane %v1125, %v1174
    %v1176 = vlaneseq
    %v1177 = vshrl.u32 %v1176, 7
    %v1178 = vsub.s32 4, %v1177
    %v1179 = vrot.slane %v1125, %v1178
    %v1180 = vlaneseq
    %v1181 = vshrl.u32 %v1180, 7
    %v1182 = vsub.s32 5, %v1181
    %v1183 = vrot.slane %v1125, %v1182
    %v1184 = vlaneseq
    %v1185 = vshrl.u32 %v1184, 7
    %v1186 = vsub.s32 6, %v1185
    %v1187 = vrot.slane %v1125, %v1186
    %v1188 = vlaneseq
    %v1189 = vshrl.u32 %v1188, 7
    %v1190 = vsub.s32 7, %v1189
    %v1191 = vrot.slane %v1125, %v1190
    %v1208 = vsub.f32 %v853, %v1131
    %v1209 = vsub.f32 %v855, %v1131
    %v1210 = vsub.f32 %v857, %v1135
    %v1211 = vsub.f32 %v859, %v1135
    %v1212 = vsub.f32 %v861, %v1139
    %v1213 = vsub.f32 %v863, %v1139
    %v1214 = vsub.f32 %v865, %v1143
    %v1215 = vsub.f32 %v867, %v1143
    %v1216 = vsub.f32 %v869, %v1147
    %v1217 = vsub.f32 %v871, %v1147
    %v1218 = vsub.f32 %v873, %v1151
    %v1219 = vsub.f32 %v875, %v1151
    %v1220 = vsub.f32 %v877, %v1155
    %v1221 = vsub.f32 %v879, %v1155
    %v1222 = vsub.f32 %v881, %v1159
    %v1223 = vsub.f32 %v883, %v1159
    %v1224 = vsub.f32 %v885, %v1163
    %v1225 = vsub.f32 %v887, %v1163
    %v1226 = vsub.f32 %v889, %v1167
    %v1227 = vsub.f32 %v891, %v1167
    %v1228 = vsub.f32 %v893, %v1171
    %v1229 = vsub.f32 %v895, %v1171
    %v1230 = vsub.f32 %v897, %v1175
    %v1231 = vsub.f32 %v899, %v1175
    %v1232 = vsub.f32 %v901, %v1179
    %v1233 = vsub.f32 %v903, %v1179
    %v1234 = vsub.f32 %v905, %v1183
    %v1235 = vsub.f32 %v907, %v1183
    %v1236 = vsub.f32 %v909, %v1187
    %v1237 = vsub.f32 %v911, %v1187
    %v1238 = vsub.f32 %v913, %v1191
    %v1239 = vsub.f32 %v915, %v1191
    %v1240 = vmul.f32 %v1208, 1.442695
    %v1241 = vpow.pop %v1240
    %v1242 = vmul.f32 %v1209, 1.442695
    %v1243 = vpow.pop %v1242
    %v1244 = vmul.f32 %v1210, 1.442695
    %v1245 = vpow.pop %v1244
    %v1246 = vmul.f32 %v1211, 1.442695
    %v1247 = vpow.pop %v1246
    %v1248 = vmul.f32 %v1212, 1.442695
    %v1249 = vpow.pop %v1248
    %v1250 = vmul.f32 %v1213, 1.442695
    %v1251 = vpow.pop %v1250
    %v1252 = vmul.f32 %v1214, 1.442695
    %v1253 = vpow.pop %v1252
    %v1254 = vmul.f32 %v1215, 1.442695
    %v1255 = vpow.pop %v1254
    %v1256 = vmul.f32 %v1216, 1.442695
    %v1257 = vpow.pop %v1256
    %v1258 = vmul.f32 %v1217, 1.442695
    %v1259 = vpow.pop %v1258
    %v1260 = vmul.f32 %v1218, 1.442695
    %v1261 = vpow.pop %v1260
    %v1262 = vmul.f32 %v1219, 1.442695
    %v1263 = vpow.pop %v1262
    %v1264 = vmul.f32 %v1220, 1.442695
    %v1265 = vpow.pop %v1264
    %v1266 = vmul.f32 %v1221, 1.442695
    %v1267 = vpow.pop %v1266
    %v1268 = vmul.f32 %v1222, 1.442695
    %v1269 = vpow.pop %v1268
    %v1270 = vmul.f32 %v1223, 1.442695
    %v1271 = vpow.pop %v1270
    %v1272 = vmul.f32 %v1224, 1.442695
    %v1273 = vpow.pop %v1272
    %v1274 = vmul.f32 %v1225, 1.442695
    %v1275 = vpow.pop %v1274
    %v1276 = vmul.f32 %v1226, 1.442695
    %v1277 = vpow.pop %v1276
    %v1278 = vmul.f32 %v1227, 1.442695
    %v1279 = vpow.pop %v1278
    %v1280 = vmul.f32 %v1228, 1.442695
    %v1281 = vpow.pop %v1280
    %v1282 = vmul.f32 %v1229, 1.442695
    %v1283 = vpow.pop %v1282
    %v1284 = vmul.f32 %v1230, 1.442695
    %v1285 = vpow.pop %v1284
    %v1286 = vmul.f32 %v1231, 1.442695
    %v1287 = vpow.pop %v1286
    %v1288 = vmul.f32 %v1232, 1.442695
    %v1289 = vpow.pop %v1288
    %v1290 = vmul.f32 %v1233, 1.442695
    %v1291 = vpow.pop %v1290
    %v1292 = vmul.f32 %v1234, 1.442695
    %v1293 = vpow.pop %v1292
    %v1294 = vmul.f32 %v1235, 1.442695
    %v1295 = vpow.pop %v1294
    %v1296 = vmul.f32 %v1236, 1.442695
    %v1297 = vpow.pop %v1296
    %v1298 = vmul.f32 %v1237, 1.442695
    %v1299 = vpow.pop %v1298
    %v1300 = vmul.f32 %v1238, 1.442695
    %v1301 = vpow.pop %v1300
    %v1302 = vmul.f32 %v1239, 1.442695
    %v1303 = vpow.pop %v1302
    %1336 = vset.pattern.permute.xlu0 0
    %1337 = vperm.xlu0 %1336, %v1241
    %v1338 = vpop.permute.xlu0 %1337
    %1339 = vset.pattern.permute.xlu0 0
    %1340 = vperm.xlu0 %1339, %v1243
    %v1341 = vpop.permute.xlu0 %1340
    %1342 = vset.pattern.permute.xlu0 0
    %1343 = vperm.xlu0 %1342, %v1245
    %v1344 = vpop.permute.xlu0 %1343
    %1345 = vset.pattern.permute.xlu0 0
    %1346 = vperm.xlu0 %1345, %v1247
    %v1347 = vpop.permute.xlu0 %1346
    %1348 = vset.pattern.permute.xlu0 0
    %1349 = vperm.xlu0 %1348, %v1249
    %v1350 = vpop.permute.xlu0 %1349
    %1351 = vset.pattern.permute.xlu0 0
    %1352 = vperm.xlu0 %1351, %v1251
    %v1353 = vpop.permute.xlu0 %1352
    %1354 = vset.pattern.permute.xlu0 0
    %1355 = vperm.xlu0 %1354, %v1253
    %v1356 = vpop.permute.xlu0 %1355
    %1357 = vset.pattern.permute.xlu0 0
    %1358 = vperm.xlu0 %1357, %v1255
    %v1359 = vpop.permute.xlu0 %1358
    %1360 = vset.pattern.permute.xlu0 0
    %1361 = vperm.xlu0 %1360, %v1257
    %v1362 = vpop.permute.xlu0 %1361
    %1363 = vset.pattern.permute.xlu0 0
    %1364 = vperm.xlu0 %1363, %v1259
    %v1365 = vpop.permute.xlu0 %1364
    %1366 = vset.pattern.permute.xlu0 0
    %1367 = vperm.xlu0 %1366, %v1261
    %v1368 = vpop.permute.xlu0 %1367
    %1369 = vset.pattern.permute.xlu0 0
    %1370 = vperm.xlu0 %1369, %v1263
    %v1371 = vpop.permute.xlu0 %1370
    %1372 = vset.pattern.permute.xlu0 0
    %1373 = vperm.xlu0 %1372, %v1265
    %v1374 = vpop.permute.xlu0 %1373
    %1375 = vset.pattern.permute.xlu0 0
    %1376 = vperm.xlu0 %1375, %v1267
    %v1377 = vpop.permute.xlu0 %1376
    %1378 = vset.pattern.permute.xlu0 0
    %1379 = vperm.xlu0 %1378, %v1269
    %v1380 = vpop.permute.xlu0 %1379
    %1381 = vset.pattern.permute.xlu0 0
    %1382 = vperm.xlu0 %1381, %v1271
    %v1383 = vpop.permute.xlu0 %1382
    %1384 = vset.pattern.permute.xlu0 0
    %1385 = vperm.xlu0 %1384, %v1273
    %v1386 = vpop.permute.xlu0 %1385
    %1387 = vset.pattern.permute.xlu0 0
    %1388 = vperm.xlu0 %1387, %v1275
    %v1389 = vpop.permute.xlu0 %1388
    %1390 = vset.pattern.permute.xlu0 0
    %1391 = vperm.xlu0 %1390, %v1277
    %v1392 = vpop.permute.xlu0 %1391
    %1393 = vset.pattern.permute.xlu0 0
    %1394 = vperm.xlu0 %1393, %v1279
    %v1395 = vpop.permute.xlu0 %1394
    %1396 = vset.pattern.permute.xlu0 0
    %1397 = vperm.xlu0 %1396, %v1281
    %v1398 = vpop.permute.xlu0 %1397
    %1399 = vset.pattern.permute.xlu0 0
    %1400 = vperm.xlu0 %1399, %v1283
    %v1401 = vpop.permute.xlu0 %1400
    %1402 = vset.pattern.permute.xlu0 0
    %1403 = vperm.xlu0 %1402, %v1285
    %v1404 = vpop.permute.xlu0 %1403
    %1405 = vset.pattern.permute.xlu0 0
    %1406 = vperm.xlu0 %1405, %v1287
    %v1407 = vpop.permute.xlu0 %1406
    %1408 = vset.pattern.permute.xlu0 0
    %1409 = vperm.xlu0 %1408, %v1289
    %v1410 = vpop.permute.xlu0 %1409
    %1411 = vset.pattern.permute.xlu0 0
    %1412 = vperm.xlu0 %1411, %v1291
    %v1413 = vpop.permute.xlu0 %1412
    %1414 = vset.pattern.permute.xlu0 0
    %1415 = vperm.xlu0 %1414, %v1293
    %v1416 = vpop.permute.xlu0 %1415
    %1417 = vset.pattern.permute.xlu0 0
    %1418 = vperm.xlu0 %1417, %v1295
    %v1419 = vpop.permute.xlu0 %1418
    %1420 = vset.pattern.permute.xlu0 0
    %1421 = vperm.xlu0 %1420, %v1297
    %v1422 = vpop.permute.xlu0 %1421
    %1423 = vset.pattern.permute.xlu0 0
    %1424 = vperm.xlu0 %1423, %v1299
    %v1425 = vpop.permute.xlu0 %1424
    %1426 = vset.pattern.permute.xlu0 0
    %1427 = vperm.xlu0 %1426, %v1301
    %v1428 = vpop.permute.xlu0 %1427
    %1429 = vset.pattern.permute.xlu0 0
    %1430 = vperm.xlu0 %1429, %v1303
    %v1431 = vpop.permute.xlu0 %1430
    %v1432 = vlaneseq
    %v1433 = vshrl.u32 %v1432, 7
    %v1434 = vsub.s32 %v949, %v1433
    %v1435 = vrot.slane %v1338, %v1434
    %v1436 = vlaneseq
    %v1437 = vshrl.u32 %v1436, 7
    %v1438 = vsub.s32 %v954, %v1437
    %v1439 = vrot.slane %v1341, %v1438
    %v1440 = vsel %vm959, %v1439, %v1435
    %v1441 = vlaneseq
    %v1442 = vshrl.u32 %v1441, 7
    %v1443 = vsub.s32 %v949, %v1442
    %v1444 = vrot.slane %v1344, %v1443
    %v1445 = vlaneseq
    %v1446 = vshrl.u32 %v1445, 7
    %v1447 = vsub.s32 %v954, %v1446
    %v1448 = vrot.slane %v1347, %v1447
    %v1449 = vsel %vm959, %v1448, %v1444
    %v1450 = vlaneseq
    %v1451 = vshrl.u32 %v1450, 7
    %v1452 = vsub.s32 %v949, %v1451
    %v1453 = vrot.slane %v1350, %v1452
    %v1454 = vlaneseq
    %v1455 = vshrl.u32 %v1454, 7
    %v1456 = vsub.s32 %v954, %v1455
    %v1457 = vrot.slane %v1353, %v1456
    %v1458 = vsel %vm959, %v1457, %v1453
    %v1459 = vlaneseq
    %v1460 = vshrl.u32 %v1459, 7
    %v1461 = vsub.s32 %v949, %v1460
    %v1462 = vrot.slane %v1356, %v1461
    %v1463 = vlaneseq
    %v1464 = vshrl.u32 %v1463, 7
    %v1465 = vsub.s32 %v954, %v1464
    %v1466 = vrot.slane %v1359, %v1465
    %v1467 = vsel %vm959, %v1466, %v1462
    %v1468 = vlaneseq
    %v1469 = vshrl.u32 %v1468, 7
    %v1470 = vsub.s32 %v949, %v1469
    %v1471 = vrot.slane %v1362, %v1470
    %v1472 = vlaneseq
    %v1473 = vshrl.u32 %v1472, 7
    %v1474 = vsub.s32 %v954, %v1473
    %v1475 = vrot.slane %v1365, %v1474
    %v1476 = vsel %vm959, %v1475, %v1471
    %v1477 = vlaneseq
    %v1478 = vshrl.u32 %v1477, 7
    %v1479 = vsub.s32 %v949, %v1478
    %v1480 = vrot.slane %v1368, %v1479
    %v1481 = vlaneseq
    %v1482 = vshrl.u32 %v1481, 7
    %v1483 = vsub.s32 %v954, %v1482
    %v1484 = vrot.slane %v1371, %v1483
    %v1485 = vsel %vm959, %v1484, %v1480
    %v1486 = vlaneseq
    %v1487 = vshrl.u32 %v1486, 7
    %v1488 = vsub.s32 %v949, %v1487
    %v1489 = vrot.slane %v1374, %v1488
    %v1490 = vlaneseq
    %v1491 = vshrl.u32 %v1490, 7
    %v1492 = vsub.s32 %v954, %v1491
    %v1493 = vrot.slane %v1377, %v1492
    %v1494 = vsel %vm959, %v1493, %v1489
    %v1495 = vlaneseq
    %v1496 = vshrl.u32 %v1495, 7
    %v1497 = vsub.s32 %v949, %v1496
    %v1498 = vrot.slane %v1380, %v1497
    %v1499 = vlaneseq
    %v1500 = vshrl.u32 %v1499, 7
    %v1501 = vsub.s32 %v954, %v1500
    %v1502 = vrot.slane %v1383, %v1501
    %v1503 = vsel %vm959, %v1502, %v1498
    %v1504 = vlaneseq
    %v1505 = vshrl.u32 %v1504, 7
    %v1506 = vsub.s32 %v949, %v1505
    %v1507 = vrot.slane %v1386, %v1506
    %v1508 = vlaneseq
    %v1509 = vshrl.u32 %v1508, 7
    %v1510 = vsub.s32 %v954, %v1509
    %v1511 = vrot.slane %v1389, %v1510
    %v1512 = vsel %vm959, %v1511, %v1507
    %v1513 = vlaneseq
    %v1514 = vshrl.u32 %v1513, 7
    %v1515 = vsub.s32 %v949, %v1514
    %v1516 = vrot.slane %v1392, %v1515
    %v1517 = vlaneseq
    %v1518 = vshrl.u32 %v1517, 7
    %v1519 = vsub.s32 %v954, %v1518
    %v1520 = vrot.slane %v1395, %v1519
    %v1521 = vsel %vm959, %v1520, %v1516
    %v1522 = vlaneseq
    %v1523 = vshrl.u32 %v1522, 7
    %v1524 = vsub.s32 %v949, %v1523
    %v1525 = vrot.slane %v1398, %v1524
    %v1526 = vlaneseq
    %v1527 = vshrl.u32 %v1526, 7
    %v1528 = vsub.s32 %v954, %v1527
    %v1529 = vrot.slane %v1401, %v1528
    %v1530 = vsel %vm959, %v1529, %v1525
    %v1531 = vlaneseq
    %v1532 = vshrl.u32 %v1531, 7
    %v1533 = vsub.s32 %v949, %v1532
    %v1534 = vrot.slane %v1404, %v1533
    %v1535 = vlaneseq
    %v1536 = vshrl.u32 %v1535, 7
    %v1537 = vsub.s32 %v954, %v1536
    %v1538 = vrot.slane %v1407, %v1537
    %v1539 = vsel %vm959, %v1538, %v1534
    %v1540 = vlaneseq
    %v1541 = vshrl.u32 %v1540, 7
    %v1542 = vsub.s32 %v949, %v1541
    %v1543 = vrot.slane %v1410, %v1542
    %v1544 = vlaneseq
    %v1545 = vshrl.u32 %v1544, 7
    %v1546 = vsub.s32 %v954, %v1545
    %v1547 = vrot.slane %v1413, %v1546
    %v1548 = vsel %vm959, %v1547, %v1543
    %v1549 = vlaneseq
    %v1550 = vshrl.u32 %v1549, 7
    %v1551 = vsub.s32 %v949, %v1550
    %v1552 = vrot.slane %v1416, %v1551
    %v1553 = vlaneseq
    %v1554 = vshrl.u32 %v1553, 7
    %v1555 = vsub.s32 %v954, %v1554
    %v1556 = vrot.slane %v1419, %v1555
    %v1557 = vsel %vm959, %v1556, %v1552
    %v1558 = vlaneseq
    %v1559 = vshrl.u32 %v1558, 7
    %v1560 = vsub.s32 %v949, %v1559
    %v1561 = vrot.slane %v1422, %v1560
    %v1562 = vlaneseq
    %v1563 = vshrl.u32 %v1562, 7
    %v1564 = vsub.s32 %v954, %v1563
    %v1565 = vrot.slane %v1425, %v1564
    %v1566 = vsel %vm959, %v1565, %v1561
    %v1567 = vlaneseq
    %v1568 = vshrl.u32 %v1567, 7
    %v1569 = vsub.s32 %v949, %v1568
    %v1570 = vrot.slane %v1428, %v1569
    %v1571 = vlaneseq
    %v1572 = vshrl.u32 %v1571, 7
    %v1573 = vsub.s32 %v954, %v1572
    %v1574 = vrot.slane %v1431, %v1573
    %v1575 = vsel %vm959, %v1574, %v1570
    %v1576 = vsel %vm1096, %v1449, %v1440
    %v1577 = vsel %vm1098, %v1458, %v1576
    %v1578 = vsel %vm1100, %v1467, %v1577
    %v1579 = vsel %vm1102, %v1476, %v1578
    %v1580 = vsel %vm1104, %v1485, %v1579
    %v1581 = vsel %vm1106, %v1494, %v1580
    %v1582 = vsel %vm1108, %v1503, %v1581
    %v1583 = vsel %vm1096, %v1521, %v1512
    %v1584 = vsel %vm1098, %v1530, %v1583
    %v1585 = vsel %vm1100, %v1539, %v1584
    %v1586 = vsel %vm1102, %v1548, %v1585
    %v1587 = vsel %vm1104, %v1557, %v1586
    %v1588 = vsel %vm1106, %v1566, %v1587
    %v1589 = vsel %vm1108, %v1575, %v1588
    %v1592 = vsel %vm1119, %v1582, 0.0
    %1593 = vadd.xlane.f32.xlu0 %v1592
    %v1594 = vpop.xlane.xlu0 %1593
    %v1595 = vsel %vm1119, %v1589, 0.0
    %1596 = vadd.xlane.f32.xlu0 %v1595
    %v1597 = vpop.xlane.xlu0 %1596
    %v1598 = vrcp.pop %v1594
    %v1599 = vrcp.pop %v1597
    %v1602 = vlaneseq
    %v1603 = vshrl.u32 %v1602, 7
    %v1604 = vsub.s32 0, %v1603
    %v1605 = vrot.slane %v1598, %v1604
    %v1606 = vlaneseq
    %v1607 = vshrl.u32 %v1606, 7
    %v1608 = vsub.s32 1, %v1607
    %v1609 = vrot.slane %v1598, %v1608
    %v1610 = vlaneseq
    %v1611 = vshrl.u32 %v1610, 7
    %v1612 = vsub.s32 2, %v1611
    %v1613 = vrot.slane %v1598, %v1612
    %v1614 = vlaneseq
    %v1615 = vshrl.u32 %v1614, 7
    %v1616 = vsub.s32 3, %v1615
    %v1617 = vrot.slane %v1598, %v1616
    %v1618 = vlaneseq
    %v1619 = vshrl.u32 %v1618, 7
    %v1620 = vsub.s32 4, %v1619
    %v1621 = vrot.slane %v1598, %v1620
    %v1622 = vlaneseq
    %v1623 = vshrl.u32 %v1622, 7
    %v1624 = vsub.s32 5, %v1623
    %v1625 = vrot.slane %v1598, %v1624
    %v1626 = vlaneseq
    %v1627 = vshrl.u32 %v1626, 7
    %v1628 = vsub.s32 6, %v1627
    %v1629 = vrot.slane %v1598, %v1628
    %v1630 = vlaneseq
    %v1631 = vshrl.u32 %v1630, 7
    %v1632 = vsub.s32 7, %v1631
    %v1633 = vrot.slane %v1598, %v1632
    %v1634 = vlaneseq
    %v1635 = vshrl.u32 %v1634, 7
    %v1636 = vsub.s32 0, %v1635
    %v1637 = vrot.slane %v1599, %v1636
    %v1638 = vlaneseq
    %v1639 = vshrl.u32 %v1638, 7
    %v1640 = vsub.s32 1, %v1639
    %v1641 = vrot.slane %v1599, %v1640
    %v1642 = vlaneseq
    %v1643 = vshrl.u32 %v1642, 7
    %v1644 = vsub.s32 2, %v1643
    %v1645 = vrot.slane %v1599, %v1644
    %v1646 = vlaneseq
    %v1647 = vshrl.u32 %v1646, 7
    %v1648 = vsub.s32 3, %v1647
    %v1649 = vrot.slane %v1599, %v1648
    %v1650 = vlaneseq
    %v1651 = vshrl.u32 %v1650, 7
    %v1652 = vsub.s32 4, %v1651
    %v1653 = vrot.slane %v1599, %v1652
    %v1654 = vlaneseq
    %v1655 = vshrl.u32 %v1654, 7
    %v1656 = vsub.s32 5, %v1655
    %v1657 = vrot.slane %v1599, %v1656
    %v1658 = vlaneseq
    %v1659 = vshrl.u32 %v1658, 7
    %v1660 = vsub.s32 6, %v1659
    %v1661 = vrot.slane %v1599, %v1660
    %v1662 = vlaneseq
    %v1663 = vshrl.u32 %v1662, 7
    %v1664 = vsub.s32 7, %v1663
    %v1665 = vrot.slane %v1599, %v1664
    %v1682 = vmul.f32 %v1241, %v1605
    %v1683 = vmul.f32 %v1243, %v1605
    %v1684 = vmul.f32 %v1245, %v1609
    %v1685 = vmul.f32 %v1247, %v1609
    %v1686 = vmul.f32 %v1249, %v1613
    %v1687 = vmul.f32 %v1251, %v1613
    %v1688 = vmul.f32 %v1253, %v1617
    %v1689 = vmul.f32 %v1255, %v1617
    %v1690 = vmul.f32 %v1257, %v1621
    %v1691 = vmul.f32 %v1259, %v1621
    %v1692 = vmul.f32 %v1261, %v1625
    %v1693 = vmul.f32 %v1263, %v1625
    %v1694 = vmul.f32 %v1265, %v1629
    %v1695 = vmul.f32 %v1267, %v1629
    %v1696 = vmul.f32 %v1269, %v1633
    %v1697 = vmul.f32 %v1271, %v1633
    %v1698 = vmul.f32 %v1273, %v1637
    %v1699 = vmul.f32 %v1275, %v1637
    %v1700 = vmul.f32 %v1277, %v1641
    %v1701 = vmul.f32 %v1279, %v1641
    %v1702 = vmul.f32 %v1281, %v1645
    %v1703 = vmul.f32 %v1283, %v1645
    %v1704 = vmul.f32 %v1285, %v1649
    %v1705 = vmul.f32 %v1287, %v1649
    %v1706 = vmul.f32 %v1289, %v1653
    %v1707 = vmul.f32 %v1291, %v1653
    %v1708 = vmul.f32 %v1293, %v1657
    %v1709 = vmul.f32 %v1295, %v1657
    %v1710 = vmul.f32 %v1297, %v1661
    %v1711 = vmul.f32 %v1299, %v1661
    %v1712 = vmul.f32 %v1301, %v1665
    %v1713 = vmul.f32 %v1303, %v1665
    %v1714 = vld [vmem:[#allocation8] sm:$0xff]
    %v1715 = vld [vmem:[#allocation8 + $0x8] sm:$0xff]
    %v1718 = vlaneseq
    %v1719 = vshrl.u32 %v1718, 7
    %v1720 = vsub.s32 0, %v1719
    %v1721 = vrot.slane %v1714, %v1720
    %1723 = vbcast.lane.b32.xlu0 %v1721, 256
    %v1724 = vpop.permute.xlu0 %1723
    %s1726 = sor.u32 256, 8
    %1727 = vbcast.lane.b32.xlu0 %v1721, %s1726
    %v1728 = vpop.permute.xlu0 %1727
    %v1729 = vlaneseq
    %v1730 = vshrl.u32 %v1729, 7
    %v1731 = vsub.s32 1, %v1730
    %v1732 = vrot.slane %v1714, %v1731
    %1734 = vbcast.lane.b32.xlu0 %v1732, 256
    %v1735 = vpop.permute.xlu0 %1734
    %s1737 = sor.u32 256, 8
    %1738 = vbcast.lane.b32.xlu0 %v1732, %s1737
    %v1739 = vpop.permute.xlu0 %1738
    %v1740 = vlaneseq
    %v1741 = vshrl.u32 %v1740, 7
    %v1742 = vsub.s32 2, %v1741
    %v1743 = vrot.slane %v1714, %v1742
    %1745 = vbcast.lane.b32.xlu0 %v1743, 256
    %v1746 = vpop.permute.xlu0 %1745
    %s1748 = sor.u32 256, 8
    %1749 = vbcast.lane.b32.xlu0 %v1743, %s1748
    %v1750 = vpop.permute.xlu0 %1749
    %v1751 = vlaneseq
    %v1752 = vshrl.u32 %v1751, 7
    %v1753 = vsub.s32 3, %v1752
    %v1754 = vrot.slane %v1714, %v1753
    %1756 = vbcast.lane.b32.xlu0 %v1754, 256
    %v1757 = vpop.permute.xlu0 %1756
    %s1759 = sor.u32 256, 8
    %1760 = vbcast.lane.b32.xlu0 %v1754, %s1759
    %v1761 = vpop.permute.xlu0 %1760
    %v1762 = vlaneseq
    %v1763 = vshrl.u32 %v1762, 7
    %v1764 = vsub.s32 4, %v1763
    %v1765 = vrot.slane %v1714, %v1764
    %1767 = vbcast.lane.b32.xlu0 %v1765, 256
    %v1768 = vpop.permute.xlu0 %1767
    %s1770 = sor.u32 256, 8
    %1771 = vbcast.lane.b32.xlu0 %v1765, %s1770
    %v1772 = vpop.permute.xlu0 %1771
    %v1773 = vlaneseq
    %v1774 = vshrl.u32 %v1773, 7
    %v1775 = vsub.s32 5, %v1774
    %v1776 = vrot.slane %v1714, %v1775
    %1778 = vbcast.lane.b32.xlu0 %v1776, 256
    %v1779 = vpop.permute.xlu0 %1778
    %s1781 = sor.u32 256, 8
    %1782 = vbcast.lane.b32.xlu0 %v1776, %s1781
    %v1783 = vpop.permute.xlu0 %1782
    %v1784 = vlaneseq
    %v1785 = vshrl.u32 %v1784, 7
    %v1786 = vsub.s32 6, %v1785
    %v1787 = vrot.slane %v1714, %v1786
    %1789 = vbcast.lane.b32.xlu0 %v1787, 256
    %v1790 = vpop.permute.xlu0 %1789
    %s1792 = sor.u32 256, 8
    %1793 = vbcast.lane.b32.xlu0 %v1787, %s1792
    %v1794 = vpop.permute.xlu0 %1793
    %v1795 = vlaneseq
    %v1796 = vshrl.u32 %v1795, 7
    %v1797 = vsub.s32 7, %v1796
    %v1798 = vrot.slane %v1714, %v1797
    %1800 = vbcast.lane.b32.xlu0 %v1798, 256
    %v1801 = vpop.permute.xlu0 %1800
    %s1803 = sor.u32 256, 8
    %1804 = vbcast.lane.b32.xlu0 %v1798, %s1803
    %v1805 = vpop.permute.xlu0 %1804
    %v1806 = vlaneseq
    %v1807 = vshrl.u32 %v1806, 7
    %v1808 = vsub.s32 0, %v1807
    %v1809 = vrot.slane %v1715, %v1808
    %1811 = vbcast.lane.b32.xlu0 %v1809, 256
    %v1812 = vpop.permute.xlu0 %1811
    %s1814 = sor.u32 256, 8
    %1815 = vbcast.lane.b32.xlu0 %v1809, %s1814
    %v1816 = vpop.permute.xlu0 %1815
    %v1817 = vlaneseq
    %v1818 = vshrl.u32 %v1817, 7
    %v1819 = vsub.s32 1, %v1818
    %v1820 = vrot.slane %v1715, %v1819
    %1822 = vbcast.lane.b32.xlu0 %v1820, 256
    %v1823 = vpop.permute.xlu0 %1822
    %s1825 = sor.u32 256, 8
    %1826 = vbcast.lane.b32.xlu0 %v1820, %s1825
    %v1827 = vpop.permute.xlu0 %1826
    %v1828 = vlaneseq
    %v1829 = vshrl.u32 %v1828, 7
    %v1830 = vsub.s32 2, %v1829
    %v1831 = vrot.slane %v1715, %v1830
    %1833 = vbcast.lane.b32.xlu0 %v1831, 256
    %v1834 = vpop.permute.xlu0 %1833
    %s1836 = sor.u32 256, 8
    %1837 = vbcast.lane.b32.xlu0 %v1831, %s1836
    %v1838 = vpop.permute.xlu0 %1837
    %v1839 = vlaneseq
    %v1840 = vshrl.u32 %v1839, 7
    %v1841 = vsub.s32 3, %v1840
    %v1842 = vrot.slane %v1715, %v1841
    %1844 = vbcast.lane.b32.xlu0 %v1842, 256
    %v1845 = vpop.permute.xlu0 %1844
    %s1847 = sor.u32 256, 8
    %1848 = vbcast.lane.b32.xlu0 %v1842, %s1847
    %v1849 = vpop.permute.xlu0 %1848
    %v1850 = vlaneseq
    %v1851 = vshrl.u32 %v1850, 7
    %v1852 = vsub.s32 4, %v1851
    %v1853 = vrot.slane %v1715, %v1852
    %1855 = vbcast.lane.b32.xlu0 %v1853, 256
    %v1856 = vpop.permute.xlu0 %1855
    %s1858 = sor.u32 256, 8
    %1859 = vbcast.lane.b32.xlu0 %v1853, %s1858
    %v1860 = vpop.permute.xlu0 %1859
    %v1861 = vlaneseq
    %v1862 = vshrl.u32 %v1861, 7
    %v1863 = vsub.s32 5, %v1862
    %v1864 = vrot.slane %v1715, %v1863
    %1866 = vbcast.lane.b32.xlu0 %v1864, 256
    %v1867 = vpop.permute.xlu0 %1866
    %s1869 = sor.u32 256, 8
    %1870 = vbcast.lane.b32.xlu0 %v1864, %s1869
    %v1871 = vpop.permute.xlu0 %1870
    %v1872 = vlaneseq
    %v1873 = vshrl.u32 %v1872, 7
    %v1874 = vsub.s32 6, %v1873
    %v1875 = vrot.slane %v1715, %v1874
    %1877 = vbcast.lane.b32.xlu0 %v1875, 256
    %v1878 = vpop.permute.xlu0 %1877
    %s1880 = sor.u32 256, 8
    %1881 = vbcast.lane.b32.xlu0 %v1875, %s1880
    %v1882 = vpop.permute.xlu0 %1881
    %v1883 = vlaneseq
    %v1884 = vshrl.u32 %v1883, 7
    %v1885 = vsub.s32 7, %v1884
    %v1886 = vrot.slane %v1715, %v1885
    %1888 = vbcast.lane.b32.xlu0 %v1886, 256
    %v1889 = vpop.permute.xlu0 %1888
    %s1891 = sor.u32 256, 8
    %1892 = vbcast.lane.b32.xlu0 %v1886, %s1891
    %v1893 = vpop.permute.xlu0 %1892
    %v1926 = vmul.f32 %v1682, %v1724
    %v1927 = vmul.f32 %v1683, %v1728
    %v1928 = vmul.f32 %v1684, %v1735
    %v1929 = vmul.f32 %v1685, %v1739
    %v1930 = vmul.f32 %v1686, %v1746
    %v1931 = vmul.f32 %v1687, %v1750
    %v1932 = vmul.f32 %v1688, %v1757
    %v1933 = vmul.f32 %v1689, %v1761
    %v1934 = vmul.f32 %v1690, %v1768
    %v1935 = vmul.f32 %v1691, %v1772
    %v1936 = vmul.f32 %v1692, %v1779
    %v1937 = vmul.f32 %v1693, %v1783
    %v1938 = vmul.f32 %v1694, %v1790
    %v1939 = vmul.f32 %v1695, %v1794
    %v1940 = vmul.f32 %v1696, %v1801
    %v1941 = vmul.f32 %v1697, %v1805
    %v1942 = vmul.f32 %v1698, %v1812
    %v1943 = vmul.f32 %v1699, %v1816
    %v1944 = vmul.f32 %v1700, %v1823
    %v1945 = vmul.f32 %v1701, %v1827
    %v1946 = vmul.f32 %v1702, %v1834
    %v1947 = vmul.f32 %v1703, %v1838
    %v1948 = vmul.f32 %v1704, %v1845
    %v1949 = vmul.f32 %v1705, %v1849
    %v1950 = vmul.f32 %v1706, %v1856
    %v1951 = vmul.f32 %v1707, %v1860
    %v1952 = vmul.f32 %v1708, %v1867
    %v1953 = vmul.f32 %v1709, %v1871
    %v1954 = vmul.f32 %v1710, %v1878
    %v1955 = vmul.f32 %v1711, %v1882
    %v1956 = vmul.f32 %v1712, %v1889
    %v1957 = vmul.f32 %v1713, %v1893
    %1990 = vset.pattern.permute.xlu0 0
    %1991 = vperm.xlu0 %1990, %v1926
    %v1992 = vpop.permute.xlu0 %1991
    %1993 = vset.pattern.permute.xlu0 0
    %1994 = vperm.xlu0 %1993, %v1927
    %v1995 = vpop.permute.xlu0 %1994
    %1996 = vset.pattern.permute.xlu0 0
    %1997 = vperm.xlu0 %1996, %v1928
    %v1998 = vpop.permute.xlu0 %1997
    %1999 = vset.pattern.permute.xlu0 0
    %2000 = vperm.xlu0 %1999, %v1929
    %v2001 = vpop.permute.xlu0 %2000
    %2002 = vset.pattern.permute.xlu0 0
    %2003 = vperm.xlu0 %2002, %v1930
    %v2004 = vpop.permute.xlu0 %2003
    %2005 = vset.pattern.permute.xlu0 0
    %2006 = vperm.xlu0 %2005, %v1931
    %v2007 = vpop.permute.xlu0 %2006
    %2008 = vset.pattern.permute.xlu0 0
    %2009 = vperm.xlu0 %2008, %v1932
    %v2010 = vpop.permute.xlu0 %2009
    %2011 = vset.pattern.permute.xlu0 0
    %2012 = vperm.xlu0 %2011, %v1933
    %v2013 = vpop.permute.xlu0 %2012
    %2014 = vset.pattern.permute.xlu0 0
    %2015 = vperm.xlu0 %2014, %v1934
    %v2016 = vpop.permute.xlu0 %2015
    %2017 = vset.pattern.permute.xlu0 0
    %2018 = vperm.xlu0 %2017, %v1935
    %v2019 = vpop.permute.xlu0 %2018
    %2020 = vset.pattern.permute.xlu0 0
    %2021 = vperm.xlu0 %2020, %v1936
    %v2022 = vpop.permute.xlu0 %2021
    %2023 = vset.pattern.permute.xlu0 0
    %2024 = vperm.xlu0 %2023, %v1937
    %v2025 = vpop.permute.xlu0 %2024
    %2026 = vset.pattern.permute.xlu0 0
    %2027 = vperm.xlu0 %2026, %v1938
    %v2028 = vpop.permute.xlu0 %2027
    %2029 = vset.pattern.permute.xlu0 0
    %2030 = vperm.xlu0 %2029, %v1939
    %v2031 = vpop.permute.xlu0 %2030
    %2032 = vset.pattern.permute.xlu0 0
    %2033 = vperm.xlu0 %2032, %v1940
    %v2034 = vpop.permute.xlu0 %2033
    %2035 = vset.pattern.permute.xlu0 0
    %2036 = vperm.xlu0 %2035, %v1941
    %v2037 = vpop.permute.xlu0 %2036
    %2038 = vset.pattern.permute.xlu0 0
    %2039 = vperm.xlu0 %2038, %v1942
    %v2040 = vpop.permute.xlu0 %2039
    %2041 = vset.pattern.permute.xlu0 0
    %2042 = vperm.xlu0 %2041, %v1943
    %v2043 = vpop.permute.xlu0 %2042
    %2044 = vset.pattern.permute.xlu0 0
    %2045 = vperm.xlu0 %2044, %v1944
    %v2046 = vpop.permute.xlu0 %2045
    %2047 = vset.pattern.permute.xlu0 0
    %2048 = vperm.xlu0 %2047, %v1945
    %v2049 = vpop.permute.xlu0 %2048
    %2050 = vset.pattern.permute.xlu0 0
    %2051 = vperm.xlu0 %2050, %v1946
    %v2052 = vpop.permute.xlu0 %2051
    %2053 = vset.pattern.permute.xlu0 0
    %2054 = vperm.xlu0 %2053, %v1947
    %v2055 = vpop.permute.xlu0 %2054
    %2056 = vset.pattern.permute.xlu0 0
    %2057 = vperm.xlu0 %2056, %v1948
    %v2058 = vpop.permute.xlu0 %2057
    %2059 = vset.pattern.permute.xlu0 0
    %2060 = vperm.xlu0 %2059, %v1949
    %v2061 = vpop.permute.xlu0 %2060
    %2062 = vset.pattern.permute.xlu0 0
    %2063 = vperm.xlu0 %2062, %v1950
    %v2064 = vpop.permute.xlu0 %2063
    %2065 = vset.pattern.permute.xlu0 0
    %2066 = vperm.xlu0 %2065, %v1951
    %v2067 = vpop.permute.xlu0 %2066
    %2068 = vset.pattern.permute.xlu0 0
    %2069 = vperm.xlu0 %2068, %v1952
    %v2070 = vpop.permute.xlu0 %2069
    %2071 = vset.pattern.permute.xlu0 0
    %2072 = vperm.xlu0 %2071, %v1953
    %v2073 = vpop.permute.xlu0 %2072
    %2074 = vset.pattern.permute.xlu0 0
    %2075 = vperm.xlu0 %2074, %v1954
    %v2076 = vpop.permute.xlu0 %2075
    %2077 = vset.pattern.permute.xlu0 0
    %2078 = vperm.xlu0 %2077, %v1955
    %v2079 = vpop.permute.xlu0 %2078
    %2080 = vset.pattern.permute.xlu0 0
    %2081 = vperm.xlu0 %2080, %v1956
    %v2082 = vpop.permute.xlu0 %2081
    %2083 = vset.pattern.permute.xlu0 0
    %2084 = vperm.xlu0 %2083, %v1957
    %v2085 = vpop.permute.xlu0 %2084
    %v2086 = vlaneseq
    %v2087 = vshrl.u32 %v2086, 7
    %v2088 = vsub.s32 %v949, %v2087
    %v2089 = vrot.slane %v1992, %v2088
    %v2090 = vlaneseq
    %v2091 = vshrl.u32 %v2090, 7
    %v2092 = vsub.s32 %v954, %v2091
    %v2093 = vrot.slane %v1995, %v2092
    %v2094 = vsel %vm959, %v2093, %v2089
    %v2095 = vlaneseq
    %v2096 = vshrl.u32 %v2095, 7
    %v2097 = vsub.s32 %v949, %v2096
    %v2098 = vrot.slane %v1998, %v2097
    %v2099 = vlaneseq
    %v2100 = vshrl.u32 %v2099, 7
    %v2101 = vsub.s32 %v954, %v2100
    %v2102 = vrot.slane %v2001, %v2101
    %v2103 = vsel %vm959, %v2102, %v2098
    %v2104 = vlaneseq
    %v2105 = vshrl.u32 %v2104, 7
    %v2106 = vsub.s32 %v949, %v2105
    %v2107 = vrot.slane %v2004, %v2106
    %v2108 = vlaneseq
    %v2109 = vshrl.u32 %v2108, 7
    %v2110 = vsub.s32 %v954, %v2109
    %v2111 = vrot.slane %v2007, %v2110
    %v2112 = vsel %vm959, %v2111, %v2107
    %v2113 = vlaneseq
    %v2114 = vshrl.u32 %v2113, 7
    %v2115 = vsub.s32 %v949, %v2114
    %v2116 = vrot.slane %v2010, %v2115
    %v2117 = vlaneseq
    %v2118 = vshrl.u32 %v2117, 7
    %v2119 = vsub.s32 %v954, %v2118
    %v2120 = vrot.slane %v2013, %v2119
    %v2121 = vsel %vm959, %v2120, %v2116
    %v2122 = vlaneseq
    %v2123 = vshrl.u32 %v2122, 7
    %v2124 = vsub.s32 %v949, %v2123
    %v2125 = vrot.slane %v2016, %v2124
    %v2126 = vlaneseq
    %v2127 = vshrl.u32 %v2126, 7
    %v2128 = vsub.s32 %v954, %v2127
    %v2129 = vrot.slane %v2019, %v2128
    %v2130 = vsel %vm959, %v2129, %v2125
    %v2131 = vlaneseq
    %v2132 = vshrl.u32 %v2131, 7
    %v2133 = vsub.s32 %v949, %v2132
    %v2134 = vrot.slane %v2022, %v2133
    %v2135 = vlaneseq
    %v2136 = vshrl.u32 %v2135, 7
    %v2137 = vsub.s32 %v954, %v2136
    %v2138 = vrot.slane %v2025, %v2137
    %v2139 = vsel %vm959, %v2138, %v2134
    %v2140 = vlaneseq
    %v2141 = vshrl.u32 %v2140, 7
    %v2142 = vsub.s32 %v949, %v2141
    %v2143 = vrot.slane %v2028, %v2142
    %v2144 = vlaneseq
    %v2145 = vshrl.u32 %v2144, 7
    %v2146 = vsub.s32 %v954, %v2145
    %v2147 = vrot.slane %v2031, %v2146
    %v2148 = vsel %vm959, %v2147, %v2143
    %v2149 = vlaneseq
    %v2150 = vshrl.u32 %v2149, 7
    %v2151 = vsub.s32 %v949, %v2150
    %v2152 = vrot.slane %v2034, %v2151
    %v2153 = vlaneseq
    %v2154 = vshrl.u32 %v2153, 7
    %v2155 = vsub.s32 %v954, %v2154
    %v2156 = vrot.slane %v2037, %v2155
    %v2157 = vsel %vm959, %v2156, %v2152
    %v2158 = vlaneseq
    %v2159 = vshrl.u32 %v2158, 7
    %v2160 = vsub.s32 %v949, %v2159
    %v2161 = vrot.slane %v2040, %v2160
    %v2162 = vlaneseq
    %v2163 = vshrl.u32 %v2162, 7
    %v2164 = vsub.s32 %v954, %v2163
    %v2165 = vrot.slane %v2043, %v2164
    %v2166 = vsel %vm959, %v2165, %v2161
    %v2167 = vlaneseq
    %v2168 = vshrl.u32 %v2167, 7
    %v2169 = vsub.s32 %v949, %v2168
    %v2170 = vrot.slane %v2046, %v2169
    %v2171 = vlaneseq
    %v2172 = vshrl.u32 %v2171, 7
    %v2173 = vsub.s32 %v954, %v2172
    %v2174 = vrot.slane %v2049, %v2173
    %v2175 = vsel %vm959, %v2174, %v2170
    %v2176 = vlaneseq
    %v2177 = vshrl.u32 %v2176, 7
    %v2178 = vsub.s32 %v949, %v2177
    %v2179 = vrot.slane %v2052, %v2178
    %v2180 = vlaneseq
    %v2181 = vshrl.u32 %v2180, 7
    %v2182 = vsub.s32 %v954, %v2181
    %v2183 = vrot.slane %v2055, %v2182
    %v2184 = vsel %vm959, %v2183, %v2179
    %v2185 = vlaneseq
    %v2186 = vshrl.u32 %v2185, 7
    %v2187 = vsub.s32 %v949, %v2186
    %v2188 = vrot.slane %v2058, %v2187
    %v2189 = vlaneseq
    %v2190 = vshrl.u32 %v2189, 7
    %v2191 = vsub.s32 %v954, %v2190
    %v2192 = vrot.slane %v2061, %v2191
    %v2193 = vsel %vm959, %v2192, %v2188
    %v2194 = vlaneseq
    %v2195 = vshrl.u32 %v2194, 7
    %v2196 = vsub.s32 %v949, %v2195
    %v2197 = vrot.slane %v2064, %v2196
    %v2198 = vlaneseq
    %v2199 = vshrl.u32 %v2198, 7
    %v2200 = vsub.s32 %v954, %v2199
    %v2201 = vrot.slane %v2067, %v2200
    %v2202 = vsel %vm959, %v2201, %v2197
    %v2203 = vlaneseq
    %v2204 = vshrl.u32 %v2203, 7
    %v2205 = vsub.s32 %v949, %v2204
    %v2206 = vrot.slane %v2070, %v2205
    %v2207 = vlaneseq
    %v2208 = vshrl.u32 %v2207, 7
    %v2209 = vsub.s32 %v954, %v2208
    %v2210 = vrot.slane %v2073, %v2209
    %v2211 = vsel %vm959, %v2210, %v2206
    %v2212 = vlaneseq
    %v2213 = vshrl.u32 %v2212, 7
    %v2214 = vsub.s32 %v949, %v2213
    %v2215 = vrot.slane %v2076, %v2214
    %v2216 = vlaneseq
    %v2217 = vshrl.u32 %v2216, 7
    %v2218 = vsub.s32 %v954, %v2217
    %v2219 = vrot.slane %v2079, %v2218
    %v2220 = vsel %vm959, %v2219, %v2215
    %v2221 = vlaneseq
    %v2222 = vshrl.u32 %v2221, 7
    %v2223 = vsub.s32 %v949, %v2222
    %v2224 = vrot.slane %v2082, %v2223
    %v2225 = vlaneseq
    %v2226 = vshrl.u32 %v2225, 7
    %v2227 = vsub.s32 %v954, %v2226
    %v2228 = vrot.slane %v2085, %v2227
    %v2229 = vsel %vm959, %v2228, %v2224
    %v2230 = vsel %vm1096, %v2103, %v2094
    %v2231 = vsel %vm1098, %v2112, %v2230
    %v2232 = vsel %vm1100, %v2121, %v2231
    %v2233 = vsel %vm1102, %v2130, %v2232
    %v2234 = vsel %vm1104, %v2139, %v2233
    %v2235 = vsel %vm1106, %v2148, %v2234
    %v2236 = vsel %vm1108, %v2157, %v2235
    %v2237 = vsel %vm1096, %v2175, %v2166
    %v2238 = vsel %vm1098, %v2184, %v2237
    %v2239 = vsel %vm1100, %v2193, %v2238
    %v2240 = vsel %vm1102, %v2202, %v2239
    %v2241 = vsel %vm1104, %v2211, %v2240
    %v2242 = vsel %vm1106, %v2220, %v2241
    %v2243 = vsel %vm1108, %v2229, %v2242
    %v2246 = vsel %vm1119, %v2236, 0.0
    %2247 = vadd.xlane.f32.xlu0 %v2246
    %v2248 = vpop.xlane.xlu0 %2247
    %v2249 = vsel %vm1119, %v2243, 0.0
    %2250 = vadd.xlane.f32.xlu0 %v2249
    %v2251 = vpop.xlane.xlu0 %2250
    %v2252 = vadd.f32 %v2248, 2.220446e-16
    %v2253 = vadd.f32 %v2251, 2.220446e-16
    %v2254 = vrcp.pop %v2252
    %v2255 = vrcp.pop %v2253
    %v2258 = vlaneseq
    %v2259 = vshrl.u32 %v2258, 7
    %v2260 = vsub.s32 0, %v2259
    %v2261 = vrot.slane %v2254, %v2260
    %v2262 = vlaneseq
    %v2263 = vshrl.u32 %v2262, 7
    %v2264 = vsub.s32 1, %v2263
    %v2265 = vrot.slane %v2254, %v2264
    %v2266 = vlaneseq
    %v2267 = vshrl.u32 %v2266, 7
    %v2268 = vsub.s32 2, %v2267
    %v2269 = vrot.slane %v2254, %v2268
    %v2270 = vlaneseq
    %v2271 = vshrl.u32 %v2270, 7
    %v2272 = vsub.s32 3, %v2271
    %v2273 = vrot.slane %v2254, %v2272
    %v2274 = vlaneseq
    %v2275 = vshrl.u32 %v2274, 7
    %v2276 = vsub.s32 4, %v2275
    %v2277 = vrot.slane %v2254, %v2276
    %v2278 = vlaneseq
    %v2279 = vshrl.u32 %v2278, 7
    %v2280 = vsub.s32 5, %v2279
    %v2281 = vrot.slane %v2254, %v2280
    %v2282 = vlaneseq
    %v2283 = vshrl.u32 %v2282, 7
    %v2284 = vsub.s32 6, %v2283
    %v2285 = vrot.slane %v2254, %v2284
    %v2286 = vlaneseq
    %v2287 = vshrl.u32 %v2286, 7
    %v2288 = vsub.s32 7, %v2287
    %v2289 = vrot.slane %v2254, %v2288
    %v2290 = vlaneseq
    %v2291 = vshrl.u32 %v2290, 7
    %v2292 = vsub.s32 0, %v2291
    %v2293 = vrot.slane %v2255, %v2292
    %v2294 = vlaneseq
    %v2295 = vshrl.u32 %v2294, 7
    %v2296 = vsub.s32 1, %v2295
    %v2297 = vrot.slane %v2255, %v2296
    %v2298 = vlaneseq
    %v2299 = vshrl.u32 %v2298, 7
    %v2300 = vsub.s32 2, %v2299
    %v2301 = vrot.slane %v2255, %v2300
    %v2302 = vlaneseq
    %v2303 = vshrl.u32 %v2302, 7
    %v2304 = vsub.s32 3, %v2303
    %v2305 = vrot.slane %v2255, %v2304
    %v2306 = vlaneseq
    %v2307 = vshrl.u32 %v2306, 7
    %v2308 = vsub.s32 4, %v2307
    %v2309 = vrot.slane %v2255, %v2308
    %v2310 = vlaneseq
    %v2311 = vshrl.u32 %v2310, 7
    %v2312 = vsub.s32 5, %v2311
    %v2313 = vrot.slane %v2255, %v2312
    %v2314 = vlaneseq
    %v2315 = vshrl.u32 %v2314, 7
    %v2316 = vsub.s32 6, %v2315
    %v2317 = vrot.slane %v2255, %v2316
    %v2318 = vlaneseq
    %v2319 = vshrl.u32 %v2318, 7
    %v2320 = vsub.s32 7, %v2319
    %v2321 = vrot.slane %v2255, %v2320
    %v2338 = vmul.f32 %v1926, %v2261
    %v2339 = vmul.f32 %v1927, %v2261
    %v2340 = vmul.f32 %v1928, %v2265
    %v2341 = vmul.f32 %v1929, %v2265
    %v2342 = vmul.f32 %v1930, %v2269
    %v2343 = vmul.f32 %v1931, %v2269
    %v2344 = vmul.f32 %v1932, %v2273
    %v2345 = vmul.f32 %v1933, %v2273
    %v2346 = vmul.f32 %v1934, %v2277
    %v2347 = vmul.f32 %v1935, %v2277
    %v2348 = vmul.f32 %v1936, %v2281
    %v2349 = vmul.f32 %v1937, %v2281
    %v2350 = vmul.f32 %v1938, %v2285
    %v2351 = vmul.f32 %v1939, %v2285
    %v2352 = vmul.f32 %v1940, %v2289
    %v2353 = vmul.f32 %v1941, %v2289
    %v2354 = vmul.f32 %v1942, %v2293
    %v2355 = vmul.f32 %v1943, %v2293
    %v2356 = vmul.f32 %v1944, %v2297
    %v2357 = vmul.f32 %v1945, %v2297
    %v2358 = vmul.f32 %v1946, %v2301
    %v2359 = vmul.f32 %v1947, %v2301
    %v2360 = vmul.f32 %v1948, %v2305
    %v2361 = vmul.f32 %v1949, %v2305
    %v2362 = vmul.f32 %v1950, %v2309
    %v2363 = vmul.f32 %v1951, %v2309
    %v2364 = vmul.f32 %v1952, %v2313
    %v2365 = vmul.f32 %v1953, %v2313
    %v2366 = vmul.f32 %v1954, %v2317
    %v2367 = vmul.f32 %v1955, %v2317
    %v2368 = vmul.f32 %v1956, %v2321
    %v2369 = vmul.f32 %v1957, %v2321
    %v2370 = vld [vmem:[#allocation5] sm:$0xf]
    %v2371 = vld [vmem:[#allocation5 + $0x4] sm:$0xf]
    %v2372 = vld [vmem:[#allocation5 + $0x8] sm:$0xf]
    %v2373 = vld [vmem:[#allocation5 + $0xc] sm:$0xf]
    %v2374 = vld [vmem:[#allocation5 + $0x10] sm:$0xf]
    %v2375 = vld [vmem:[#allocation5 + $0x14] sm:$0xf]
    %v2376 = vld [vmem:[#allocation5 + $0x18] sm:$0xf]
    %v2377 = vld [vmem:[#allocation5 + $0x1c] sm:$0xf]
    %v2378 = vld [vmem:[#allocation5 + $0x20] sm:$0xf]
    %v2379 = vld [vmem:[#allocation5 + $0x24] sm:$0xf]
    %v2380 = vld [vmem:[#allocation5 + $0x28] sm:$0xf]
    %v2381 = vld [vmem:[#allocation5 + $0x2c] sm:$0xf]
    %v2382 = vld [vmem:[#allocation5 + $0x30] sm:$0xf]
    %v2383 = vld [vmem:[#allocation5 + $0x34] sm:$0xf]
    %v2384 = vld [vmem:[#allocation5 + $0x38] sm:$0xf]
    %v2385 = vld [vmem:[#allocation5 + $0x3c] sm:$0xf]
    %v2386 = vld [vmem:[#allocation5 + $0x40] sm:$0xf]
    %v2387 = vld [vmem:[#allocation5 + $0x44] sm:$0xf]
    %v2388 = vld [vmem:[#allocation5 + $0x48] sm:$0xf]
    %v2389 = vld [vmem:[#allocation5 + $0x4c] sm:$0xf]
    %v2390 = vld [vmem:[#allocation5 + $0x50] sm:$0xf]
    %v2391 = vld [vmem:[#allocation5 + $0x54] sm:$0xf]
    %v2392 = vld [vmem:[#allocation5 + $0x58] sm:$0xf]
    %v2393 = vld [vmem:[#allocation5 + $0x5c] sm:$0xf]
    %v2394 = vld [vmem:[#allocation5 + $0x60] sm:$0xf]
    %v2395 = vld [vmem:[#allocation5 + $0x64] sm:$0xf]
    %v2396 = vld [vmem:[#allocation5 + $0x68] sm:$0xf]
    %v2397 = vld [vmem:[#allocation5 + $0x6c] sm:$0xf]
    %v2398 = vld [vmem:[#allocation5 + $0x70] sm:$0xf]
    %v2399 = vld [vmem:[#allocation5 + $0x74] sm:$0xf]
    %v2400 = vld [vmem:[#allocation5 + $0x78] sm:$0xf]
    %v2401 = vld [vmem:[#allocation5 + $0x7c] sm:$0xf]
    %v2402 = vunpack.c.l.bf16 %v2370
    %v2403 = vunpack.c.l.bf16 %v2371
    %v2404 = vunpack.c.l.bf16 %v2372
    %v2405 = vunpack.c.l.bf16 %v2373
    %v2406 = vunpack.c.l.bf16 %v2374
    %v2407 = vunpack.c.l.bf16 %v2375
    %v2408 = vunpack.c.l.bf16 %v2376
    %v2409 = vunpack.c.l.bf16 %v2377
    %v2410 = vunpack.c.l.bf16 %v2378
    %v2411 = vunpack.c.l.bf16 %v2379
    %v2412 = vunpack.c.l.bf16 %v2380
    %v2413 = vunpack.c.l.bf16 %v2381
    %v2414 = vunpack.c.l.bf16 %v2382
    %v2415 = vunpack.c.l.bf16 %v2383
    %v2416 = vunpack.c.l.bf16 %v2384
    %v2417 = vunpack.c.l.bf16 %v2385
    %v2418 = vunpack.c.l.bf16 %v2386
    %v2419 = vunpack.c.l.bf16 %v2387
    %v2420 = vunpack.c.l.bf16 %v2388
    %v2421 = vunpack.c.l.bf16 %v2389
    %v2422 = vunpack.c.l.bf16 %v2390
    %v2423 = vunpack.c.l.bf16 %v2391
    %v2424 = vunpack.c.l.bf16 %v2392
    %v2425 = vunpack.c.l.bf16 %v2393
    %v2426 = vunpack.c.l.bf16 %v2394
    %v2427 = vunpack.c.l.bf16 %v2395
    %v2428 = vunpack.c.l.bf16 %v2396
    %v2429 = vunpack.c.l.bf16 %v2397
    %v2430 = vunpack.c.l.bf16 %v2398
    %v2431 = vunpack.c.l.bf16 %v2399
    %v2432 = vunpack.c.l.bf16 %v2400
    %v2433 = vunpack.c.l.bf16 %v2401
    %2436 = vset.pattern.permute.xlu0 0
    %2437 = vperm.xlu0 %2436, %v2338
    %v2438 = vpop.permute.xlu0 %2437
    %2439 = vset.pattern.permute.xlu0 0
    %2440 = vperm.xlu0 %2439, %v2339
    %v2441 = vpop.permute.xlu0 %2440
    %v2442 = vlaneseq
    %v2443 = vshrl.u32 %v2442, 7
    %v2444 = vsub.s32 %v949, %v2443
    %v2445 = vrot.slane %v2438, %v2444
    %v2446 = vlaneseq
    %v2447 = vshrl.u32 %v2446, 7
    %v2448 = vsub.s32 %v954, %v2447
    %v2449 = vrot.slane %v2441, %v2448
    %v2450 = vsel %vm959, %v2449, %v2445
    %v2451 = vsel %vm1119, %v2450, 0
    %2453 = vmatprep.subr.mxu0 0.0
    %2454 = vmatpush1.msra.mxu0 0.0
    %2455 = vmatprep.subr.mxu0 0.0
    %2456 = vmatpush1.msra.mxu0 0.0
    %2457 = vmatprep.subr.mxu0 0.0
    %2458 = vmatpush1.msra.mxu0 0.0
    %2459 = vmatprep.subr.mxu0 0.0
    %2460 = vmatpush1.msra.mxu0 0.0
    %2461 = vmatprep.subr.mxu0 0.0
    %2462 = vmatpush1.msra.mxu0 0.0
    %2463 = vmatprep.subr.mxu0 0.0
    %2464 = vmatpush1.msra.mxu0 0.0
    %2465 = vmatprep.subr.mxu0 0.0
    %2466 = vmatpush1.msra.mxu0 0.0
    %2467 = vmatprep.subr.mxu0 0.0
    %2468 = vmatpush1.msra.mxu0 0.0
    %2469 = vmatprep.subr.mxu0 0.0
    %2470 = vmatpush1.msra.mxu0 0.0
    %2471 = vmatprep.subr.mxu0 0.0
    %2472 = vmatpush1.msra.mxu0 0.0
    %2473 = vmatprep.subr.mxu0 0.0
    %2474 = vmatpush1.msra.mxu0 0.0
    %2475 = vmatprep.subr.mxu0 0.0
    %2476 = vmatpush1.msra.mxu0 0.0
    %2477 = vmatprep.subr.mxu0 0.0
    %2478 = vmatpush1.msra.mxu0 0.0
    %2479 = vmatprep.subr.mxu0 0.0
    %2480 = vmatpush1.msra.mxu0 0.0
    %2481 = vmatprep.subr.mxu0 0.0
    %2482 = vmatpush1.msra.mxu0 %v2403
    %2483 = vmatprep.subr.mxu0 0.0
    %2484 = vmatpush1.msra.mxu0 %v2402
    %2485 = vmatprep.subr.mxu0 0.0
    %2486 = vmatpush2.msra.mxu0 0.0
    %2487 = vmatprep.subr.mxu0 0.0
    %2488 = vmatpush2.msra.mxu0 0.0
    %2489 = vmatprep.subr.mxu0 0.0
    %2490 = vmatpush2.msra.mxu0 0.0
    %2491 = vmatprep.subr.mxu0 0.0
    %2492 = vmatpush2.msra.mxu0 0.0
    %2493 = vmatprep.subr.mxu0 0.0
    %2494 = vmatpush2.msra.mxu0 0.0
    %2495 = vmatprep.subr.mxu0 0.0
    %2496 = vmatpush2.msra.mxu0 0.0
    %2497 = vmatprep.subr.mxu0 0.0
    %2498 = vmatpush2.msra.mxu0 0.0
    %2499 = vmatprep.subr.mxu0 0.0
    %2500 = vmatpush2.msra.mxu0 0.0
    %2501 = vmatprep.subr.mxu0 0.0
    %2502 = vmatpush2.msra.mxu0 0.0
    %2503 = vmatprep.subr.mxu0 0.0
    %2504 = vmatpush2.msra.mxu0 0.0
    %2505 = vmatprep.subr.mxu0 0.0
    %2506 = vmatpush2.msra.mxu0 0.0
    %2507 = vmatprep.subr.mxu0 0.0
    %2508 = vmatpush2.msra.mxu0 0.0
    %2509 = vmatprep.subr.mxu0 0.0
    %2510 = vmatpush2.msra.mxu0 0.0
    %2511 = vmatprep.subr.mxu0 0.0
    %2512 = vmatpush2.msra.mxu0 0.0
    %2513 = vmatprep.subr.mxu0 0.0
    %2514 = vmatpush2.msra.mxu0 0.0
    %2515 = vmatprep.subr.mxu0 0.0
    %2516 = vmatpush2.msra.mxu0 0.0
    %2517 = vmatprep.mubr.f32.mxu0 0.0
    %2518 = vmatmul.mubr.f32.gmra.mxu0 %v2451
    %v2519 = vpop.f32.mrf.mxu0
    %v2520 = vadd.f32 0.0, %v2519
    %v2521 = vpop.f32.mrf.mxu0
    %2522 = vdwg.mxu0
    %2525 = vset.pattern.permute.xlu0 0
    %2526 = vperm.xlu0 %2525, %v2340
    %v2527 = vpop.permute.xlu0 %2526
    %2528 = vset.pattern.permute.xlu0 0
    %2529 = vperm.xlu0 %2528, %v2341
    %v2530 = vpop.permute.xlu0 %2529
    %v2531 = vlaneseq
    %v2532 = vshrl.u32 %v2531, 7
    %v2533 = vsub.s32 %v949, %v2532
    %v2534 = vrot.slane %v2527, %v2533
    %v2535 = vlaneseq
    %v2536 = vshrl.u32 %v2535, 7
    %v2537 = vsub.s32 %v954, %v2536
    %v2538 = vrot.slane %v2530, %v2537
    %v2539 = vsel %vm959, %v2538, %v2534
    %v2540 = vsel %vm1119, %v2539, 0
    %2542 = vmatprep.subr.mxu0 0.0
    %2543 = vmatpush1.msra.mxu0 0.0
    %2544 = vmatprep.subr.mxu0 0.0
    %2545 = vmatpush1.msra.mxu0 0.0
    %2546 = vmatprep.subr.mxu0 0.0
    %2547 = vmatpush1.msra.mxu0 0.0
    %2548 = vmatprep.subr.mxu0 0.0
    %2549 = vmatpush1.msra.mxu0 0.0
    %2550 = vmatprep.subr.mxu0 0.0
    %2551 = vmatpush1.msra.mxu0 0.0
    %2552 = vmatprep.subr.mxu0 0.0
    %2553 = vmatpush1.msra.mxu0 0.0
    %2554 = vmatprep.subr.mxu0 0.0
    %2555 = vmatpush1.msra.mxu0 0.0
    %2556 = vmatprep.subr.mxu0 0.0
    %2557 = vmatpush1.msra.mxu0 0.0
    %2558 = vmatprep.subr.mxu0 0.0
    %2559 = vmatpush1.msra.mxu0 0.0
    %2560 = vmatprep.subr.mxu0 0.0
    %2561 = vmatpush1.msra.mxu0 0.0
    %2562 = vmatprep.subr.mxu0 0.0
    %2563 = vmatpush1.msra.mxu0 0.0
    %2564 = vmatprep.subr.mxu0 0.0
    %2565 = vmatpush1.msra.mxu0 0.0
    %2566 = vmatprep.subr.mxu0 0.0
    %2567 = vmatpush1.msra.mxu0 0.0
    %2568 = vmatprep.subr.mxu0 0.0
    %2569 = vmatpush1.msra.mxu0 0.0
    %2570 = vmatprep.subr.mxu0 0.0
    %2571 = vmatpush1.msra.mxu0 %v2405
    %2572 = vmatprep.subr.mxu0 0.0
    %2573 = vmatpush1.msra.mxu0 %v2404
    %2574 = vmatprep.subr.mxu0 0.0
    %2575 = vmatpush2.msra.mxu0 0.0
    %2576 = vmatprep.subr.mxu0 0.0
    %2577 = vmatpush2.msra.mxu0 0.0
    %2578 = vmatprep.subr.mxu0 0.0
    %2579 = vmatpush2.msra.mxu0 0.0
    %2580 = vmatprep.subr.mxu0 0.0
    %2581 = vmatpush2.msra.mxu0 0.0
    %2582 = vmatprep.subr.mxu0 0.0
    %2583 = vmatpush2.msra.mxu0 0.0
    %2584 = vmatprep.subr.mxu0 0.0
    %2585 = vmatpush2.msra.mxu0 0.0
    %2586 = vmatprep.subr.mxu0 0.0
    %2587 = vmatpush2.msra.mxu0 0.0
    %2588 = vmatprep.subr.mxu0 0.0
    %2589 = vmatpush2.msra.mxu0 0.0
    %2590 = vmatprep.subr.mxu0 0.0
    %2591 = vmatpush2.msra.mxu0 0.0
    %2592 = vmatprep.subr.mxu0 0.0
    %2593 = vmatpush2.msra.mxu0 0.0
    %2594 = vmatprep.subr.mxu0 0.0
    %2595 = vmatpush2.msra.mxu0 0.0
    %2596 = vmatprep.subr.mxu0 0.0
    %2597 = vmatpush2.msra.mxu0 0.0
    %2598 = vmatprep.subr.mxu0 0.0
    %2599 = vmatpush2.msra.mxu0 0.0
    %2600 = vmatprep.subr.mxu0 0.0
    %2601 = vmatpush2.msra.mxu0 0.0
    %2602 = vmatprep.subr.mxu0 0.0
    %2603 = vmatpush2.msra.mxu0 0.0
    %2604 = vmatprep.subr.mxu0 0.0
    %2605 = vmatpush2.msra.mxu0 0.0
    %2606 = vmatprep.mubr.f32.mxu0 0.0
    %2607 = vmatmul.mubr.f32.gmra.mxu0 %v2540
    %v2608 = vpop.f32.mrf.mxu0
    %v2609 = vadd.f32 0.0, %v2608
    %v2610 = vpop.f32.mrf.mxu0
    %2611 = vdwg.mxu0
    %2614 = vset.pattern.permute.xlu0 0
    %2615 = vperm.xlu0 %2614, %v2342
    %v2616 = vpop.permute.xlu0 %2615
    %2617 = vset.pattern.permute.xlu0 0
    %2618 = vperm.xlu0 %2617, %v2343
    %v2619 = vpop.permute.xlu0 %2618
    %v2620 = vlaneseq
    %v2621 = vshrl.u32 %v2620, 7
    %v2622 = vsub.s32 %v949, %v2621
    %v2623 = vrot.slane %v2616, %v2622
    %v2624 = vlaneseq
    %v2625 = vshrl.u32 %v2624, 7
    %v2626 = vsub.s32 %v954, %v2625
    %v2627 = vrot.slane %v2619, %v2626
    %v2628 = vsel %vm959, %v2627, %v2623
    %v2629 = vsel %vm1119, %v2628, 0
    %2631 = vmatprep.subr.mxu0 0.0
    %2632 = vmatpush1.msra.mxu0 0.0
    %2633 = vmatprep.subr.mxu0 0.0
    %2634 = vmatpush1.msra.mxu0 0.0
    %2635 = vmatprep.subr.mxu0 0.0
    %2636 = vmatpush1.msra.mxu0 0.0
    %2637 = vmatprep.subr.mxu0 0.0
    %2638 = vmatpush1.msra.mxu0 0.0
    %2639 = vmatprep.subr.mxu0 0.0
    %2640 = vmatpush1.msra.mxu0 0.0
    %2641 = vmatprep.subr.mxu0 0.0
    %2642 = vmatpush1.msra.mxu0 0.0
    %2643 = vmatprep.subr.mxu0 0.0
    %2644 = vmatpush1.msra.mxu0 0.0
    %2645 = vmatprep.subr.mxu0 0.0
    %2646 = vmatpush1.msra.mxu0 0.0
    %2647 = vmatprep.subr.mxu0 0.0
    %2648 = vmatpush1.msra.mxu0 0.0
    %2649 = vmatprep.subr.mxu0 0.0
    %2650 = vmatpush1.msra.mxu0 0.0
    %2651 = vmatprep.subr.mxu0 0.0
    %2652 = vmatpush1.msra.mxu0 0.0
    %2653 = vmatprep.subr.mxu0 0.0
    %2654 = vmatpush1.msra.mxu0 0.0
    %2655 = vmatprep.subr.mxu0 0.0
    %2656 = vmatpush1.msra.mxu0 0.0
    %2657 = vmatprep.subr.mxu0 0.0
    %2658 = vmatpush1.msra.mxu0 0.0
    %2659 = vmatprep.subr.mxu0 0.0
    %2660 = vmatpush1.msra.mxu0 %v2407
    %2661 = vmatprep.subr.mxu0 0.0
    %2662 = vmatpush1.msra.mxu0 %v2406
    %2663 = vmatprep.subr.mxu0 0.0
    %2664 = vmatpush2.msra.mxu0 0.0
    %2665 = vmatprep.subr.mxu0 0.0
    %2666 = vmatpush2.msra.mxu0 0.0
    %2667 = vmatprep.subr.mxu0 0.0
    %2668 = vmatpush2.msra.mxu0 0.0
    %2669 = vmatprep.subr.mxu0 0.0
    %2670 = vmatpush2.msra.mxu0 0.0
    %2671 = vmatprep.subr.mxu0 0.0
    %2672 = vmatpush2.msra.mxu0 0.0
    %2673 = vmatprep.subr.mxu0 0.0
    %2674 = vmatpush2.msra.mxu0 0.0
    %2675 = vmatprep.subr.mxu0 0.0
    %2676 = vmatpush2.msra.mxu0 0.0
    %2677 = vmatprep.subr.mxu0 0.0
    %2678 = vmatpush2.msra.mxu0 0.0
    %2679 = vmatprep.subr.mxu0 0.0
    %2680 = vmatpush2.msra.mxu0 0.0
    %2681 = vmatprep.subr.mxu0 0.0
    %2682 = vmatpush2.msra.mxu0 0.0
    %2683 = vmatprep.subr.mxu0 0.0
    %2684 = vmatpush2.msra.mxu0 0.0
    %2685 = vmatprep.subr.mxu0 0.0
    %2686 = vmatpush2.msra.mxu0 0.0
    %2687 = vmatprep.subr.mxu0 0.0
    %2688 = vmatpush2.msra.mxu0 0.0
    %2689 = vmatprep.subr.mxu0 0.0
    %2690 = vmatpush2.msra.mxu0 0.0
    %2691 = vmatprep.subr.mxu0 0.0
    %2692 = vmatpush2.msra.mxu0 0.0
    %2693 = vmatprep.subr.mxu0 0.0
    %2694 = vmatpush2.msra.mxu0 0.0
    %2695 = vmatprep.mubr.f32.mxu0 0.0
    %2696 = vmatmul.mubr.f32.gmra.mxu0 %v2629
    %v2697 = vpop.f32.mrf.mxu0
    %v2698 = vadd.f32 0.0, %v2697
    %v2699 = vpop.f32.mrf.mxu0
    %2700 = vdwg.mxu0
    %2703 = vset.pattern.permute.xlu0 0
    %2704 = vperm.xlu0 %2703, %v2344
    %v2705 = vpop.permute.xlu0 %2704
    %2706 = vset.pattern.permute.xlu0 0
    %2707 = vperm.xlu0 %2706, %v2345
    %v2708 = vpop.permute.xlu0 %2707
    %v2709 = vlaneseq
    %v2710 = vshrl.u32 %v2709, 7
    %v2711 = vsub.s32 %v949, %v2710
    %v2712 = vrot.slane %v2705, %v2711
    %v2713 = vlaneseq
    %v2714 = vshrl.u32 %v2713, 7
    %v2715 = vsub.s32 %v954, %v2714
    %v2716 = vrot.slane %v2708, %v2715
    %v2717 = vsel %vm959, %v2716, %v2712
    %v2718 = vsel %vm1119, %v2717, 0
    %2720 = vmatprep.subr.mxu0 0.0
    %2721 = vmatpush1.msra.mxu0 0.0
    %2722 = vmatprep.subr.mxu0 0.0
    %2723 = vmatpush1.msra.mxu0 0.0
    %2724 = vmatprep.subr.mxu0 0.0
    %2725 = vmatpush1.msra.mxu0 0.0
    %2726 = vmatprep.subr.mxu0 0.0
    %2727 = vmatpush1.msra.mxu0 0.0
    %2728 = vmatprep.subr.mxu0 0.0
    %2729 = vmatpush1.msra.mxu0 0.0
    %2730 = vmatprep.subr.mxu0 0.0
    %2731 = vmatpush1.msra.mxu0 0.0
    %2732 = vmatprep.subr.mxu0 0.0
    %2733 = vmatpush1.msra.mxu0 0.0
    %2734 = vmatprep.subr.mxu0 0.0
    %2735 = vmatpush1.msra.mxu0 0.0
    %2736 = vmatprep.subr.mxu0 0.0
    %2737 = vmatpush1.msra.mxu0 0.0
    %2738 = vmatprep.subr.mxu0 0.0
    %2739 = vmatpush1.msra.mxu0 0.0
    %2740 = vmatprep.subr.mxu0 0.0
    %2741 = vmatpush1.msra.mxu0 0.0
    %2742 = vmatprep.subr.mxu0 0.0
    %2743 = vmatpush1.msra.mxu0 0.0
    %2744 = vmatprep.subr.mxu0 0.0
    %2745 = vmatpush1.msra.mxu0 0.0
    %2746 = vmatprep.subr.mxu0 0.0
    %2747 = vmatpush1.msra.mxu0 0.0
    %2748 = vmatprep.subr.mxu0 0.0
    %2749 = vmatpush1.msra.mxu0 %v2409
    %2750 = vmatprep.subr.mxu0 0.0
    %2751 = vmatpush1.msra.mxu0 %v2408
    %2752 = vmatprep.subr.mxu0 0.0
    %2753 = vmatpush2.msra.mxu0 0.0
    %2754 = vmatprep.subr.mxu0 0.0
    %2755 = vmatpush2.msra.mxu0 0.0
    %2756 = vmatprep.subr.mxu0 0.0
    %2757 = vmatpush2.msra.mxu0 0.0
    %2758 = vmatprep.subr.mxu0 0.0
    %2759 = vmatpush2.msra.mxu0 0.0
    %2760 = vmatprep.subr.mxu0 0.0
    %2761 = vmatpush2.msra.mxu0 0.0
    %2762 = vmatprep.subr.mxu0 0.0
    %2763 = vmatpush2.msra.mxu0 0.0
    %2764 = vmatprep.subr.mxu0 0.0
    %2765 = vmatpush2.msra.mxu0 0.0
    %2766 = vmatprep.subr.mxu0 0.0
    %2767 = vmatpush2.msra.mxu0 0.0
    %2768 = vmatprep.subr.mxu0 0.0
    %2769 = vmatpush2.msra.mxu0 0.0
    %2770 = vmatprep.subr.mxu0 0.0
    %2771 = vmatpush2.msra.mxu0 0.0
    %2772 = vmatprep.subr.mxu0 0.0
    %2773 = vmatpush2.msra.mxu0 0.0
    %2774 = vmatprep.subr.mxu0 0.0
    %2775 = vmatpush2.msra.mxu0 0.0
    %2776 = vmatprep.subr.mxu0 0.0
    %2777 = vmatpush2.msra.mxu0 0.0
    %2778 = vmatprep.subr.mxu0 0.0
    %2779 = vmatpush2.msra.mxu0 0.0
    %2780 = vmatprep.subr.mxu0 0.0
    %2781 = vmatpush2.msra.mxu0 0.0
    %2782 = vmatprep.subr.mxu0 0.0
    %2783 = vmatpush2.msra.mxu0 0.0
    %2784 = vmatprep.mubr.f32.mxu0 0.0
    %2785 = vmatmul.mubr.f32.gmra.mxu0 %v2718
    %v2786 = vpop.f32.mrf.mxu0
    %v2787 = vadd.f32 0.0, %v2786
    %v2788 = vpop.f32.mrf.mxu0
    %2789 = vdwg.mxu0
    %2792 = vset.pattern.permute.xlu0 0
    %2793 = vperm.xlu0 %2792, %v2346
    %v2794 = vpop.permute.xlu0 %2793
    %2795 = vset.pattern.permute.xlu0 0
    %2796 = vperm.xlu0 %2795, %v2347
    %v2797 = vpop.permute.xlu0 %2796
    %v2798 = vlaneseq
    %v2799 = vshrl.u32 %v2798, 7
    %v2800 = vsub.s32 %v949, %v2799
    %v2801 = vrot.slane %v2794, %v2800
    %v2802 = vlaneseq
    %v2803 = vshrl.u32 %v2802, 7
    %v2804 = vsub.s32 %v954, %v2803
    %v2805 = vrot.slane %v2797, %v2804
    %v2806 = vsel %vm959, %v2805, %v2801
    %v2807 = vsel %vm1119, %v2806, 0
    %2809 = vmatprep.subr.mxu0 0.0
    %2810 = vmatpush1.msra.mxu0 0.0
    %2811 = vmatprep.subr.mxu0 0.0
    %2812 = vmatpush1.msra.mxu0 0.0
    %2813 = vmatprep.subr.mxu0 0.0
    %2814 = vmatpush1.msra.mxu0 0.0
    %2815 = vmatprep.subr.mxu0 0.0
    %2816 = vmatpush1.msra.mxu0 0.0
    %2817 = vmatprep.subr.mxu0 0.0
    %2818 = vmatpush1.msra.mxu0 0.0
    %2819 = vmatprep.subr.mxu0 0.0
    %2820 = vmatpush1.msra.mxu0 0.0
    %2821 = vmatprep.subr.mxu0 0.0
    %2822 = vmatpush1.msra.mxu0 0.0
    %2823 = vmatprep.subr.mxu0 0.0
    %2824 = vmatpush1.msra.mxu0 0.0
    %2825 = vmatprep.subr.mxu0 0.0
    %2826 = vmatpush1.msra.mxu0 0.0
    %2827 = vmatprep.subr.mxu0 0.0
    %2828 = vmatpush1.msra.mxu0 0.0
    %2829 = vmatprep.subr.mxu0 0.0
    %2830 = vmatpush1.msra.mxu0 0.0
    %2831 = vmatprep.subr.mxu0 0.0
    %2832 = vmatpush1.msra.mxu0 0.0
    %2833 = vmatprep.subr.mxu0 0.0
    %2834 = vmatpush1.msra.mxu0 0.0
    %2835 = vmatprep.subr.mxu0 0.0
    %2836 = vmatpush1.msra.mxu0 0.0
    %2837 = vmatprep.subr.mxu0 0.0
    %2838 = vmatpush1.msra.mxu0 %v2411
    %2839 = vmatprep.subr.mxu0 0.0
    %2840 = vmatpush1.msra.mxu0 %v2410
    %2841 = vmatprep.subr.mxu0 0.0
    %2842 = vmatpush2.msra.mxu0 0.0
    %2843 = vmatprep.subr.mxu0 0.0
    %2844 = vmatpush2.msra.mxu0 0.0
    %2845 = vmatprep.subr.mxu0 0.0
    %2846 = vmatpush2.msra.mxu0 0.0
    %2847 = vmatprep.subr.mxu0 0.0
    %2848 = vmatpush2.msra.mxu0 0.0
    %2849 = vmatprep.subr.mxu0 0.0
    %2850 = vmatpush2.msra.mxu0 0.0
    %2851 = vmatprep.subr.mxu0 0.0
    %2852 = vmatpush2.msra.mxu0 0.0
    %2853 = vmatprep.subr.mxu0 0.0
    %2854 = vmatpush2.msra.mxu0 0.0
    %2855 = vmatprep.subr.mxu0 0.0
    %2856 = vmatpush2.msra.mxu0 0.0
    %2857 = vmatprep.subr.mxu0 0.0
    %2858 = vmatpush2.msra.mxu0 0.0
    %2859 = vmatprep.subr.mxu0 0.0
    %2860 = vmatpush2.msra.mxu0 0.0
    %2861 = vmatprep.subr.mxu0 0.0
    %2862 = vmatpush2.msra.mxu0 0.0
    %2863 = vmatprep.subr.mxu0 0.0
    %2864 = vmatpush2.msra.mxu0 0.0
    %2865 = vmatprep.subr.mxu0 0.0
    %2866 = vmatpush2.msra.mxu0 0.0
    %2867 = vmatprep.subr.mxu0 0.0
    %2868 = vmatpush2.msra.mxu0 0.0
    %2869 = vmatprep.subr.mxu0 0.0
    %2870 = vmatpush2.msra.mxu0 0.0
    %2871 = vmatprep.subr.mxu0 0.0
    %2872 = vmatpush2.msra.mxu0 0.0
    %2873 = vmatprep.mubr.f32.mxu0 0.0
    %2874 = vmatmul.mubr.f32.gmra.mxu0 %v2807
    %v2875 = vpop.f32.mrf.mxu0
    %v2876 = vadd.f32 0.0, %v2875
    %v2877 = vpop.f32.mrf.mxu0
    %2878 = vdwg.mxu0
    %2881 = vset.pattern.permute.xlu0 0
    %2882 = vperm.xlu0 %2881, %v2348
    %v2883 = vpop.permute.xlu0 %2882
    %2884 = vset.pattern.permute.xlu0 0
    %2885 = vperm.xlu0 %2884, %v2349
    %v2886 = vpop.permute.xlu0 %2885
    %v2887 = vlaneseq
    %v2888 = vshrl.u32 %v2887, 7
    %v2889 = vsub.s32 %v949, %v2888
    %v2890 = vrot.slane %v2883, %v2889
    %v2891 = vlaneseq
    %v2892 = vshrl.u32 %v2891, 7
    %v2893 = vsub.s32 %v954, %v2892
    %v2894 = vrot.slane %v2886, %v2893
    %v2895 = vsel %vm959, %v2894, %v2890
    %v2896 = vsel %vm1119, %v2895, 0
    %2898 = vmatprep.subr.mxu0 0.0
    %2899 = vmatpush1.msra.mxu0 0.0
    %2900 = vmatprep.subr.mxu0 0.0
    %2901 = vmatpush1.msra.mxu0 0.0
    %2902 = vmatprep.subr.mxu0 0.0
    %2903 = vmatpush1.msra.mxu0 0.0
    %2904 = vmatprep.subr.mxu0 0.0
    %2905 = vmatpush1.msra.mxu0 0.0
    %2906 = vmatprep.subr.mxu0 0.0
    %2907 = vmatpush1.msra.mxu0 0.0
    %2908 = vmatprep.subr.mxu0 0.0
    %2909 = vmatpush1.msra.mxu0 0.0
    %2910 = vmatprep.subr.mxu0 0.0
    %2911 = vmatpush1.msra.mxu0 0.0
    %2912 = vmatprep.subr.mxu0 0.0
    %2913 = vmatpush1.msra.mxu0 0.0
    %2914 = vmatprep.subr.mxu0 0.0
    %2915 = vmatpush1.msra.mxu0 0.0
    %2916 = vmatprep.subr.mxu0 0.0
    %2917 = vmatpush1.msra.mxu0 0.0
    %2918 = vmatprep.subr.mxu0 0.0
    %2919 = vmatpush1.msra.mxu0 0.0
    %2920 = vmatprep.subr.mxu0 0.0
    %2921 = vmatpush1.msra.mxu0 0.0
    %2922 = vmatprep.subr.mxu0 0.0
    %2923 = vmatpush1.msra.mxu0 0.0
    %2924 = vmatprep.subr.mxu0 0.0
    %2925 = vmatpush1.msra.mxu0 0.0
    %2926 = vmatprep.subr.mxu0 0.0
    %2927 = vmatpush1.msra.mxu0 %v2413
    %2928 = vmatprep.subr.mxu0 0.0
    %2929 = vmatpush1.msra.mxu0 %v2412
    %2930 = vmatprep.subr.mxu0 0.0
    %2931 = vmatpush2.msra.mxu0 0.0
    %2932 = vmatprep.subr.mxu0 0.0
    %2933 = vmatpush2.msra.mxu0 0.0
    %2934 = vmatprep.subr.mxu0 0.0
    %2935 = vmatpush2.msra.mxu0 0.0
    %2936 = vmatprep.subr.mxu0 0.0
    %2937 = vmatpush2.msra.mxu0 0.0
    %2938 = vmatprep.subr.mxu0 0.0
    %2939 = vmatpush2.msra.mxu0 0.0
    %2940 = vmatprep.subr.mxu0 0.0
    %2941 = vmatpush2.msra.mxu0 0.0
    %2942 = vmatprep.subr.mxu0 0.0
    %2943 = vmatpush2.msra.mxu0 0.0
    %2944 = vmatprep.subr.mxu0 0.0
    %2945 = vmatpush2.msra.mxu0 0.0
    %2946 = vmatprep.subr.mxu0 0.0
    %2947 = vmatpush2.msra.mxu0 0.0
    %2948 = vmatprep.subr.mxu0 0.0
    %2949 = vmatpush2.msra.mxu0 0.0
    %2950 = vmatprep.subr.mxu0 0.0
    %2951 = vmatpush2.msra.mxu0 0.0
    %2952 = vmatprep.subr.mxu0 0.0
    %2953 = vmatpush2.msra.mxu0 0.0
    %2954 = vmatprep.subr.mxu0 0.0
    %2955 = vmatpush2.msra.mxu0 0.0
    %2956 = vmatprep.subr.mxu0 0.0
    %2957 = vmatpush2.msra.mxu0 0.0
    %2958 = vmatprep.subr.mxu0 0.0
    %2959 = vmatpush2.msra.mxu0 0.0
    %2960 = vmatprep.subr.mxu0 0.0
    %2961 = vmatpush2.msra.mxu0 0.0
    %2962 = vmatprep.mubr.f32.mxu0 0.0
    %2963 = vmatmul.mubr.f32.gmra.mxu0 %v2896
    %v2964 = vpop.f32.mrf.mxu0
    %v2965 = vadd.f32 0.0, %v2964
    %v2966 = vpop.f32.mrf.mxu0
    %2967 = vdwg.mxu0
    %2970 = vset.pattern.permute.xlu0 0
    %2971 = vperm.xlu0 %2970, %v2350
    %v2972 = vpop.permute.xlu0 %2971
    %2973 = vset.pattern.permute.xlu0 0
    %2974 = vperm.xlu0 %2973, %v2351
    %v2975 = vpop.permute.xlu0 %2974
    %v2976 = vlaneseq
    %v2977 = vshrl.u32 %v2976, 7
    %v2978 = vsub.s32 %v949, %v2977
    %v2979 = vrot.slane %v2972, %v2978
    %v2980 = vlaneseq
    %v2981 = vshrl.u32 %v2980, 7
    %v2982 = vsub.s32 %v954, %v2981
    %v2983 = vrot.slane %v2975, %v2982
    %v2984 = vsel %vm959, %v2983, %v2979
    %v2985 = vsel %vm1119, %v2984, 0
    %2987 = vmatprep.subr.mxu0 0.0
    %2988 = vmatpush1.msra.mxu0 0.0
    %2989 = vmatprep.subr.mxu0 0.0
    %2990 = vmatpush1.msra.mxu0 0.0
    %2991 = vmatprep.subr.mxu0 0.0
    %2992 = vmatpush1.msra.mxu0 0.0
    %2993 = vmatprep.subr.mxu0 0.0
    %2994 = vmatpush1.msra.mxu0 0.0
    %2995 = vmatprep.subr.mxu0 0.0
    %2996 = vmatpush1.msra.mxu0 0.0
    %2997 = vmatprep.subr.mxu0 0.0
    %2998 = vmatpush1.msra.mxu0 0.0
    %2999 = vmatprep.subr.mxu0 0.0
    %3000 = vmatpush1.msra.mxu0 0.0
    %3001 = vmatprep.subr.mxu0 0.0
    %3002 = vmatpush1.msra.mxu0 0.0
    %3003 = vmatprep.subr.mxu0 0.0
    %3004 = vmatpush1.msra.mxu0 0.0
    %3005 = vmatprep.subr.mxu0 0.0
    %3006 = vmatpush1.msra.mxu0 0.0
    %3007 = vmatprep.subr.mxu0 0.0
    %3008 = vmatpush1.msra.mxu0 0.0
    %3009 = vmatprep.subr.mxu0 0.0
    %3010 = vmatpush1.msra.mxu0 0.0
    %3011 = vmatprep.subr.mxu0 0.0
    %3012 = vmatpush1.msra.mxu0 0.0
    %3013 = vmatprep.subr.mxu0 0.0
    %3014 = vmatpush1.msra.mxu0 0.0
    %3015 = vmatprep.subr.mxu0 0.0
    %3016 = vmatpush1.msra.mxu0 %v2415
    %3017 = vmatprep.subr.mxu0 0.0
    %3018 = vmatpush1.msra.mxu0 %v2414
    %3019 = vmatprep.subr.mxu0 0.0
    %3020 = vmatpush2.msra.mxu0 0.0
    %3021 = vmatprep.subr.mxu0 0.0
    %3022 = vmatpush2.msra.mxu0 0.0
    %3023 = vmatprep.subr.mxu0 0.0
    %3024 = vmatpush2.msra.mxu0 0.0
    %3025 = vmatprep.subr.mxu0 0.0
    %3026 = vmatpush2.msra.mxu0 0.0
    %3027 = vmatprep.subr.mxu0 0.0
    %3028 = vmatpush2.msra.mxu0 0.0
    %3029 = vmatprep.subr.mxu0 0.0
    %3030 = vmatpush2.msra.mxu0 0.0
    %3031 = vmatprep.subr.mxu0 0.0
    %3032 = vmatpush2.msra.mxu0 0.0
    %3033 = vmatprep.subr.mxu0 0.0
    %3034 = vmatpush2.msra.mxu0 0.0
    %3035 = vmatprep.subr.mxu0 0.0
    %3036 = vmatpush2.msra.mxu0 0.0
    %3037 = vmatprep.subr.mxu0 0.0
    %3038 = vmatpush2.msra.mxu0 0.0
    %3039 = vmatprep.subr.mxu0 0.0
    %3040 = vmatpush2.msra.mxu0 0.0
    %3041 = vmatprep.subr.mxu0 0.0
    %3042 = vmatpush2.msra.mxu0 0.0
    %3043 = vmatprep.subr.mxu0 0.0
    %3044 = vmatpush2.msra.mxu0 0.0
    %3045 = vmatprep.subr.mxu0 0.0
    %3046 = vmatpush2.msra.mxu0 0.0
    %3047 = vmatprep.subr.mxu0 0.0
    %3048 = vmatpush2.msra.mxu0 0.0
    %3049 = vmatprep.subr.mxu0 0.0
    %3050 = vmatpush2.msra.mxu0 0.0
    %3051 = vmatprep.mubr.f32.mxu0 0.0
    %3052 = vmatmul.mubr.f32.gmra.mxu0 %v2985
    %v3053 = vpop.f32.mrf.mxu0
    %v3054 = vadd.f32 0.0, %v3053
    %v3055 = vpop.f32.mrf.mxu0
    %3056 = vdwg.mxu0
    %3059 = vset.pattern.permute.xlu0 0
    %3060 = vperm.xlu0 %3059, %v2352
    %v3061 = vpop.permute.xlu0 %3060
    %3062 = vset.pattern.permute.xlu0 0
    %3063 = vperm.xlu0 %3062, %v2353
    %v3064 = vpop.permute.xlu0 %3063
    %v3065 = vlaneseq
    %v3066 = vshrl.u32 %v3065, 7
    %v3067 = vsub.s32 %v949, %v3066
    %v3068 = vrot.slane %v3061, %v3067
    %v3069 = vlaneseq
    %v3070 = vshrl.u32 %v3069, 7
    %v3071 = vsub.s32 %v954, %v3070
    %v3072 = vrot.slane %v3064, %v3071
    %v3073 = vsel %vm959, %v3072, %v3068
    %v3074 = vsel %vm1119, %v3073, 0
    %3076 = vmatprep.subr.mxu0 0.0
    %3077 = vmatpush1.msra.mxu0 0.0
    %3078 = vmatprep.subr.mxu0 0.0
    %3079 = vmatpush1.msra.mxu0 0.0
    %3080 = vmatprep.subr.mxu0 0.0
    %3081 = vmatpush1.msra.mxu0 0.0
    %3082 = vmatprep.subr.mxu0 0.0
    %3083 = vmatpush1.msra.mxu0 0.0
    %3084 = vmatprep.subr.mxu0 0.0
    %3085 = vmatpush1.msra.mxu0 0.0
    %3086 = vmatprep.subr.mxu0 0.0
    %3087 = vmatpush1.msra.mxu0 0.0
    %3088 = vmatprep.subr.mxu0 0.0
    %3089 = vmatpush1.msra.mxu0 0.0
    %3090 = vmatprep.subr.mxu0 0.0
    %3091 = vmatpush1.msra.mxu0 0.0
    %3092 = vmatprep.subr.mxu0 0.0
    %3093 = vmatpush1.msra.mxu0 0.0
    %3094 = vmatprep.subr.mxu0 0.0
    %3095 = vmatpush1.msra.mxu0 0.0
    %3096 = vmatprep.subr.mxu0 0.0
    %3097 = vmatpush1.msra.mxu0 0.0
    %3098 = vmatprep.subr.mxu0 0.0
    %3099 = vmatpush1.msra.mxu0 0.0
    %3100 = vmatprep.subr.mxu0 0.0
    %3101 = vmatpush1.msra.mxu0 0.0
    %3102 = vmatprep.subr.mxu0 0.0
    %3103 = vmatpush1.msra.mxu0 0.0
    %3104 = vmatprep.subr.mxu0 0.0
    %3105 = vmatpush1.msra.mxu0 %v2417
    %3106 = vmatprep.subr.mxu0 0.0
    %3107 = vmatpush1.msra.mxu0 %v2416
    %3108 = vmatprep.subr.mxu0 0.0
    %3109 = vmatpush2.msra.mxu0 0.0
    %3110 = vmatprep.subr.mxu0 0.0
    %3111 = vmatpush2.msra.mxu0 0.0
    %3112 = vmatprep.subr.mxu0 0.0
    %3113 = vmatpush2.msra.mxu0 0.0
    %3114 = vmatprep.subr.mxu0 0.0
    %3115 = vmatpush2.msra.mxu0 0.0
    %3116 = vmatprep.subr.mxu0 0.0
    %3117 = vmatpush2.msra.mxu0 0.0
    %3118 = vmatprep.subr.mxu0 0.0
    %3119 = vmatpush2.msra.mxu0 0.0
    %3120 = vmatprep.subr.mxu0 0.0
    %3121 = vmatpush2.msra.mxu0 0.0
    %3122 = vmatprep.subr.mxu0 0.0
    %3123 = vmatpush2.msra.mxu0 0.0
    %3124 = vmatprep.subr.mxu0 0.0
    %3125 = vmatpush2.msra.mxu0 0.0
    %3126 = vmatprep.subr.mxu0 0.0
    %3127 = vmatpush2.msra.mxu0 0.0
    %3128 = vmatprep.subr.mxu0 0.0
    %3129 = vmatpush2.msra.mxu0 0.0
    %3130 = vmatprep.subr.mxu0 0.0
    %3131 = vmatpush2.msra.mxu0 0.0
    %3132 = vmatprep.subr.mxu0 0.0
    %3133 = vmatpush2.msra.mxu0 0.0
    %3134 = vmatprep.subr.mxu0 0.0
    %3135 = vmatpush2.msra.mxu0 0.0
    %3136 = vmatprep.subr.mxu0 0.0
    %3137 = vmatpush2.msra.mxu0 0.0
    %3138 = vmatprep.subr.mxu0 0.0
    %3139 = vmatpush2.msra.mxu0 0.0
    %3140 = vmatprep.mubr.f32.mxu0 0.0
    %3141 = vmatmul.mubr.f32.gmra.mxu0 %v3074
    %v3142 = vpop.f32.mrf.mxu0
    %v3143 = vadd.f32 0.0, %v3142
    %v3144 = vpop.f32.mrf.mxu0
    %3145 = vdwg.mxu0
    %3148 = vset.pattern.permute.xlu0 0
    %3149 = vperm.xlu0 %3148, %v2354
    %v3150 = vpop.permute.xlu0 %3149
    %3151 = vset.pattern.permute.xlu0 0
    %3152 = vperm.xlu0 %3151, %v2355
    %v3153 = vpop.permute.xlu0 %3152
    %v3154 = vlaneseq
    %v3155 = vshrl.u32 %v3154, 7
    %v3156 = vsub.s32 %v949, %v3155
    %v3157 = vrot.slane %v3150, %v3156
    %v3158 = vlaneseq
    %v3159 = vshrl.u32 %v3158, 7
    %v3160 = vsub.s32 %v954, %v3159
    %v3161 = vrot.slane %v3153, %v3160
    %v3162 = vsel %vm959, %v3161, %v3157
    %v3163 = vsel %vm1119, %v3162, 0
    %3165 = vmatprep.subr.mxu0 0.0
    %3166 = vmatpush1.msra.mxu0 0.0
    %3167 = vmatprep.subr.mxu0 0.0
    %3168 = vmatpush1.msra.mxu0 0.0
    %3169 = vmatprep.subr.mxu0 0.0
    %3170 = vmatpush1.msra.mxu0 0.0
    %3171 = vmatprep.subr.mxu0 0.0
    %3172 = vmatpush1.msra.mxu0 0.0
    %3173 = vmatprep.subr.mxu0 0.0
    %3174 = vmatpush1.msra.mxu0 0.0
    %3175 = vmatprep.subr.mxu0 0.0
    %3176 = vmatpush1.msra.mxu0 0.0
    %3177 = vmatprep.subr.mxu0 0.0
    %3178 = vmatpush1.msra.mxu0 0.0
    %3179 = vmatprep.subr.mxu0 0.0
    %3180 = vmatpush1.msra.mxu0 0.0
    %3181 = vmatprep.subr.mxu0 0.0
    %3182 = vmatpush1.msra.mxu0 0.0
    %3183 = vmatprep.subr.mxu0 0.0
    %3184 = vmatpush1.msra.mxu0 0.0
    %3185 = vmatprep.subr.mxu0 0.0
    %3186 = vmatpush1.msra.mxu0 0.0
    %3187 = vmatprep.subr.mxu0 0.0
    %3188 = vmatpush1.msra.mxu0 0.0
    %3189 = vmatprep.subr.mxu0 0.0
    %3190 = vmatpush1.msra.mxu0 0.0
    %3191 = vmatprep.subr.mxu0 0.0
    %3192 = vmatpush1.msra.mxu0 0.0
    %3193 = vmatprep.subr.mxu0 0.0
    %3194 = vmatpush1.msra.mxu0 %v2419
    %3195 = vmatprep.subr.mxu0 0.0
    %3196 = vmatpush1.msra.mxu0 %v2418
    %3197 = vmatprep.subr.mxu0 0.0
    %3198 = vmatpush2.msra.mxu0 0.0
    %3199 = vmatprep.subr.mxu0 0.0
    %3200 = vmatpush2.msra.mxu0 0.0
    %3201 = vmatprep.subr.mxu0 0.0
    %3202 = vmatpush2.msra.mxu0 0.0
    %3203 = vmatprep.subr.mxu0 0.0
    %3204 = vmatpush2.msra.mxu0 0.0
    %3205 = vmatprep.subr.mxu0 0.0
    %3206 = vmatpush2.msra.mxu0 0.0
    %3207 = vmatprep.subr.mxu0 0.0
    %3208 = vmatpush2.msra.mxu0 0.0
    %3209 = vmatprep.subr.mxu0 0.0
    %3210 = vmatpush2.msra.mxu0 0.0
    %3211 = vmatprep.subr.mxu0 0.0
    %3212 = vmatpush2.msra.mxu0 0.0
    %3213 = vmatprep.subr.mxu0 0.0
    %3214 = vmatpush2.msra.mxu0 0.0
    %3215 = vmatprep.subr.mxu0 0.0
    %3216 = vmatpush2.msra.mxu0 0.0
    %3217 = vmatprep.subr.mxu0 0.0
    %3218 = vmatpush2.msra.mxu0 0.0
    %3219 = vmatprep.subr.mxu0 0.0
    %3220 = vmatpush2.msra.mxu0 0.0
    %3221 = vmatprep.subr.mxu0 0.0
    %3222 = vmatpush2.msra.mxu0 0.0
    %3223 = vmatprep.subr.mxu0 0.0
    %3224 = vmatpush2.msra.mxu0 0.0
    %3225 = vmatprep.subr.mxu0 0.0
    %3226 = vmatpush2.msra.mxu0 0.0
    %3227 = vmatprep.subr.mxu0 0.0
    %3228 = vmatpush2.msra.mxu0 0.0
    %3229 = vmatprep.mubr.f32.mxu0 0.0
    %3230 = vmatmul.mubr.f32.gmra.mxu0 %v3163
    %v3231 = vpop.f32.mrf.mxu0
    %v3232 = vadd.f32 0.0, %v3231
    %v3233 = vpop.f32.mrf.mxu0
    %3234 = vdwg.mxu0
    %3237 = vset.pattern.permute.xlu0 0
    %3238 = vperm.xlu0 %3237, %v2356
    %v3239 = vpop.permute.xlu0 %3238
    %3240 = vset.pattern.permute.xlu0 0
    %3241 = vperm.xlu0 %3240, %v2357
    %v3242 = vpop.permute.xlu0 %3241
    %v3243 = vlaneseq
    %v3244 = vshrl.u32 %v3243, 7
    %v3245 = vsub.s32 %v949, %v3244
    %v3246 = vrot.slane %v3239, %v3245
    %v3247 = vlaneseq
    %v3248 = vshrl.u32 %v3247, 7
    %v3249 = vsub.s32 %v954, %v3248
    %v3250 = vrot.slane %v3242, %v3249
    %v3251 = vsel %vm959, %v3250, %v3246
    %v3252 = vsel %vm1119, %v3251, 0
    %3254 = vmatprep.subr.mxu0 0.0
    %3255 = vmatpush1.msra.mxu0 0.0
    %3256 = vmatprep.subr.mxu0 0.0
    %3257 = vmatpush1.msra.mxu0 0.0
    %3258 = vmatprep.subr.mxu0 0.0
    %3259 = vmatpush1.msra.mxu0 0.0
    %3260 = vmatprep.subr.mxu0 0.0
    %3261 = vmatpush1.msra.mxu0 0.0
    %3262 = vmatprep.subr.mxu0 0.0
    %3263 = vmatpush1.msra.mxu0 0.0
    %3264 = vmatprep.subr.mxu0 0.0
    %3265 = vmatpush1.msra.mxu0 0.0
    %3266 = vmatprep.subr.mxu0 0.0
    %3267 = vmatpush1.msra.mxu0 0.0
    %3268 = vmatprep.subr.mxu0 0.0
    %3269 = vmatpush1.msra.mxu0 0.0
    %3270 = vmatprep.subr.mxu0 0.0
    %3271 = vmatpush1.msra.mxu0 0.0
    %3272 = vmatprep.subr.mxu0 0.0
    %3273 = vmatpush1.msra.mxu0 0.0
    %3274 = vmatprep.subr.mxu0 0.0
    %3275 = vmatpush1.msra.mxu0 0.0
    %3276 = vmatprep.subr.mxu0 0.0
    %3277 = vmatpush1.msra.mxu0 0.0
    %3278 = vmatprep.subr.mxu0 0.0
    %3279 = vmatpush1.msra.mxu0 0.0
    %3280 = vmatprep.subr.mxu0 0.0
    %3281 = vmatpush1.msra.mxu0 0.0
    %3282 = vmatprep.subr.mxu0 0.0
    %3283 = vmatpush1.msra.mxu0 %v2421
    %3284 = vmatprep.subr.mxu0 0.0
    %3285 = vmatpush1.msra.mxu0 %v2420
    %3286 = vmatprep.subr.mxu0 0.0
    %3287 = vmatpush2.msra.mxu0 0.0
    %3288 = vmatprep.subr.mxu0 0.0
    %3289 = vmatpush2.msra.mxu0 0.0
    %3290 = vmatprep.subr.mxu0 0.0
    %3291 = vmatpush2.msra.mxu0 0.0
    %3292 = vmatprep.subr.mxu0 0.0
    %3293 = vmatpush2.msra.mxu0 0.0
    %3294 = vmatprep.subr.mxu0 0.0
    %3295 = vmatpush2.msra.mxu0 0.0
    %3296 = vmatprep.subr.mxu0 0.0
    %3297 = vmatpush2.msra.mxu0 0.0
    %3298 = vmatprep.subr.mxu0 0.0
    %3299 = vmatpush2.msra.mxu0 0.0
    %3300 = vmatprep.subr.mxu0 0.0
    %3301 = vmatpush2.msra.mxu0 0.0
    %3302 = vmatprep.subr.mxu0 0.0
    %3303 = vmatpush2.msra.mxu0 0.0
    %3304 = vmatprep.subr.mxu0 0.0
    %3305 = vmatpush2.msra.mxu0 0.0
    %3306 = vmatprep.subr.mxu0 0.0
    %3307 = vmatpush2.msra.mxu0 0.0
    %3308 = vmatprep.subr.mxu0 0.0
    %3309 = vmatpush2.msra.mxu0 0.0
    %3310 = vmatprep.subr.mxu0 0.0
    %3311 = vmatpush2.msra.mxu0 0.0
    %3312 = vmatprep.subr.mxu0 0.0
    %3313 = vmatpush2.msra.mxu0 0.0
    %3314 = vmatprep.subr.mxu0 0.0
    %3315 = vmatpush2.msra.mxu0 0.0
    %3316 = vmatprep.subr.mxu0 0.0
    %3317 = vmatpush2.msra.mxu0 0.0
    %3318 = vmatprep.mubr.f32.mxu0 0.0
    %3319 = vmatmul.mubr.f32.gmra.mxu0 %v3252
    %v3320 = vpop.f32.mrf.mxu0
    %v3321 = vadd.f32 0.0, %v3320
    %v3322 = vpop.f32.mrf.mxu0
    %3323 = vdwg.mxu0
    %3326 = vset.pattern.permute.xlu0 0
    %3327 = vperm.xlu0 %3326, %v2358
    %v3328 = vpop.permute.xlu0 %3327
    %3329 = vset.pattern.permute.xlu0 0
    %3330 = vperm.xlu0 %3329, %v2359
    %v3331 = vpop.permute.xlu0 %3330
    %v3332 = vlaneseq
    %v3333 = vshrl.u32 %v3332, 7
    %v3334 = vsub.s32 %v949, %v3333
    %v3335 = vrot.slane %v3328, %v3334
    %v3336 = vlaneseq
    %v3337 = vshrl.u32 %v3336, 7
    %v3338 = vsub.s32 %v954, %v3337
    %v3339 = vrot.slane %v3331, %v3338
    %v3340 = vsel %vm959, %v3339, %v3335
    %v3341 = vsel %vm1119, %v3340, 0
    %3343 = vmatprep.subr.mxu0 0.0
    %3344 = vmatpush1.msra.mxu0 0.0
    %3345 = vmatprep.subr.mxu0 0.0
    %3346 = vmatpush1.msra.mxu0 0.0
    %3347 = vmatprep.subr.mxu0 0.0
    %3348 = vmatpush1.msra.mxu0 0.0
    %3349 = vmatprep.subr.mxu0 0.0
    %3350 = vmatpush1.msra.mxu0 0.0
    %3351 = vmatprep.subr.mxu0 0.0
    %3352 = vmatpush1.msra.mxu0 0.0
    %3353 = vmatprep.subr.mxu0 0.0
    %3354 = vmatpush1.msra.mxu0 0.0
    %3355 = vmatprep.subr.mxu0 0.0
    %3356 = vmatpush1.msra.mxu0 0.0
    %3357 = vmatprep.subr.mxu0 0.0
    %3358 = vmatpush1.msra.mxu0 0.0
    %3359 = vmatprep.subr.mxu0 0.0
    %3360 = vmatpush1.msra.mxu0 0.0
    %3361 = vmatprep.subr.mxu0 0.0
    %3362 = vmatpush1.msra.mxu0 0.0
    %3363 = vmatprep.subr.mxu0 0.0
    %3364 = vmatpush1.msra.mxu0 0.0
    %3365 = vmatprep.subr.mxu0 0.0
    %3366 = vmatpush1.msra.mxu0 0.0
    %3367 = vmatprep.subr.mxu0 0.0
    %3368 = vmatpush1.msra.mxu0 0.0
    %3369 = vmatprep.subr.mxu0 0.0
    %3370 = vmatpush1.msra.mxu0 0.0
    %3371 = vmatprep.subr.mxu0 0.0
    %3372 = vmatpush1.msra.mxu0 %v2423
    %3373 = vmatprep.subr.mxu0 0.0
    %3374 = vmatpush1.msra.mxu0 %v2422
    %3375 = vmatprep.subr.mxu0 0.0
    %3376 = vmatpush2.msra.mxu0 0.0
    %3377 = vmatprep.subr.mxu0 0.0
    %3378 = vmatpush2.msra.mxu0 0.0
    %3379 = vmatprep.subr.mxu0 0.0
    %3380 = vmatpush2.msra.mxu0 0.0
    %3381 = vmatprep.subr.mxu0 0.0
    %3382 = vmatpush2.msra.mxu0 0.0
    %3383 = vmatprep.subr.mxu0 0.0
    %3384 = vmatpush2.msra.mxu0 0.0
    %3385 = vmatprep.subr.mxu0 0.0
    %3386 = vmatpush2.msra.mxu0 0.0
    %3387 = vmatprep.subr.mxu0 0.0
    %3388 = vmatpush2.msra.mxu0 0.0
    %3389 = vmatprep.subr.mxu0 0.0
    %3390 = vmatpush2.msra.mxu0 0.0
    %3391 = vmatprep.subr.mxu0 0.0
    %3392 = vmatpush2.msra.mxu0 0.0
    %3393 = vmatprep.subr.mxu0 0.0
    %3394 = vmatpush2.msra.mxu0 0.0
    %3395 = vmatprep.subr.mxu0 0.0
    %3396 = vmatpush2.msra.mxu0 0.0
    %3397 = vmatprep.subr.mxu0 0.0
    %3398 = vmatpush2.msra.mxu0 0.0
    %3399 = vmatprep.subr.mxu0 0.0
    %3400 = vmatpush2.msra.mxu0 0.0
    %3401 = vmatprep.subr.mxu0 0.0
    %3402 = vmatpush2.msra.mxu0 0.0
    %3403 = vmatprep.subr.mxu0 0.0
    %3404 = vmatpush2.msra.mxu0 0.0
    %3405 = vmatprep.subr.mxu0 0.0
    %3406 = vmatpush2.msra.mxu0 0.0
    %3407 = vmatprep.mubr.f32.mxu0 0.0
    %3408 = vmatmul.mubr.f32.gmra.mxu0 %v3341
    %v3409 = vpop.f32.mrf.mxu0
    %v3410 = vadd.f32 0.0, %v3409
    %v3411 = vpop.f32.mrf.mxu0
    %3412 = vdwg.mxu0
    %3415 = vset.pattern.permute.xlu0 0
    %3416 = vperm.xlu0 %3415, %v2360
    %v3417 = vpop.permute.xlu0 %3416
    %3418 = vset.pattern.permute.xlu0 0
    %3419 = vperm.xlu0 %3418, %v2361
    %v3420 = vpop.permute.xlu0 %3419
    %v3421 = vlaneseq
    %v3422 = vshrl.u32 %v3421, 7
    %v3423 = vsub.s32 %v949, %v3422
    %v3424 = vrot.slane %v3417, %v3423
    %v3425 = vlaneseq
    %v3426 = vshrl.u32 %v3425, 7
    %v3427 = vsub.s32 %v954, %v3426
    %v3428 = vrot.slane %v3420, %v3427
    %v3429 = vsel %vm959, %v3428, %v3424
    %v3430 = vsel %vm1119, %v3429, 0
    %3432 = vmatprep.subr.mxu0 0.0
    %3433 = vmatpush1.msra.mxu0 0.0
    %3434 = vmatprep.subr.mxu0 0.0
    %3435 = vmatpush1.msra.mxu0 0.0
    %3436 = vmatprep.subr.mxu0 0.0
    %3437 = vmatpush1.msra.mxu0 0.0
    %3438 = vmatprep.subr.mxu0 0.0
    %3439 = vmatpush1.msra.mxu0 0.0
    %3440 = vmatprep.subr.mxu0 0.0
    %3441 = vmatpush1.msra.mxu0 0.0
    %3442 = vmatprep.subr.mxu0 0.0
    %3443 = vmatpush1.msra.mxu0 0.0
    %3444 = vmatprep.subr.mxu0 0.0
    %3445 = vmatpush1.msra.mxu0 0.0
    %3446 = vmatprep.subr.mxu0 0.0
    %3447 = vmatpush1.msra.mxu0 0.0
    %3448 = vmatprep.subr.mxu0 0.0
    %3449 = vmatpush1.msra.mxu0 0.0
    %3450 = vmatprep.subr.mxu0 0.0
    %3451 = vmatpush1.msra.mxu0 0.0
    %3452 = vmatprep.subr.mxu0 0.0
    %3453 = vmatpush1.msra.mxu0 0.0
    %3454 = vmatprep.subr.mxu0 0.0
    %3455 = vmatpush1.msra.mxu0 0.0
    %3456 = vmatprep.subr.mxu0 0.0
    %3457 = vmatpush1.msra.mxu0 0.0
    %3458 = vmatprep.subr.mxu0 0.0
    %3459 = vmatpush1.msra.mxu0 0.0
    %3460 = vmatprep.subr.mxu0 0.0
    %3461 = vmatpush1.msra.mxu0 %v2425
    %3462 = vmatprep.subr.mxu0 0.0
    %3463 = vmatpush1.msra.mxu0 %v2424
    %3464 = vmatprep.subr.mxu0 0.0
    %3465 = vmatpush2.msra.mxu0 0.0
    %3466 = vmatprep.subr.mxu0 0.0
    %3467 = vmatpush2.msra.mxu0 0.0
    %3468 = vmatprep.subr.mxu0 0.0
    %3469 = vmatpush2.msra.mxu0 0.0
    %3470 = vmatprep.subr.mxu0 0.0
    %3471 = vmatpush2.msra.mxu0 0.0
    %3472 = vmatprep.subr.mxu0 0.0
    %3473 = vmatpush2.msra.mxu0 0.0
    %3474 = vmatprep.subr.mxu0 0.0
    %3475 = vmatpush2.msra.mxu0 0.0
    %3476 = vmatprep.subr.mxu0 0.0
    %3477 = vmatpush2.msra.mxu0 0.0
    %3478 = vmatprep.subr.mxu0 0.0
    %3479 = vmatpush2.msra.mxu0 0.0
    %3480 = vmatprep.subr.mxu0 0.0
    %3481 = vmatpush2.msra.mxu0 0.0
    %3482 = vmatprep.subr.mxu0 0.0
    %3483 = vmatpush2.msra.mxu0 0.0
    %3484 = vmatprep.subr.mxu0 0.0
    %3485 = vmatpush2.msra.mxu0 0.0
    %3486 = vmatprep.subr.mxu0 0.0
    %3487 = vmatpush2.msra.mxu0 0.0
    %3488 = vmatprep.subr.mxu0 0.0
    %3489 = vmatpush2.msra.mxu0 0.0
    %3490 = vmatprep.subr.mxu0 0.0
    %3491 = vmatpush2.msra.mxu0 0.0
    %3492 = vmatprep.subr.mxu0 0.0
    %3493 = vmatpush2.msra.mxu0 0.0
    %3494 = vmatprep.subr.mxu0 0.0
    %3495 = vmatpush2.msra.mxu0 0.0
    %3496 = vmatprep.mubr.f32.mxu0 0.0
    %3497 = vmatmul.mubr.f32.gmra.mxu0 %v3430
    %v3498 = vpop.f32.mrf.mxu0
    %v3499 = vadd.f32 0.0, %v3498
    %v3500 = vpop.f32.mrf.mxu0
    %3501 = vdwg.mxu0
    %3504 = vset.pattern.permute.xlu0 0
    %3505 = vperm.xlu0 %3504, %v2362
    %v3506 = vpop.permute.xlu0 %3505
    %3507 = vset.pattern.permute.xlu0 0
    %3508 = vperm.xlu0 %3507, %v2363
    %v3509 = vpop.permute.xlu0 %3508
    %v3510 = vlaneseq
    %v3511 = vshrl.u32 %v3510, 7
    %v3512 = vsub.s32 %v949, %v3511
    %v3513 = vrot.slane %v3506, %v3512
    %v3514 = vlaneseq
    %v3515 = vshrl.u32 %v3514, 7
    %v3516 = vsub.s32 %v954, %v3515
    %v3517 = vrot.slane %v3509, %v3516
    %v3518 = vsel %vm959, %v3517, %v3513
    %v3519 = vsel %vm1119, %v3518, 0
    %3521 = vmatprep.subr.mxu0 0.0
    %3522 = vmatpush1.msra.mxu0 0.0
    %3523 = vmatprep.subr.mxu0 0.0
    %3524 = vmatpush1.msra.mxu0 0.0
    %3525 = vmatprep.subr.mxu0 0.0
    %3526 = vmatpush1.msra.mxu0 0.0
    %3527 = vmatprep.subr.mxu0 0.0
    %3528 = vmatpush1.msra.mxu0 0.0
    %3529 = vmatprep.subr.mxu0 0.0
    %3530 = vmatpush1.msra.mxu0 0.0
    %3531 = vmatprep.subr.mxu0 0.0
    %3532 = vmatpush1.msra.mxu0 0.0
    %3533 = vmatprep.subr.mxu0 0.0
    %3534 = vmatpush1.msra.mxu0 0.0
    %3535 = vmatprep.subr.mxu0 0.0
    %3536 = vmatpush1.msra.mxu0 0.0
    %3537 = vmatprep.subr.mxu0 0.0
    %3538 = vmatpush1.msra.mxu0 0.0
    %3539 = vmatprep.subr.mxu0 0.0
    %3540 = vmatpush1.msra.mxu0 0.0
    %3541 = vmatprep.subr.mxu0 0.0
    %3542 = vmatpush1.msra.mxu0 0.0
    %3543 = vmatprep.subr.mxu0 0.0
    %3544 = vmatpush1.msra.mxu0 0.0
    %3545 = vmatprep.subr.mxu0 0.0
    %3546 = vmatpush1.msra.mxu0 0.0
    %3547 = vmatprep.subr.mxu0 0.0
    %3548 = vmatpush1.msra.mxu0 0.0
    %3549 = vmatprep.subr.mxu0 0.0
    %3550 = vmatpush1.msra.mxu0 %v2427
    %3551 = vmatprep.subr.mxu0 0.0
    %3552 = vmatpush1.msra.mxu0 %v2426
    %3553 = vmatprep.subr.mxu0 0.0
    %3554 = vmatpush2.msra.mxu0 0.0
    %3555 = vmatprep.subr.mxu0 0.0
    %3556 = vmatpush2.msra.mxu0 0.0
    %3557 = vmatprep.subr.mxu0 0.0
    %3558 = vmatpush2.msra.mxu0 0.0
    %3559 = vmatprep.subr.mxu0 0.0
    %3560 = vmatpush2.msra.mxu0 0.0
    %3561 = vmatprep.subr.mxu0 0.0
    %3562 = vmatpush2.msra.mxu0 0.0
    %3563 = vmatprep.subr.mxu0 0.0
    %3564 = vmatpush2.msra.mxu0 0.0
    %3565 = vmatprep.subr.mxu0 0.0
    %3566 = vmatpush2.msra.mxu0 0.0
    %3567 = vmatprep.subr.mxu0 0.0
    %3568 = vmatpush2.msra.mxu0 0.0
    %3569 = vmatprep.subr.mxu0 0.0
    %3570 = vmatpush2.msra.mxu0 0.0
    %3571 = vmatprep.subr.mxu0 0.0
    %3572 = vmatpush2.msra.mxu0 0.0
    %3573 = vmatprep.subr.mxu0 0.0
    %3574 = vmatpush2.msra.mxu0 0.0
    %3575 = vmatprep.subr.mxu0 0.0
    %3576 = vmatpush2.msra.mxu0 0.0
    %3577 = vmatprep.subr.mxu0 0.0
    %3578 = vmatpush2.msra.mxu0 0.0
    %3579 = vmatprep.subr.mxu0 0.0
    %3580 = vmatpush2.msra.mxu0 0.0
    %3581 = vmatprep.subr.mxu0 0.0
    %3582 = vmatpush2.msra.mxu0 0.0
    %3583 = vmatprep.subr.mxu0 0.0
    %3584 = vmatpush2.msra.mxu0 0.0
    %3585 = vmatprep.mubr.f32.mxu0 0.0
    %3586 = vmatmul.mubr.f32.gmra.mxu0 %v3519
    %v3587 = vpop.f32.mrf.mxu0
    %v3588 = vadd.f32 0.0, %v3587
    %v3589 = vpop.f32.mrf.mxu0
    %3590 = vdwg.mxu0
    %3593 = vset.pattern.permute.xlu0 0
    %3594 = vperm.xlu0 %3593, %v2364
    %v3595 = vpop.permute.xlu0 %3594
    %3596 = vset.pattern.permute.xlu0 0
    %3597 = vperm.xlu0 %3596, %v2365
    %v3598 = vpop.permute.xlu0 %3597
    %v3599 = vlaneseq
    %v3600 = vshrl.u32 %v3599, 7
    %v3601 = vsub.s32 %v949, %v3600
    %v3602 = vrot.slane %v3595, %v3601
    %v3603 = vlaneseq
    %v3604 = vshrl.u32 %v3603, 7
    %v3605 = vsub.s32 %v954, %v3604
    %v3606 = vrot.slane %v3598, %v3605
    %v3607 = vsel %vm959, %v3606, %v3602
    %v3608 = vsel %vm1119, %v3607, 0
    %3610 = vmatprep.subr.mxu0 0.0
    %3611 = vmatpush1.msra.mxu0 0.0
    %3612 = vmatprep.subr.mxu0 0.0
    %3613 = vmatpush1.msra.mxu0 0.0
    %3614 = vmatprep.subr.mxu0 0.0
    %3615 = vmatpush1.msra.mxu0 0.0
    %3616 = vmatprep.subr.mxu0 0.0
    %3617 = vmatpush1.msra.mxu0 0.0
    %3618 = vmatprep.subr.mxu0 0.0
    %3619 = vmatpush1.msra.mxu0 0.0
    %3620 = vmatprep.subr.mxu0 0.0
    %3621 = vmatpush1.msra.mxu0 0.0
    %3622 = vmatprep.subr.mxu0 0.0
    %3623 = vmatpush1.msra.mxu0 0.0
    %3624 = vmatprep.subr.mxu0 0.0
    %3625 = vmatpush1.msra.mxu0 0.0
    %3626 = vmatprep.subr.mxu0 0.0
    %3627 = vmatpush1.msra.mxu0 0.0
    %3628 = vmatprep.subr.mxu0 0.0
    %3629 = vmatpush1.msra.mxu0 0.0
    %3630 = vmatprep.subr.mxu0 0.0
    %3631 = vmatpush1.msra.mxu0 0.0
    %3632 = vmatprep.subr.mxu0 0.0
    %3633 = vmatpush1.msra.mxu0 0.0
    %3634 = vmatprep.subr.mxu0 0.0
    %3635 = vmatpush1.msra.mxu0 0.0
    %3636 = vmatprep.subr.mxu0 0.0
    %3637 = vmatpush1.msra.mxu0 0.0
    %3638 = vmatprep.subr.mxu0 0.0
    %3639 = vmatpush1.msra.mxu0 %v2429
    %3640 = vmatprep.subr.mxu0 0.0
    %3641 = vmatpush1.msra.mxu0 %v2428
    %3642 = vmatprep.subr.mxu0 0.0
    %3643 = vmatpush2.msra.mxu0 0.0
    %3644 = vmatprep.subr.mxu0 0.0
    %3645 = vmatpush2.msra.mxu0 0.0
    %3646 = vmatprep.subr.mxu0 0.0
    %3647 = vmatpush2.msra.mxu0 0.0
    %3648 = vmatprep.subr.mxu0 0.0
    %3649 = vmatpush2.msra.mxu0 0.0
    %3650 = vmatprep.subr.mxu0 0.0
    %3651 = vmatpush2.msra.mxu0 0.0
    %3652 = vmatprep.subr.mxu0 0.0
    %3653 = vmatpush2.msra.mxu0 0.0
    %3654 = vmatprep.subr.mxu0 0.0
    %3655 = vmatpush2.msra.mxu0 0.0
    %3656 = vmatprep.subr.mxu0 0.0
    %3657 = vmatpush2.msra.mxu0 0.0
    %3658 = vmatprep.subr.mxu0 0.0
    %3659 = vmatpush2.msra.mxu0 0.0
    %3660 = vmatprep.subr.mxu0 0.0
    %3661 = vmatpush2.msra.mxu0 0.0
    %3662 = vmatprep.subr.mxu0 0.0
    %3663 = vmatpush2.msra.mxu0 0.0
    %3664 = vmatprep.subr.mxu0 0.0
    %3665 = vmatpush2.msra.mxu0 0.0
    %3666 = vmatprep.subr.mxu0 0.0
    %3667 = vmatpush2.msra.mxu0 0.0
    %3668 = vmatprep.subr.mxu0 0.0
    %3669 = vmatpush2.msra.mxu0 0.0
    %3670 = vmatprep.subr.mxu0 0.0
    %3671 = vmatpush2.msra.mxu0 0.0
    %3672 = vmatprep.subr.mxu0 0.0
    %3673 = vmatpush2.msra.mxu0 0.0
    %3674 = vmatprep.mubr.f32.mxu0 0.0
    %3675 = vmatmul.mubr.f32.gmra.mxu0 %v3608
    %v3676 = vpop.f32.mrf.mxu0
    %v3677 = vadd.f32 0.0, %v3676
    %v3678 = vpop.f32.mrf.mxu0
    %3679 = vdwg.mxu0
    %3682 = vset.pattern.permute.xlu0 0
    %3683 = vperm.xlu0 %3682, %v2366
    %v3684 = vpop.permute.xlu0 %3683
    %3685 = vset.pattern.permute.xlu0 0
    %3686 = vperm.xlu0 %3685, %v2367
    %v3687 = vpop.permute.xlu0 %3686
    %v3688 = vlaneseq
    %v3689 = vshrl.u32 %v3688, 7
    %v3690 = vsub.s32 %v949, %v3689
    %v3691 = vrot.slane %v3684, %v3690
    %v3692 = vlaneseq
    %v3693 = vshrl.u32 %v3692, 7
    %v3694 = vsub.s32 %v954, %v3693
    %v3695 = vrot.slane %v3687, %v3694
    %v3696 = vsel %vm959, %v3695, %v3691
    %v3697 = vsel %vm1119, %v3696, 0
    %3699 = vmatprep.subr.mxu0 0.0
    %3700 = vmatpush1.msra.mxu0 0.0
    %3701 = vmatprep.subr.mxu0 0.0
    %3702 = vmatpush1.msra.mxu0 0.0
    %3703 = vmatprep.subr.mxu0 0.0
    %3704 = vmatpush1.msra.mxu0 0.0
    %3705 = vmatprep.subr.mxu0 0.0
    %3706 = vmatpush1.msra.mxu0 0.0
    %3707 = vmatprep.subr.mxu0 0.0
    %3708 = vmatpush1.msra.mxu0 0.0
    %3709 = vmatprep.subr.mxu0 0.0
    %3710 = vmatpush1.msra.mxu0 0.0
    %3711 = vmatprep.subr.mxu0 0.0
    %3712 = vmatpush1.msra.mxu0 0.0
    %3713 = vmatprep.subr.mxu0 0.0
    %3714 = vmatpush1.msra.mxu0 0.0
    %3715 = vmatprep.subr.mxu0 0.0
    %3716 = vmatpush1.msra.mxu0 0.0
    %3717 = vmatprep.subr.mxu0 0.0
    %3718 = vmatpush1.msra.mxu0 0.0
    %3719 = vmatprep.subr.mxu0 0.0
    %3720 = vmatpush1.msra.mxu0 0.0
    %3721 = vmatprep.subr.mxu0 0.0
    %3722 = vmatpush1.msra.mxu0 0.0
    %3723 = vmatprep.subr.mxu0 0.0
    %3724 = vmatpush1.msra.mxu0 0.0
    %3725 = vmatprep.subr.mxu0 0.0
    %3726 = vmatpush1.msra.mxu0 0.0
    %3727 = vmatprep.subr.mxu0 0.0
    %3728 = vmatpush1.msra.mxu0 %v2431
    %3729 = vmatprep.subr.mxu0 0.0
    %3730 = vmatpush1.msra.mxu0 %v2430
    %3731 = vmatprep.subr.mxu0 0.0
    %3732 = vmatpush2.msra.mxu0 0.0
    %3733 = vmatprep.subr.mxu0 0.0
    %3734 = vmatpush2.msra.mxu0 0.0
    %3735 = vmatprep.subr.mxu0 0.0
    %3736 = vmatpush2.msra.mxu0 0.0
    %3737 = vmatprep.subr.mxu0 0.0
    %3738 = vmatpush2.msra.mxu0 0.0
    %3739 = vmatprep.subr.mxu0 0.0
    %3740 = vmatpush2.msra.mxu0 0.0
    %3741 = vmatprep.subr.mxu0 0.0
    %3742 = vmatpush2.msra.mxu0 0.0
    %3743 = vmatprep.subr.mxu0 0.0
    %3744 = vmatpush2.msra.mxu0 0.0
    %3745 = vmatprep.subr.mxu0 0.0
    %3746 = vmatpush2.msra.mxu0 0.0
    %3747 = vmatprep.subr.mxu0 0.0
    %3748 = vmatpush2.msra.mxu0 0.0
    %3749 = vmatprep.subr.mxu0 0.0
    %3750 = vmatpush2.msra.mxu0 0.0
    %3751 = vmatprep.subr.mxu0 0.0
    %3752 = vmatpush2.msra.mxu0 0.0
    %3753 = vmatprep.subr.mxu0 0.0
    %3754 = vmatpush2.msra.mxu0 0.0
    %3755 = vmatprep.subr.mxu0 0.0
    %3756 = vmatpush2.msra.mxu0 0.0
    %3757 = vmatprep.subr.mxu0 0.0
    %3758 = vmatpush2.msra.mxu0 0.0
    %3759 = vmatprep.subr.mxu0 0.0
    %3760 = vmatpush2.msra.mxu0 0.0
    %3761 = vmatprep.subr.mxu0 0.0
    %3762 = vmatpush2.msra.mxu0 0.0
    %3763 = vmatprep.mubr.f32.mxu0 0.0
    %3764 = vmatmul.mubr.f32.gmra.mxu0 %v3697
    %v3765 = vpop.f32.mrf.mxu0
    %v3766 = vadd.f32 0.0, %v3765
    %v3767 = vpop.f32.mrf.mxu0
    %3768 = vdwg.mxu0
    %3771 = vset.pattern.permute.xlu0 0
    %3772 = vperm.xlu0 %3771, %v2368
    %v3773 = vpop.permute.xlu0 %3772
    %3774 = vset.pattern.permute.xlu0 0
    %3775 = vperm.xlu0 %3774, %v2369
    %v3776 = vpop.permute.xlu0 %3775
    %v3777 = vlaneseq
    %v3778 = vshrl.u32 %v3777, 7
    %v3779 = vsub.s32 %v949, %v3778
    %v3780 = vrot.slane %v3773, %v3779
    %v3781 = vlaneseq
    %v3782 = vshrl.u32 %v3781, 7
    %v3783 = vsub.s32 %v954, %v3782
    %v3784 = vrot.slane %v3776, %v3783
    %v3785 = vsel %vm959, %v3784, %v3780
    %v3786 = vsel %vm1119, %v3785, 0
    %3788 = vmatprep.subr.mxu0 0.0
    %3789 = vmatpush1.msra.mxu0 0.0
    %3790 = vmatprep.subr.mxu0 0.0
    %3791 = vmatpush1.msra.mxu0 0.0
    %3792 = vmatprep.subr.mxu0 0.0
    %3793 = vmatpush1.msra.mxu0 0.0
    %3794 = vmatprep.subr.mxu0 0.0
    %3795 = vmatpush1.msra.mxu0 0.0
    %3796 = vmatprep.subr.mxu0 0.0
    %3797 = vmatpush1.msra.mxu0 0.0
    %3798 = vmatprep.subr.mxu0 0.0
    %3799 = vmatpush1.msra.mxu0 0.0
    %3800 = vmatprep.subr.mxu0 0.0
    %3801 = vmatpush1.msra.mxu0 0.0
    %3802 = vmatprep.subr.mxu0 0.0
    %3803 = vmatpush1.msra.mxu0 0.0
    %3804 = vmatprep.subr.mxu0 0.0
    %3805 = vmatpush1.msra.mxu0 0.0
    %3806 = vmatprep.subr.mxu0 0.0
    %3807 = vmatpush1.msra.mxu0 0.0
    %3808 = vmatprep.subr.mxu0 0.0
    %3809 = vmatpush1.msra.mxu0 0.0
    %3810 = vmatprep.subr.mxu0 0.0
    %3811 = vmatpush1.msra.mxu0 0.0
    %3812 = vmatprep.subr.mxu0 0.0
    %3813 = vmatpush1.msra.mxu0 0.0
    %3814 = vmatprep.subr.mxu0 0.0
    %3815 = vmatpush1.msra.mxu0 0.0
    %3816 = vmatprep.subr.mxu0 0.0
    %3817 = vmatpush1.msra.mxu0 %v2433
    %3818 = vmatprep.subr.mxu0 0.0
    %3819 = vmatpush1.msra.mxu0 %v2432
    %3820 = vmatprep.subr.mxu0 0.0
    %3821 = vmatpush2.msra.mxu0 0.0
    %3822 = vmatprep.subr.mxu0 0.0
    %3823 = vmatpush2.msra.mxu0 0.0
    %3824 = vmatprep.subr.mxu0 0.0
    %3825 = vmatpush2.msra.mxu0 0.0
    %3826 = vmatprep.subr.mxu0 0.0
    %3827 = vmatpush2.msra.mxu0 0.0
    %3828 = vmatprep.subr.mxu0 0.0
    %3829 = vmatpush2.msra.mxu0 0.0
    %3830 = vmatprep.subr.mxu0 0.0
    %3831 = vmatpush2.msra.mxu0 0.0
    %3832 = vmatprep.subr.mxu0 0.0
    %3833 = vmatpush2.msra.mxu0 0.0
    %3834 = vmatprep.subr.mxu0 0.0
    %3835 = vmatpush2.msra.mxu0 0.0
    %3836 = vmatprep.subr.mxu0 0.0
    %3837 = vmatpush2.msra.mxu0 0.0
    %3838 = vmatprep.subr.mxu0 0.0
    %3839 = vmatpush2.msra.mxu0 0.0
    %3840 = vmatprep.subr.mxu0 0.0
    %3841 = vmatpush2.msra.mxu0 0.0
    %3842 = vmatprep.subr.mxu0 0.0
    %3843 = vmatpush2.msra.mxu0 0.0
    %3844 = vmatprep.subr.mxu0 0.0
    %3845 = vmatpush2.msra.mxu0 0.0
    %3846 = vmatprep.subr.mxu0 0.0
    %3847 = vmatpush2.msra.mxu0 0.0
    %3848 = vmatprep.subr.mxu0 0.0
    %3849 = vmatpush2.msra.mxu0 0.0
    %3850 = vmatprep.subr.mxu0 0.0
    %3851 = vmatpush2.msra.mxu0 0.0
    %3852 = vmatprep.mubr.f32.mxu0 0.0
    %3853 = vmatmul.mubr.f32.gmra.mxu0 %v3786
    %v3854 = vpop.f32.mrf.mxu0
    %v3855 = vadd.f32 0.0, %v3854
    %v3856 = vpop.f32.mrf.mxu0
    %3857 = vdwg.mxu0
    %v3858 = vsel %vm1096, %v2539, %v2450
    %v3859 = vsel %vm1098, %v2628, %v3858
    %v3860 = vsel %vm1100, %v2717, %v3859
    %v3861 = vsel %vm1102, %v2806, %v3860
    %v3862 = vsel %vm1104, %v2895, %v3861
    %v3863 = vsel %vm1106, %v2984, %v3862
    %v3864 = vsel %vm1108, %v3073, %v3863
    %v3865 = vsel %vm1096, %v3251, %v3162
    %v3866 = vsel %vm1098, %v3340, %v3865
    %v3867 = vsel %vm1100, %v3429, %v3866
    %v3868 = vsel %vm1102, %v3518, %v3867
    %v3869 = vsel %vm1104, %v3607, %v3868
    %v3870 = vsel %vm1106, %v3696, %v3869
    %v3871 = vsel %vm1108, %v3785, %v3870
    %v3874 = vadd.f32 %v256, %v3864
    %v3875 = vadd.f32 %v257, %v3871
    %v3876 = vld [vmem:[%s9] sm:$0xff]
    %v3877 = vld [vmem:[%s9 + $0x8] sm:$0xff]
    %v3878 = vsel %vm1119, %v3864, 0
    %v3880 = vsel %vm1119, %v3871, 0
    %3882 = vmatprep.subr.mxu0 0.0
    %3883 = vmatpush1.msra.mxu0 0.0
    %3884 = vmatprep.subr.mxu0 0.0
    %3885 = vmatpush1.msra.mxu0 0.0
    %3886 = vmatprep.subr.mxu0 0.0
    %3887 = vmatpush1.msra.mxu0 0.0
    %3888 = vmatprep.subr.mxu0 0.0
    %3889 = vmatpush1.msra.mxu0 0.0
    %3890 = vmatprep.subr.mxu0 0.0
    %3891 = vmatpush1.msra.mxu0 0.0
    %3892 = vmatprep.subr.mxu0 0.0
    %3893 = vmatpush1.msra.mxu0 0.0
    %3894 = vmatprep.subr.mxu0 0.0
    %3895 = vmatpush1.msra.mxu0 0.0
    %3896 = vmatprep.subr.mxu0 0.0
    %3897 = vmatpush1.msra.mxu0 0.0
    %3898 = vmatprep.subr.mxu0 0.0
    %3899 = vmatpush1.msra.mxu0 0.0
    %3900 = vmatprep.subr.mxu0 0.0
    %3901 = vmatpush1.msra.mxu0 0.0
    %3902 = vmatprep.subr.mxu0 0.0
    %3903 = vmatpush1.msra.mxu0 0.0
    %3904 = vmatprep.subr.mxu0 0.0
    %3905 = vmatpush1.msra.mxu0 0.0
    %3906 = vmatprep.subr.mxu0 0.0
    %3907 = vmatpush1.msra.mxu0 0.0
    %3908 = vmatprep.subr.mxu0 0.0
    %3909 = vmatpush1.msra.mxu0 0.0
    %3910 = vmatprep.subr.mxu0 0.0
    %v3911 = vand.u32 %v3877, 4294901760
    %3912 = vmatpush1.msra.mxu0 %v3911
    %3913 = vmatprep.subr.mxu0 0.0
    %v3914 = vand.u32 %v3876, 4294901760
    %3915 = vmatpush1.msra.mxu0 %v3914
    %3916 = vmatprep.subr.mxu0 0.0
    %3917 = vmatpush2.msra.mxu0 0.0
    %3918 = vmatprep.subr.mxu0 0.0
    %3919 = vmatpush2.msra.mxu0 0.0
    %3920 = vmatprep.subr.mxu0 0.0
    %3921 = vmatpush2.msra.mxu0 0.0
    %3922 = vmatprep.subr.mxu0 0.0
    %3923 = vmatpush2.msra.mxu0 0.0
    %3924 = vmatprep.subr.mxu0 0.0
    %3925 = vmatpush2.msra.mxu0 0.0
    %3926 = vmatprep.subr.mxu0 0.0
    %3927 = vmatpush2.msra.mxu0 0.0
    %3928 = vmatprep.subr.mxu0 0.0
    %3929 = vmatpush2.msra.mxu0 0.0
    %3930 = vmatprep.subr.mxu0 0.0
    %3931 = vmatpush2.msra.mxu0 0.0
    %3932 = vmatprep.subr.mxu0 0.0
    %3933 = vmatpush2.msra.mxu0 0.0
    %3934 = vmatprep.subr.mxu0 0.0
    %3935 = vmatpush2.msra.mxu0 0.0
    %3936 = vmatprep.subr.mxu0 0.0
    %3937 = vmatpush2.msra.mxu0 0.0
    %3938 = vmatprep.subr.mxu0 0.0
    %3939 = vmatpush2.msra.mxu0 0.0
    %3940 = vmatprep.subr.mxu0 0.0
    %3941 = vmatpush2.msra.mxu0 0.0
    %3942 = vmatprep.subr.mxu0 0.0
    %3943 = vmatpush2.msra.mxu0 0.0
    %3944 = vmatprep.subr.mxu0 0.0
    %3945 = vmatpush2.msra.mxu0 0.0
    %3946 = vmatprep.subr.mxu0 0.0
    %3947 = vmatpush2.msra.mxu0 0.0
    %3948 = vmatprep.mubr.f32.mxu0 0.0
    %v3949 = vand.u32 %v3878, 4294901760
    %v3950 = vsub.f32 %v3878, %v3949
    %v3951 = vand.u32 %v3950, 4294901760
    %v3952 = vsub.f32 %v3950, %v3951
    %v3953 = vand.u32 %v3952, 4294901760
    %3954 = vmatmul.mubr.f32.gmra.mxu0 %v3953
    %v3955 = vpop.f32.mrf.mxu0
    %v3956 = vadd.f32 0.0, %v3955
    %v3957 = vpop.f32.mrf.mxu0
    %3958 = vmatprep.mubr.f32.mxu0 0.0
    %v3959 = vand.u32 %v3880, 4294901760
    %v3960 = vsub.f32 %v3880, %v3959
    %v3961 = vand.u32 %v3960, 4294901760
    %v3962 = vsub.f32 %v3960, %v3961
    %v3963 = vand.u32 %v3962, 4294901760
    %3964 = vmatmul.mubr.f32.gmra.mxu0 %v3963
    %v3965 = vpop.f32.mrf.mxu0
    %v3966 = vadd.f32 0.0, %v3965
    %v3967 = vpop.f32.mrf.mxu0
    %3968 = vdwg.mxu0
    %3969 = vmatprep.subr.mxu0 0.0
    %3970 = vmatpush1.msra.mxu0 0.0
    %3971 = vmatprep.subr.mxu0 0.0
    %3972 = vmatpush1.msra.mxu0 0.0
    %3973 = vmatprep.subr.mxu0 0.0
    %3974 = vmatpush1.msra.mxu0 0.0
    %3975 = vmatprep.subr.mxu0 0.0
    %3976 = vmatpush1.msra.mxu0 0.0
    %3977 = vmatprep.subr.mxu0 0.0
    %3978 = vmatpush1.msra.mxu0 0.0
    %3979 = vmatprep.subr.mxu0 0.0
    %3980 = vmatpush1.msra.mxu0 0.0
    %3981 = vmatprep.subr.mxu0 0.0
    %3982 = vmatpush1.msra.mxu0 0.0
    %3983 = vmatprep.subr.mxu0 0.0
    %3984 = vmatpush1.msra.mxu0 0.0
    %3985 = vmatprep.subr.mxu0 0.0
    %3986 = vmatpush1.msra.mxu0 0.0
    %3987 = vmatprep.subr.mxu0 0.0
    %3988 = vmatpush1.msra.mxu0 0.0
    %3989 = vmatprep.subr.mxu0 0.0
    %3990 = vmatpush1.msra.mxu0 0.0
    %3991 = vmatprep.subr.mxu0 0.0
    %3992 = vmatpush1.msra.mxu0 0.0
    %3993 = vmatprep.subr.mxu0 0.0
    %3994 = vmatpush1.msra.mxu0 0.0
    %3995 = vmatprep.subr.mxu0 0.0
    %3996 = vmatpush1.msra.mxu0 0.0
    %3997 = vmatprep.subr.mxu0 0.0
    %v3998 = vand.u32 %v3877, 4294901760
    %v3999 = vsub.f32 %v3877, %v3998
    %v4000 = vand.u32 %v3999, 4294901760
    %v4001 = vsub.f32 %v3999, %v4000
    %v4002 = vand.u32 %v4001, 4294901760
    %4003 = vmatpush1.msra.mxu0 %v4002
    %4004 = vmatprep.subr.mxu0 0.0
    %v4005 = vand.u32 %v3876, 4294901760
    %v4006 = vsub.f32 %v3876, %v4005
    %v4007 = vand.u32 %v4006, 4294901760
    %v4008 = vsub.f32 %v4006, %v4007
    %v4009 = vand.u32 %v4008, 4294901760
    %4010 = vmatpush1.msra.mxu0 %v4009
    %4011 = vmatprep.subr.mxu0 0.0
    %4012 = vmatpush2.msra.mxu0 0.0
    %4013 = vmatprep.subr.mxu0 0.0
    %4014 = vmatpush2.msra.mxu0 0.0
    %4015 = vmatprep.subr.mxu0 0.0
    %4016 = vmatpush2.msra.mxu0 0.0
    %4017 = vmatprep.subr.mxu0 0.0
    %4018 = vmatpush2.msra.mxu0 0.0
    %4019 = vmatprep.subr.mxu0 0.0
    %4020 = vmatpush2.msra.mxu0 0.0
    %4021 = vmatprep.subr.mxu0 0.0
    %4022 = vmatpush2.msra.mxu0 0.0
    %4023 = vmatprep.subr.mxu0 0.0
    %4024 = vmatpush2.msra.mxu0 0.0
    %4025 = vmatprep.subr.mxu0 0.0
    %4026 = vmatpush2.msra.mxu0 0.0
    %4027 = vmatprep.subr.mxu0 0.0
    %4028 = vmatpush2.msra.mxu0 0.0
    %4029 = vmatprep.subr.mxu0 0.0
    %4030 = vmatpush2.msra.mxu0 0.0
    %4031 = vmatprep.subr.mxu0 0.0
    %4032 = vmatpush2.msra.mxu0 0.0
    %4033 = vmatprep.subr.mxu0 0.0
    %4034 = vmatpush2.msra.mxu0 0.0
    %4035 = vmatprep.subr.mxu0 0.0
    %4036 = vmatpush2.msra.mxu0 0.0
    %4037 = vmatprep.subr.mxu0 0.0
    %4038 = vmatpush2.msra.mxu0 0.0
    %4039 = vmatprep.subr.mxu0 0.0
    %4040 = vmatpush2.msra.mxu0 0.0
    %4041 = vmatprep.subr.mxu0 0.0
    %4042 = vmatpush2.msra.mxu0 0.0
    %4043 = vmatprep.mubr.f32.mxu0 0.0
    %v4044 = vand.u32 %v3878, 4294901760
    %4045 = vmatmul.mubr.f32.gmra.mxu0 %v4044
    %v4046 = vpop.f32.mrf.mxu0
    %v4047 = vadd.f32 %v3956, %v4046
    %v4048 = vpop.f32.mrf.mxu0
    %4049 = vmatprep.mubr.f32.mxu0 0.0
    %v4050 = vand.u32 %v3880, 4294901760
    %4051 = vmatmul.mubr.f32.gmra.mxu0 %v4050
    %v4052 = vpop.f32.mrf.mxu0
    %v4053 = vadd.f32 %v3966, %v4052
    %v4054 = vpop.f32.mrf.mxu0
    %4055 = vdwg.mxu0
    %4056 = vmatprep.subr.mxu0 0.0
    %4057 = vmatpush1.msra.mxu0 0.0
    %4058 = vmatprep.subr.mxu0 0.0
    %4059 = vmatpush1.msra.mxu0 0.0
    %4060 = vmatprep.subr.mxu0 0.0
    %4061 = vmatpush1.msra.mxu0 0.0
    %4062 = vmatprep.subr.mxu0 0.0
    %4063 = vmatpush1.msra.mxu0 0.0
    %4064 = vmatprep.subr.mxu0 0.0
    %4065 = vmatpush1.msra.mxu0 0.0
    %4066 = vmatprep.subr.mxu0 0.0
    %4067 = vmatpush1.msra.mxu0 0.0
    %4068 = vmatprep.subr.mxu0 0.0
    %4069 = vmatpush1.msra.mxu0 0.0
    %4070 = vmatprep.subr.mxu0 0.0
    %4071 = vmatpush1.msra.mxu0 0.0
    %4072 = vmatprep.subr.mxu0 0.0
    %4073 = vmatpush1.msra.mxu0 0.0
    %4074 = vmatprep.subr.mxu0 0.0
    %4075 = vmatpush1.msra.mxu0 0.0
    %4076 = vmatprep.subr.mxu0 0.0
    %4077 = vmatpush1.msra.mxu0 0.0
    %4078 = vmatprep.subr.mxu0 0.0
    %4079 = vmatpush1.msra.mxu0 0.0
    %4080 = vmatprep.subr.mxu0 0.0
    %4081 = vmatpush1.msra.mxu0 0.0
    %4082 = vmatprep.subr.mxu0 0.0
    %4083 = vmatpush1.msra.mxu0 0.0
    %4084 = vmatprep.subr.mxu0 0.0
    %v4085 = vand.u32 %v3877, 4294901760
    %v4086 = vsub.f32 %v3877, %v4085
    %4087 = vmatpush1.msra.mxu0 %v4086
    %4088 = vmatprep.subr.mxu0 0.0
    %v4089 = vand.u32 %v3876, 4294901760
    %v4090 = vsub.f32 %v3876, %v4089
    %4091 = vmatpush1.msra.mxu0 %v4090
    %4092 = vmatprep.subr.mxu0 0.0
    %4093 = vmatpush2.msra.mxu0 0.0
    %4094 = vmatprep.subr.mxu0 0.0
    %4095 = vmatpush2.msra.mxu0 0.0
    %4096 = vmatprep.subr.mxu0 0.0
    %4097 = vmatpush2.msra.mxu0 0.0
    %4098 = vmatprep.subr.mxu0 0.0
    %4099 = vmatpush2.msra.mxu0 0.0
    %4100 = vmatprep.subr.mxu0 0.0
    %4101 = vmatpush2.msra.mxu0 0.0
    %4102 = vmatprep.subr.mxu0 0.0
    %4103 = vmatpush2.msra.mxu0 0.0
    %4104 = vmatprep.subr.mxu0 0.0
    %4105 = vmatpush2.msra.mxu0 0.0
    %4106 = vmatprep.subr.mxu0 0.0
    %4107 = vmatpush2.msra.mxu0 0.0
    %4108 = vmatprep.subr.mxu0 0.0
    %4109 = vmatpush2.msra.mxu0 0.0
    %4110 = vmatprep.subr.mxu0 0.0
    %4111 = vmatpush2.msra.mxu0 0.0
    %4112 = vmatprep.subr.mxu0 0.0
    %4113 = vmatpush2.msra.mxu0 0.0
    %4114 = vmatprep.subr.mxu0 0.0
    %4115 = vmatpush2.msra.mxu0 0.0
    %4116 = vmatprep.subr.mxu0 0.0
    %4117 = vmatpush2.msra.mxu0 0.0
    %4118 = vmatprep.subr.mxu0 0.0
    %4119 = vmatpush2.msra.mxu0 0.0
    %4120 = vmatprep.subr.mxu0 0.0
    %4121 = vmatpush2.msra.mxu0 0.0
    %4122 = vmatprep.subr.mxu0 0.0
    %4123 = vmatpush2.msra.mxu0 0.0
    %4124 = vmatprep.mubr.f32.mxu0 0.0
    %v4125 = vand.u32 %v3878, 4294901760
    %v4126 = vsub.f32 %v3878, %v4125
    %4127 = vmatmul.mubr.f32.gmra.mxu0 %v4126
    %v4128 = vpop.f32.mrf.mxu0
    %v4129 = vadd.f32 %v4047, %v4128
    %v4130 = vpop.f32.mrf.mxu0
    %4131 = vmatprep.mubr.f32.mxu0 0.0
    %v4132 = vand.u32 %v3880, 4294901760
    %v4133 = vsub.f32 %v3880, %v4132
    %4134 = vmatmul.mubr.f32.gmra.mxu0 %v4133
    %v4135 = vpop.f32.mrf.mxu0
    %v4136 = vadd.f32 %v4053, %v4135
    %v4137 = vpop.f32.mrf.mxu0
    %4138 = vdwg.mxu0
    %4139 = vmatprep.subr.mxu0 0.0
    %4140 = vmatpush1.msra.mxu0 0.0
    %4141 = vmatprep.subr.mxu0 0.0
    %4142 = vmatpush1.msra.mxu0 0.0
    %4143 = vmatprep.subr.mxu0 0.0
    %4144 = vmatpush1.msra.mxu0 0.0
    %4145 = vmatprep.subr.mxu0 0.0
    %4146 = vmatpush1.msra.mxu0 0.0
    %4147 = vmatprep.subr.mxu0 0.0
    %4148 = vmatpush1.msra.mxu0 0.0
    %4149 = vmatprep.subr.mxu0 0.0
    %4150 = vmatpush1.msra.mxu0 0.0
    %4151 = vmatprep.subr.mxu0 0.0
    %4152 = vmatpush1.msra.mxu0 0.0
    %4153 = vmatprep.subr.mxu0 0.0
    %4154 = vmatpush1.msra.mxu0 0.0
    %4155 = vmatprep.subr.mxu0 0.0
    %4156 = vmatpush1.msra.mxu0 0.0
    %4157 = vmatprep.subr.mxu0 0.0
    %4158 = vmatpush1.msra.mxu0 0.0
    %4159 = vmatprep.subr.mxu0 0.0
    %4160 = vmatpush1.msra.mxu0 0.0
    %4161 = vmatprep.subr.mxu0 0.0
    %4162 = vmatpush1.msra.mxu0 0.0
    %4163 = vmatprep.subr.mxu0 0.0
    %4164 = vmatpush1.msra.mxu0 0.0
    %4165 = vmatprep.subr.mxu0 0.0
    %4166 = vmatpush1.msra.mxu0 0.0
    %4167 = vmatprep.subr.mxu0 0.0
    %v4168 = vand.u32 %v3877, 4294901760
    %4169 = vmatpush1.msra.mxu0 %v4168
    %4170 = vmatprep.subr.mxu0 0.0
    %v4171 = vand.u32 %v3876, 4294901760
    %4172 = vmatpush1.msra.mxu0 %v4171
    %4173 = vmatprep.subr.mxu0 0.0
    %4174 = vmatpush2.msra.mxu0 0.0
    %4175 = vmatprep.subr.mxu0 0.0
    %4176 = vmatpush2.msra.mxu0 0.0
    %4177 = vmatprep.subr.mxu0 0.0
    %4178 = vmatpush2.msra.mxu0 0.0
    %4179 = vmatprep.subr.mxu0 0.0
    %4180 = vmatpush2.msra.mxu0 0.0
    %4181 = vmatprep.subr.mxu0 0.0
    %4182 = vmatpush2.msra.mxu0 0.0
    %4183 = vmatprep.subr.mxu0 0.0
    %4184 = vmatpush2.msra.mxu0 0.0
    %4185 = vmatprep.subr.mxu0 0.0
    %4186 = vmatpush2.msra.mxu0 0.0
    %4187 = vmatprep.subr.mxu0 0.0
    %4188 = vmatpush2.msra.mxu0 0.0
    %4189 = vmatprep.subr.mxu0 0.0
    %4190 = vmatpush2.msra.mxu0 0.0
    %4191 = vmatprep.subr.mxu0 0.0
    %4192 = vmatpush2.msra.mxu0 0.0
    %4193 = vmatprep.subr.mxu0 0.0
    %4194 = vmatpush2.msra.mxu0 0.0
    %4195 = vmatprep.subr.mxu0 0.0
    %4196 = vmatpush2.msra.mxu0 0.0
    %4197 = vmatprep.subr.mxu0 0.0
    %4198 = vmatpush2.msra.mxu0 0.0
    %4199 = vmatprep.subr.mxu0 0.0
    %4200 = vmatpush2.msra.mxu0 0.0
    %4201 = vmatprep.subr.mxu0 0.0
    %4202 = vmatpush2.msra.mxu0 0.0
    %4203 = vmatprep.subr.mxu0 0.0
    %4204 = vmatpush2.msra.mxu0 0.0
    %4205 = vmatprep.mubr.f32.mxu0 0.0
    %v4206 = vand.u32 %v3878, 4294901760
    %v4207 = vsub.f32 %v3878, %v4206
    %v4208 = vand.u32 %v4207, 4294901760
    %4209 = vmatmul.mubr.f32.gmra.mxu0 %v4208
    %v4210 = vpop.f32.mrf.mxu0
    %v4211 = vadd.f32 %v4129, %v4210
    %v4212 = vpop.f32.mrf.mxu0
    %4213 = vmatprep.mubr.f32.mxu0 0.0
    %v4214 = vand.u32 %v3880, 4294901760
    %v4215 = vsub.f32 %v3880, %v4214
    %v4216 = vand.u32 %v4215, 4294901760
    %4217 = vmatmul.mubr.f32.gmra.mxu0 %v4216
    %v4218 = vpop.f32.mrf.mxu0
    %v4219 = vadd.f32 %v4136, %v4218
    %v4220 = vpop.f32.mrf.mxu0
    %4221 = vdwg.mxu0
    %4222 = vmatprep.subr.mxu0 0.0
    %4223 = vmatpush1.msra.mxu0 0.0
    %4224 = vmatprep.subr.mxu0 0.0
    %4225 = vmatpush1.msra.mxu0 0.0
    %4226 = vmatprep.subr.mxu0 0.0
    %4227 = vmatpush1.msra.mxu0 0.0
    %4228 = vmatprep.subr.mxu0 0.0
    %4229 = vmatpush1.msra.mxu0 0.0
    %4230 = vmatprep.subr.mxu0 0.0
    %4231 = vmatpush1.msra.mxu0 0.0
    %4232 = vmatprep.subr.mxu0 0.0
    %4233 = vmatpush1.msra.mxu0 0.0
    %4234 = vmatprep.subr.mxu0 0.0
    %4235 = vmatpush1.msra.mxu0 0.0
    %4236 = vmatprep.subr.mxu0 0.0
    %4237 = vmatpush1.msra.mxu0 0.0
    %4238 = vmatprep.subr.mxu0 0.0
    %4239 = vmatpush1.msra.mxu0 0.0
    %4240 = vmatprep.subr.mxu0 0.0
    %4241 = vmatpush1.msra.mxu0 0.0
    %4242 = vmatprep.subr.mxu0 0.0
    %4243 = vmatpush1.msra.mxu0 0.0
    %4244 = vmatprep.subr.mxu0 0.0
    %4245 = vmatpush1.msra.mxu0 0.0
    %4246 = vmatprep.subr.mxu0 0.0
    %4247 = vmatpush1.msra.mxu0 0.0
    %4248 = vmatprep.subr.mxu0 0.0
    %4249 = vmatpush1.msra.mxu0 0.0
    %4250 = vmatprep.subr.mxu0 0.0
    %v4251 = vand.u32 %v3877, 4294901760
    %v4252 = vsub.f32 %v3877, %v4251
    %v4253 = vand.u32 %v4252, 4294901760
    %4254 = vmatpush1.msra.mxu0 %v4253
    %4255 = vmatprep.subr.mxu0 0.0
    %v4256 = vand.u32 %v3876, 4294901760
    %v4257 = vsub.f32 %v3876, %v4256
    %v4258 = vand.u32 %v4257, 4294901760
    %4259 = vmatpush1.msra.mxu0 %v4258
    %4260 = vmatprep.subr.mxu0 0.0
    %4261 = vmatpush2.msra.mxu0 0.0
    %4262 = vmatprep.subr.mxu0 0.0
    %4263 = vmatpush2.msra.mxu0 0.0
    %4264 = vmatprep.subr.mxu0 0.0
    %4265 = vmatpush2.msra.mxu0 0.0
    %4266 = vmatprep.subr.mxu0 0.0
    %4267 = vmatpush2.msra.mxu0 0.0
    %4268 = vmatprep.subr.mxu0 0.0
    %4269 = vmatpush2.msra.mxu0 0.0
    %4270 = vmatprep.subr.mxu0 0.0
    %4271 = vmatpush2.msra.mxu0 0.0
    %4272 = vmatprep.subr.mxu0 0.0
    %4273 = vmatpush2.msra.mxu0 0.0
    %4274 = vmatprep.subr.mxu0 0.0
    %4275 = vmatpush2.msra.mxu0 0.0
    %4276 = vmatprep.subr.mxu0 0.0
    %4277 = vmatpush2.msra.mxu0 0.0
    %4278 = vmatprep.subr.mxu0 0.0
    %4279 = vmatpush2.msra.mxu0 0.0
    %4280 = vmatprep.subr.mxu0 0.0
    %4281 = vmatpush2.msra.mxu0 0.0
    %4282 = vmatprep.subr.mxu0 0.0
    %4283 = vmatpush2.msra.mxu0 0.0
    %4284 = vmatprep.subr.mxu0 0.0
    %4285 = vmatpush2.msra.mxu0 0.0
    %4286 = vmatprep.subr.mxu0 0.0
    %4287 = vmatpush2.msra.mxu0 0.0
    %4288 = vmatprep.subr.mxu0 0.0
    %4289 = vmatpush2.msra.mxu0 0.0
    %4290 = vmatprep.subr.mxu0 0.0
    %4291 = vmatpush2.msra.mxu0 0.0
    %4292 = vmatprep.mubr.f32.mxu0 0.0
    %v4293 = vand.u32 %v3878, 4294901760
    %4294 = vmatmul.mubr.f32.gmra.mxu0 %v4293
    %v4295 = vpop.f32.mrf.mxu0
    %v4296 = vadd.f32 %v4211, %v4295
    %v4297 = vpop.f32.mrf.mxu0
    %4298 = vmatprep.mubr.f32.mxu0 0.0
    %v4299 = vand.u32 %v3880, 4294901760
    %4300 = vmatmul.mubr.f32.gmra.mxu0 %v4299
    %v4301 = vpop.f32.mrf.mxu0
    %v4302 = vadd.f32 %v4219, %v4301
    %v4303 = vpop.f32.mrf.mxu0
    %4304 = vdwg.mxu0
    %4305 = vmatprep.subr.mxu0 0.0
    %4306 = vmatpush1.msra.mxu0 0.0
    %4307 = vmatprep.subr.mxu0 0.0
    %4308 = vmatpush1.msra.mxu0 0.0
    %4309 = vmatprep.subr.mxu0 0.0
    %4310 = vmatpush1.msra.mxu0 0.0
    %4311 = vmatprep.subr.mxu0 0.0
    %4312 = vmatpush1.msra.mxu0 0.0
    %4313 = vmatprep.subr.mxu0 0.0
    %4314 = vmatpush1.msra.mxu0 0.0
    %4315 = vmatprep.subr.mxu0 0.0
    %4316 = vmatpush1.msra.mxu0 0.0
    %4317 = vmatprep.subr.mxu0 0.0
    %4318 = vmatpush1.msra.mxu0 0.0
    %4319 = vmatprep.subr.mxu0 0.0
    %4320 = vmatpush1.msra.mxu0 0.0
    %4321 = vmatprep.subr.mxu0 0.0
    %4322 = vmatpush1.msra.mxu0 0.0
    %4323 = vmatprep.subr.mxu0 0.0
    %4324 = vmatpush1.msra.mxu0 0.0
    %4325 = vmatprep.subr.mxu0 0.0
    %4326 = vmatpush1.msra.mxu0 0.0
    %4327 = vmatprep.subr.mxu0 0.0
    %4328 = vmatpush1.msra.mxu0 0.0
    %4329 = vmatprep.subr.mxu0 0.0
    %4330 = vmatpush1.msra.mxu0 0.0
    %4331 = vmatprep.subr.mxu0 0.0
    %4332 = vmatpush1.msra.mxu0 0.0
    %4333 = vmatprep.subr.mxu0 0.0
    %v4334 = vand.u32 %v3877, 4294901760
    %4335 = vmatpush1.msra.mxu0 %v4334
    %4336 = vmatprep.subr.mxu0 0.0
    %v4337 = vand.u32 %v3876, 4294901760
    %4338 = vmatpush1.msra.mxu0 %v4337
    %4339 = vmatprep.subr.mxu0 0.0
    %4340 = vmatpush2.msra.mxu0 0.0
    %4341 = vmatprep.subr.mxu0 0.0
    %4342 = vmatpush2.msra.mxu0 0.0
    %4343 = vmatprep.subr.mxu0 0.0
    %4344 = vmatpush2.msra.mxu0 0.0
    %4345 = vmatprep.subr.mxu0 0.0
    %4346 = vmatpush2.msra.mxu0 0.0
    %4347 = vmatprep.subr.mxu0 0.0
    %4348 = vmatpush2.msra.mxu0 0.0
    %4349 = vmatprep.subr.mxu0 0.0
    %4350 = vmatpush2.msra.mxu0 0.0
    %4351 = vmatprep.subr.mxu0 0.0
    %4352 = vmatpush2.msra.mxu0 0.0
    %4353 = vmatprep.subr.mxu0 0.0
    %4354 = vmatpush2.msra.mxu0 0.0
    %4355 = vmatprep.subr.mxu0 0.0
    %4356 = vmatpush2.msra.mxu0 0.0
    %4357 = vmatprep.subr.mxu0 0.0
    %4358 = vmatpush2.msra.mxu0 0.0
    %4359 = vmatprep.subr.mxu0 0.0
    %4360 = vmatpush2.msra.mxu0 0.0
    %4361 = vmatprep.subr.mxu0 0.0
    %4362 = vmatpush2.msra.mxu0 0.0
    %4363 = vmatprep.subr.mxu0 0.0
    %4364 = vmatpush2.msra.mxu0 0.0
    %4365 = vmatprep.subr.mxu0 0.0
    %4366 = vmatpush2.msra.mxu0 0.0
    %4367 = vmatprep.subr.mxu0 0.0
    %4368 = vmatpush2.msra.mxu0 0.0
    %4369 = vmatprep.subr.mxu0 0.0
    %4370 = vmatpush2.msra.mxu0 0.0
    %4371 = vmatprep.mubr.f32.mxu0 0.0
    %v4372 = vand.u32 %v3878, 4294901760
    %4373 = vmatmul.mubr.f32.gmra.mxu0 %v4372
    %v4374 = vpop.f32.mrf.mxu0
    %v4375 = vadd.f32 %v4296, %v4374
    %v4376 = vpop.f32.mrf.mxu0
    %4377 = vmatprep.mubr.f32.mxu0 0.0
    %v4378 = vand.u32 %v3880, 4294901760
    %4379 = vmatmul.mubr.f32.gmra.mxu0 %v4378
    %v4380 = vpop.f32.mrf.mxu0
    %v4381 = vadd.f32 %v4302, %v4380
    %v4382 = vpop.f32.mrf.mxu0
    %4383 = vdwg.mxu0
    %v4385 = vsel %vm1119, %v3874, 0
    %v4388 = vsel %vm1119, %v3875, 0
    %4390 = vmatprep.subr.mxu0 0.0
    %4391 = vmatpush1.msra.mxu0 0.0
    %4392 = vmatprep.subr.mxu0 0.0
    %4393 = vmatpush1.msra.mxu0 0.0
    %4394 = vmatprep.subr.mxu0 0.0
    %4395 = vmatpush1.msra.mxu0 0.0
    %4396 = vmatprep.subr.mxu0 0.0
    %4397 = vmatpush1.msra.mxu0 0.0
    %4398 = vmatprep.subr.mxu0 0.0
    %4399 = vmatpush1.msra.mxu0 0.0
    %4400 = vmatprep.subr.mxu0 0.0
    %4401 = vmatpush1.msra.mxu0 0.0
    %4402 = vmatprep.subr.mxu0 0.0
    %4403 = vmatpush1.msra.mxu0 0.0
    %4404 = vmatprep.subr.mxu0 0.0
    %4405 = vmatpush1.msra.mxu0 0.0
    %4406 = vmatprep.subr.mxu0 0.0
    %4407 = vmatpush1.msra.mxu0 0.0
    %4408 = vmatprep.subr.mxu0 0.0
    %4409 = vmatpush1.msra.mxu0 0.0
    %4410 = vmatprep.subr.mxu0 0.0
    %4411 = vmatpush1.msra.mxu0 0.0
    %4412 = vmatprep.subr.mxu0 0.0
    %4413 = vmatpush1.msra.mxu0 0.0
    %4414 = vmatprep.subr.mxu0 0.0
    %4415 = vmatpush1.msra.mxu0 0.0
    %4416 = vmatprep.subr.mxu0 0.0
    %4417 = vmatpush1.msra.mxu0 0.0
    %4418 = vmatprep.subr.mxu0 0.0
    %v4419 = vand.u32 %v3877, 4294901760
    %4420 = vmatpush1.msra.mxu0 %v4419
    %4421 = vmatprep.subr.mxu0 0.0
    %v4422 = vand.u32 %v3876, 4294901760
    %4423 = vmatpush1.msra.mxu0 %v4422
    %4424 = vmatprep.subr.mxu0 0.0
    %4425 = vmatpush2.msra.mxu0 0.0
    %4426 = vmatprep.subr.mxu0 0.0
    %4427 = vmatpush2.msra.mxu0 0.0
    %4428 = vmatprep.subr.mxu0 0.0
    %4429 = vmatpush2.msra.mxu0 0.0
    %4430 = vmatprep.subr.mxu0 0.0
    %4431 = vmatpush2.msra.mxu0 0.0
    %4432 = vmatprep.subr.mxu0 0.0
    %4433 = vmatpush2.msra.mxu0 0.0
    %4434 = vmatprep.subr.mxu0 0.0
    %4435 = vmatpush2.msra.mxu0 0.0
    %4436 = vmatprep.subr.mxu0 0.0
    %4437 = vmatpush2.msra.mxu0 0.0
    %4438 = vmatprep.subr.mxu0 0.0
    %4439 = vmatpush2.msra.mxu0 0.0
    %4440 = vmatprep.subr.mxu0 0.0
    %4441 = vmatpush2.msra.mxu0 0.0
    %4442 = vmatprep.subr.mxu0 0.0
    %4443 = vmatpush2.msra.mxu0 0.0
    %4444 = vmatprep.subr.mxu0 0.0
    %4445 = vmatpush2.msra.mxu0 0.0
    %4446 = vmatprep.subr.mxu0 0.0
    %4447 = vmatpush2.msra.mxu0 0.0
    %4448 = vmatprep.subr.mxu0 0.0
    %4449 = vmatpush2.msra.mxu0 0.0
    %4450 = vmatprep.subr.mxu0 0.0
    %4451 = vmatpush2.msra.mxu0 0.0
    %4452 = vmatprep.subr.mxu0 0.0
    %4453 = vmatpush2.msra.mxu0 0.0
    %4454 = vmatprep.subr.mxu0 0.0
    %4455 = vmatpush2.msra.mxu0 0.0
    %4456 = vmatprep.mubr.f32.mxu0 0.0
    %v4457 = vand.u32 %v4385, 4294901760
    %v4458 = vsub.f32 %v4385, %v4457
    %v4459 = vand.u32 %v4458, 4294901760
    %v4460 = vsub.f32 %v4458, %v4459
    %v4461 = vand.u32 %v4460, 4294901760
    %4462 = vmatmul.mubr.f32.gmra.mxu0 %v4461
    %v4463 = vpop.f32.mrf.mxu0
    %v4464 = vadd.f32 0.0, %v4463
    %v4465 = vpop.f32.mrf.mxu0
    %4466 = vmatprep.mubr.f32.mxu0 0.0
    %v4467 = vand.u32 %v4388, 4294901760
    %v4468 = vsub.f32 %v4388, %v4467
    %v4469 = vand.u32 %v4468, 4294901760
    %v4470 = vsub.f32 %v4468, %v4469
    %v4471 = vand.u32 %v4470, 4294901760
    %4472 = vmatmul.mubr.f32.gmra.mxu0 %v4471
    %v4473 = vpop.f32.mrf.mxu0
    %v4474 = vadd.f32 0.0, %v4473
    %v4475 = vpop.f32.mrf.mxu0
    %4476 = vdwg.mxu0
    %4477 = vmatprep.subr.mxu0 0.0
    %4478 = vmatpush1.msra.mxu0 0.0
    %4479 = vmatprep.subr.mxu0 0.0
    %4480 = vmatpush1.msra.mxu0 0.0
    %4481 = vmatprep.subr.mxu0 0.0
    %4482 = vmatpush1.msra.mxu0 0.0
    %4483 = vmatprep.subr.mxu0 0.0
    %4484 = vmatpush1.msra.mxu0 0.0
    %4485 = vmatprep.subr.mxu0 0.0
    %4486 = vmatpush1.msra.mxu0 0.0
    %4487 = vmatprep.subr.mxu0 0.0
    %4488 = vmatpush1.msra.mxu0 0.0
    %4489 = vmatprep.subr.mxu0 0.0
    %4490 = vmatpush1.msra.mxu0 0.0
    %4491 = vmatprep.subr.mxu0 0.0
    %4492 = vmatpush1.msra.mxu0 0.0
    %4493 = vmatprep.subr.mxu0 0.0
    %4494 = vmatpush1.msra.mxu0 0.0
    %4495 = vmatprep.subr.mxu0 0.0
    %4496 = vmatpush1.msra.mxu0 0.0
    %4497 = vmatprep.subr.mxu0 0.0
    %4498 = vmatpush1.msra.mxu0 0.0
    %4499 = vmatprep.subr.mxu0 0.0
    %4500 = vmatpush1.msra.mxu0 0.0
    %4501 = vmatprep.subr.mxu0 0.0
    %4502 = vmatpush1.msra.mxu0 0.0
    %4503 = vmatprep.subr.mxu0 0.0
    %4504 = vmatpush1.msra.mxu0 0.0
    %4505 = vmatprep.subr.mxu0 0.0
    %v4506 = vand.u32 %v3877, 4294901760
    %v4507 = vsub.f32 %v3877, %v4506
    %v4508 = vand.u32 %v4507, 4294901760
    %v4509 = vsub.f32 %v4507, %v4508
    %v4510 = vand.u32 %v4509, 4294901760
    %4511 = vmatpush1.msra.mxu0 %v4510
    %4512 = vmatprep.subr.mxu0 0.0
    %v4513 = vand.u32 %v3876, 4294901760
    %v4514 = vsub.f32 %v3876, %v4513
    %v4515 = vand.u32 %v4514, 4294901760
    %v4516 = vsub.f32 %v4514, %v4515
    %v4517 = vand.u32 %v4516, 4294901760
    %4518 = vmatpush1.msra.mxu0 %v4517
    %4519 = vmatprep.subr.mxu0 0.0
    %4520 = vmatpush2.msra.mxu0 0.0
    %4521 = vmatprep.subr.mxu0 0.0
    %4522 = vmatpush2.msra.mxu0 0.0
    %4523 = vmatprep.subr.mxu0 0.0
    %4524 = vmatpush2.msra.mxu0 0.0
    %4525 = vmatprep.subr.mxu0 0.0
    %4526 = vmatpush2.msra.mxu0 0.0
    %4527 = vmatprep.subr.mxu0 0.0
    %4528 = vmatpush2.msra.mxu0 0.0
    %4529 = vmatprep.subr.mxu0 0.0
    %4530 = vmatpush2.msra.mxu0 0.0
    %4531 = vmatprep.subr.mxu0 0.0
    %4532 = vmatpush2.msra.mxu0 0.0
    %4533 = vmatprep.subr.mxu0 0.0
    %4534 = vmatpush2.msra.mxu0 0.0
    %4535 = vmatprep.subr.mxu0 0.0
    %4536 = vmatpush2.msra.mxu0 0.0
    %4537 = vmatprep.subr.mxu0 0.0
    %4538 = vmatpush2.msra.mxu0 0.0
    %4539 = vmatprep.subr.mxu0 0.0
    %4540 = vmatpush2.msra.mxu0 0.0
    %4541 = vmatprep.subr.mxu0 0.0
    %4542 = vmatpush2.msra.mxu0 0.0
    %4543 = vmatprep.subr.mxu0 0.0
    %4544 = vmatpush2.msra.mxu0 0.0
    %4545 = vmatprep.subr.mxu0 0.0
    %4546 = vmatpush2.msra.mxu0 0.0
    %4547 = vmatprep.subr.mxu0 0.0
    %4548 = vmatpush2.msra.mxu0 0.0
    %4549 = vmatprep.subr.mxu0 0.0
    %4550 = vmatpush2.msra.mxu0 0.0
    %4551 = vmatprep.mubr.f32.mxu0 0.0
    %v4552 = vand.u32 %v4385, 4294901760
    %4553 = vmatmul.mubr.f32.gmra.mxu0 %v4552
    %v4554 = vpop.f32.mrf.mxu0
    %v4555 = vadd.f32 %v4464, %v4554
    %v4556 = vpop.f32.mrf.mxu0
    %4557 = vmatprep.mubr.f32.mxu0 0.0
    %v4558 = vand.u32 %v4388, 4294901760
    %4559 = vmatmul.mubr.f32.gmra.mxu0 %v4558
    %v4560 = vpop.f32.mrf.mxu0
    %v4561 = vadd.f32 %v4474, %v4560
    %v4562 = vpop.f32.mrf.mxu0
    %4563 = vdwg.mxu0
    %4564 = vmatprep.subr.mxu0 0.0
    %4565 = vmatpush1.msra.mxu0 0.0
    %4566 = vmatprep.subr.mxu0 0.0
    %4567 = vmatpush1.msra.mxu0 0.0
    %4568 = vmatprep.subr.mxu0 0.0
    %4569 = vmatpush1.msra.mxu0 0.0
    %4570 = vmatprep.subr.mxu0 0.0
    %4571 = vmatpush1.msra.mxu0 0.0
    %4572 = vmatprep.subr.mxu0 0.0
    %4573 = vmatpush1.msra.mxu0 0.0
    %4574 = vmatprep.subr.mxu0 0.0
    %4575 = vmatpush1.msra.mxu0 0.0
    %4576 = vmatprep.subr.mxu0 0.0
    %4577 = vmatpush1.msra.mxu0 0.0
    %4578 = vmatprep.subr.mxu0 0.0
    %4579 = vmatpush1.msra.mxu0 0.0
    %4580 = vmatprep.subr.mxu0 0.0
    %4581 = vmatpush1.msra.mxu0 0.0
    %4582 = vmatprep.subr.mxu0 0.0
    %4583 = vmatpush1.msra.mxu0 0.0
    %4584 = vmatprep.subr.mxu0 0.0
    %4585 = vmatpush1.msra.mxu0 0.0
    %4586 = vmatprep.subr.mxu0 0.0
    %4587 = vmatpush1.msra.mxu0 0.0
    %4588 = vmatprep.subr.mxu0 0.0
    %4589 = vmatpush1.msra.mxu0 0.0
    %4590 = vmatprep.subr.mxu0 0.0
    %4591 = vmatpush1.msra.mxu0 0.0
    %4592 = vmatprep.subr.mxu0 0.0
    %v4593 = vand.u32 %v3877, 4294901760
    %v4594 = vsub.f32 %v3877, %v4593
    %4595 = vmatpush1.msra.mxu0 %v4594
    %4596 = vmatprep.subr.mxu0 0.0
    %v4597 = vand.u32 %v3876, 4294901760
    %v4598 = vsub.f32 %v3876, %v4597
    %4599 = vmatpush1.msra.mxu0 %v4598
    %4600 = vmatprep.subr.mxu0 0.0
    %4601 = vmatpush2.msra.mxu0 0.0
    %4602 = vmatprep.subr.mxu0 0.0
    %4603 = vmatpush2.msra.mxu0 0.0
    %4604 = vmatprep.subr.mxu0 0.0
    %4605 = vmatpush2.msra.mxu0 0.0
    %4606 = vmatprep.subr.mxu0 0.0
    %4607 = vmatpush2.msra.mxu0 0.0
    %4608 = vmatprep.subr.mxu0 0.0
    %4609 = vmatpush2.msra.mxu0 0.0
    %4610 = vmatprep.subr.mxu0 0.0
    %4611 = vmatpush2.msra.mxu0 0.0
    %4612 = vmatprep.subr.mxu0 0.0
    %4613 = vmatpush2.msra.mxu0 0.0
    %4614 = vmatprep.subr.mxu0 0.0
    %4615 = vmatpush2.msra.mxu0 0.0
    %4616 = vmatprep.subr.mxu0 0.0
    %4617 = vmatpush2.msra.mxu0 0.0
    %4618 = vmatprep.subr.mxu0 0.0
    %4619 = vmatpush2.msra.mxu0 0.0
    %4620 = vmatprep.subr.mxu0 0.0
    %4621 = vmatpush2.msra.mxu0 0.0
    %4622 = vmatprep.subr.mxu0 0.0
    %4623 = vmatpush2.msra.mxu0 0.0
    %4624 = vmatprep.subr.mxu0 0.0
    %4625 = vmatpush2.msra.mxu0 0.0
    %4626 = vmatprep.subr.mxu0 0.0
    %4627 = vmatpush2.msra.mxu0 0.0
    %4628 = vmatprep.subr.mxu0 0.0
    %4629 = vmatpush2.msra.mxu0 0.0
    %4630 = vmatprep.subr.mxu0 0.0
    %4631 = vmatpush2.msra.mxu0 0.0
    %4632 = vmatprep.mubr.f32.mxu0 0.0
    %v4633 = vand.u32 %v4385, 4294901760
    %v4634 = vsub.f32 %v4385, %v4633
    %4635 = vmatmul.mubr.f32.gmra.mxu0 %v4634
    %v4636 = vpop.f32.mrf.mxu0
    %v4637 = vadd.f32 %v4555, %v4636
    %v4638 = vpop.f32.mrf.mxu0
    %4639 = vmatprep.mubr.f32.mxu0 0.0
    %v4640 = vand.u32 %v4388, 4294901760
    %v4641 = vsub.f32 %v4388, %v4640
    %4642 = vmatmul.mubr.f32.gmra.mxu0 %v4641
    %v4643 = vpop.f32.mrf.mxu0
    %v4644 = vadd.f32 %v4561, %v4643
    %v4645 = vpop.f32.mrf.mxu0
    %4646 = vdwg.mxu0
    %4647 = vmatprep.subr.mxu0 0.0
    %4648 = vmatpush1.msra.mxu0 0.0
    %4649 = vmatprep.subr.mxu0 0.0
    %4650 = vmatpush1.msra.mxu0 0.0
    %4651 = vmatprep.subr.mxu0 0.0
    %4652 = vmatpush1.msra.mxu0 0.0
    %4653 = vmatprep.subr.mxu0 0.0
    %4654 = vmatpush1.msra.mxu0 0.0
    %4655 = vmatprep.subr.mxu0 0.0
    %4656 = vmatpush1.msra.mxu0 0.0
    %4657 = vmatprep.subr.mxu0 0.0
    %4658 = vmatpush1.msra.mxu0 0.0
    %4659 = vmatprep.subr.mxu0 0.0
    %4660 = vmatpush1.msra.mxu0 0.0
    %4661 = vmatprep.subr.mxu0 0.0
    %4662 = vmatpush1.msra.mxu0 0.0
    %4663 = vmatprep.subr.mxu0 0.0
    %4664 = vmatpush1.msra.mxu0 0.0
    %4665 = vmatprep.subr.mxu0 0.0
    %4666 = vmatpush1.msra.mxu0 0.0
    %4667 = vmatprep.subr.mxu0 0.0
    %4668 = vmatpush1.msra.mxu0 0.0
    %4669 = vmatprep.subr.mxu0 0.0
    %4670 = vmatpush1.msra.mxu0 0.0
    %4671 = vmatprep.subr.mxu0 0.0
    %4672 = vmatpush1.msra.mxu0 0.0
    %4673 = vmatprep.subr.mxu0 0.0
    %4674 = vmatpush1.msra.mxu0 0.0
    %4675 = vmatprep.subr.mxu0 0.0
    %v4676 = vand.u32 %v3877, 4294901760
    %4677 = vmatpush1.msra.mxu0 %v4676
    %4678 = vmatprep.subr.mxu0 0.0
    %v4679 = vand.u32 %v3876, 4294901760
    %4680 = vmatpush1.msra.mxu0 %v4679
    %4681 = vmatprep.subr.mxu0 0.0
    %4682 = vmatpush2.msra.mxu0 0.0
    %4683 = vmatprep.subr.mxu0 0.0
    %4684 = vmatpush2.msra.mxu0 0.0
    %4685 = vmatprep.subr.mxu0 0.0
    %4686 = vmatpush2.msra.mxu0 0.0
    %4687 = vmatprep.subr.mxu0 0.0
    %4688 = vmatpush2.msra.mxu0 0.0
    %4689 = vmatprep.subr.mxu0 0.0
    %4690 = vmatpush2.msra.mxu0 0.0
    %4691 = vmatprep.subr.mxu0 0.0
    %4692 = vmatpush2.msra.mxu0 0.0
    %4693 = vmatprep.subr.mxu0 0.0
    %4694 = vmatpush2.msra.mxu0 0.0
    %4695 = vmatprep.subr.mxu0 0.0
    %4696 = vmatpush2.msra.mxu0 0.0
    %4697 = vmatprep.subr.mxu0 0.0
    %4698 = vmatpush2.msra.mxu0 0.0
    %4699 = vmatprep.subr.mxu0 0.0
    %4700 = vmatpush2.msra.mxu0 0.0
    %4701 = vmatprep.subr.mxu0 0.0
    %4702 = vmatpush2.msra.mxu0 0.0
    %4703 = vmatprep.subr.mxu0 0.0
    %4704 = vmatpush2.msra.mxu0 0.0
    %4705 = vmatprep.subr.mxu0 0.0
    %4706 = vmatpush2.msra.mxu0 0.0
    %4707 = vmatprep.subr.mxu0 0.0
    %4708 = vmatpush2.msra.mxu0 0.0
    %4709 = vmatprep.subr.mxu0 0.0
    %4710 = vmatpush2.msra.mxu0 0.0
    %4711 = vmatprep.subr.mxu0 0.0
    %4712 = vmatpush2.msra.mxu0 0.0
    %4713 = vmatprep.mubr.f32.mxu0 0.0
    %v4714 = vand.u32 %v4385, 4294901760
    %v4715 = vsub.f32 %v4385, %v4714
    %v4716 = vand.u32 %v4715, 4294901760
    %4717 = vmatmul.mubr.f32.gmra.mxu0 %v4716
    %v4718 = vpop.f32.mrf.mxu0
    %v4719 = vadd.f32 %v4637, %v4718
    %v4720 = vpop.f32.mrf.mxu0
    %4721 = vmatprep.mubr.f32.mxu0 0.0
    %v4722 = vand.u32 %v4388, 4294901760
    %v4723 = vsub.f32 %v4388, %v4722
    %v4724 = vand.u32 %v4723, 4294901760
    %4725 = vmatmul.mubr.f32.gmra.mxu0 %v4724
    %v4726 = vpop.f32.mrf.mxu0
    %v4727 = vadd.f32 %v4644, %v4726
    %v4728 = vpop.f32.mrf.mxu0
    %4729 = vdwg.mxu0
    %4730 = vmatprep.subr.mxu0 0.0
    %4731 = vmatpush1.msra.mxu0 0.0
    %4732 = vmatprep.subr.mxu0 0.0
    %4733 = vmatpush1.msra.mxu0 0.0
    %4734 = vmatprep.subr.mxu0 0.0
    %4735 = vmatpush1.msra.mxu0 0.0
    %4736 = vmatprep.subr.mxu0 0.0
    %4737 = vmatpush1.msra.mxu0 0.0
    %4738 = vmatprep.subr.mxu0 0.0
    %4739 = vmatpush1.msra.mxu0 0.0
    %4740 = vmatprep.subr.mxu0 0.0
    %4741 = vmatpush1.msra.mxu0 0.0
    %4742 = vmatprep.subr.mxu0 0.0
    %4743 = vmatpush1.msra.mxu0 0.0
    %4744 = vmatprep.subr.mxu0 0.0
    %4745 = vmatpush1.msra.mxu0 0.0
    %4746 = vmatprep.subr.mxu0 0.0
    %4747 = vmatpush1.msra.mxu0 0.0
    %4748 = vmatprep.subr.mxu0 0.0
    %4749 = vmatpush1.msra.mxu0 0.0
    %4750 = vmatprep.subr.mxu0 0.0
    %4751 = vmatpush1.msra.mxu0 0.0
    %4752 = vmatprep.subr.mxu0 0.0
    %4753 = vmatpush1.msra.mxu0 0.0
    %4754 = vmatprep.subr.mxu0 0.0
    %4755 = vmatpush1.msra.mxu0 0.0
    %4756 = vmatprep.subr.mxu0 0.0
    %4757 = vmatpush1.msra.mxu0 0.0
    %4758 = vmatprep.subr.mxu0 0.0
    %v4759 = vand.u32 %v3877, 4294901760
    %v4760 = vsub.f32 %v3877, %v4759
    %v4761 = vand.u32 %v4760, 4294901760
    %4762 = vmatpush1.msra.mxu0 %v4761
    %4763 = vmatprep.subr.mxu0 0.0
    %v4764 = vand.u32 %v3876, 4294901760
    %v4765 = vsub.f32 %v3876, %v4764
    %v4766 = vand.u32 %v4765, 4294901760
    %4767 = vmatpush1.msra.mxu0 %v4766
    %4768 = vmatprep.subr.mxu0 0.0
    %4769 = vmatpush2.msra.mxu0 0.0
    %4770 = vmatprep.subr.mxu0 0.0
    %4771 = vmatpush2.msra.mxu0 0.0
    %4772 = vmatprep.subr.mxu0 0.0
    %4773 = vmatpush2.msra.mxu0 0.0
    %4774 = vmatprep.subr.mxu0 0.0
    %4775 = vmatpush2.msra.mxu0 0.0
    %4776 = vmatprep.subr.mxu0 0.0
    %4777 = vmatpush2.msra.mxu0 0.0
    %4778 = vmatprep.subr.mxu0 0.0
    %4779 = vmatpush2.msra.mxu0 0.0
    %4780 = vmatprep.subr.mxu0 0.0
    %4781 = vmatpush2.msra.mxu0 0.0
    %4782 = vmatprep.subr.mxu0 0.0
    %4783 = vmatpush2.msra.mxu0 0.0
    %4784 = vmatprep.subr.mxu0 0.0
    %4785 = vmatpush2.msra.mxu0 0.0
    %4786 = vmatprep.subr.mxu0 0.0
    %4787 = vmatpush2.msra.mxu0 0.0
    %4788 = vmatprep.subr.mxu0 0.0
    %4789 = vmatpush2.msra.mxu0 0.0
    %4790 = vmatprep.subr.mxu0 0.0
    %4791 = vmatpush2.msra.mxu0 0.0
    %4792 = vmatprep.subr.mxu0 0.0
    %4793 = vmatpush2.msra.mxu0 0.0
    %4794 = vmatprep.subr.mxu0 0.0
    %4795 = vmatpush2.msra.mxu0 0.0
    %4796 = vmatprep.subr.mxu0 0.0
    %4797 = vmatpush2.msra.mxu0 0.0
    %4798 = vmatprep.subr.mxu0 0.0
    %4799 = vmatpush2.msra.mxu0 0.0
    %4800 = vmatprep.mubr.f32.mxu0 0.0
    %v4801 = vand.u32 %v4385, 4294901760
    %4802 = vmatmul.mubr.f32.gmra.mxu0 %v4801
    %v4803 = vpop.f32.mrf.mxu0
    %v4804 = vadd.f32 %v4719, %v4803
    %v4805 = vpop.f32.mrf.mxu0
    %4806 = vmatprep.mubr.f32.mxu0 0.0
    %v4807 = vand.u32 %v4388, 4294901760
    %4808 = vmatmul.mubr.f32.gmra.mxu0 %v4807
    %v4809 = vpop.f32.mrf.mxu0
    %v4810 = vadd.f32 %v4727, %v4809
    %v4811 = vpop.f32.mrf.mxu0
    %4812 = vdwg.mxu0
    %4813 = vmatprep.subr.mxu0 0.0
    %4814 = vmatpush1.msra.mxu0 0.0
    %4815 = vmatprep.subr.mxu0 0.0
    %4816 = vmatpush1.msra.mxu0 0.0
    %4817 = vmatprep.subr.mxu0 0.0
    %4818 = vmatpush1.msra.mxu0 0.0
    %4819 = vmatprep.subr.mxu0 0.0
    %4820 = vmatpush1.msra.mxu0 0.0
    %4821 = vmatprep.subr.mxu0 0.0
    %4822 = vmatpush1.msra.mxu0 0.0
    %4823 = vmatprep.subr.mxu0 0.0
    %4824 = vmatpush1.msra.mxu0 0.0
    %4825 = vmatprep.subr.mxu0 0.0
    %4826 = vmatpush1.msra.mxu0 0.0
    %4827 = vmatprep.subr.mxu0 0.0
    %4828 = vmatpush1.msra.mxu0 0.0
    %4829 = vmatprep.subr.mxu0 0.0
    %4830 = vmatpush1.msra.mxu0 0.0
    %4831 = vmatprep.subr.mxu0 0.0
    %4832 = vmatpush1.msra.mxu0 0.0
    %4833 = vmatprep.subr.mxu0 0.0
    %4834 = vmatpush1.msra.mxu0 0.0
    %4835 = vmatprep.subr.mxu0 0.0
    %4836 = vmatpush1.msra.mxu0 0.0
    %4837 = vmatprep.subr.mxu0 0.0
    %4838 = vmatpush1.msra.mxu0 0.0
    %4839 = vmatprep.subr.mxu0 0.0
    %4840 = vmatpush1.msra.mxu0 0.0
    %4841 = vmatprep.subr.mxu0 0.0
    %v4842 = vand.u32 %v3877, 4294901760
    %4843 = vmatpush1.msra.mxu0 %v4842
    %4844 = vmatprep.subr.mxu0 0.0
    %v4845 = vand.u32 %v3876, 4294901760
    %4846 = vmatpush1.msra.mxu0 %v4845
    %4847 = vmatprep.subr.mxu0 0.0
    %4848 = vmatpush2.msra.mxu0 0.0
    %4849 = vmatprep.subr.mxu0 0.0
    %4850 = vmatpush2.msra.mxu0 0.0
    %4851 = vmatprep.subr.mxu0 0.0
    %4852 = vmatpush2.msra.mxu0 0.0
    %4853 = vmatprep.subr.mxu0 0.0
    %4854 = vmatpush2.msra.mxu0 0.0
    %4855 = vmatprep.subr.mxu0 0.0
    %4856 = vmatpush2.msra.mxu0 0.0
    %4857 = vmatprep.subr.mxu0 0.0
    %4858 = vmatpush2.msra.mxu0 0.0
    %4859 = vmatprep.subr.mxu0 0.0
    %4860 = vmatpush2.msra.mxu0 0.0
    %4861 = vmatprep.subr.mxu0 0.0
    %4862 = vmatpush2.msra.mxu0 0.0
    %4863 = vmatprep.subr.mxu0 0.0
    %4864 = vmatpush2.msra.mxu0 0.0
    %4865 = vmatprep.subr.mxu0 0.0
    %4866 = vmatpush2.msra.mxu0 0.0
    %4867 = vmatprep.subr.mxu0 0.0
    %4868 = vmatpush2.msra.mxu0 0.0
    %4869 = vmatprep.subr.mxu0 0.0
    %4870 = vmatpush2.msra.mxu0 0.0
    %4871 = vmatprep.subr.mxu0 0.0
    %4872 = vmatpush2.msra.mxu0 0.0
    %4873 = vmatprep.subr.mxu0 0.0
    %4874 = vmatpush2.msra.mxu0 0.0
    %4875 = vmatprep.subr.mxu0 0.0
    %4876 = vmatpush2.msra.mxu0 0.0
    %4877 = vmatprep.subr.mxu0 0.0
    %4878 = vmatpush2.msra.mxu0 0.0
    %4879 = vmatprep.mubr.f32.mxu0 0.0
    %v4880 = vand.u32 %v4385, 4294901760
    %4881 = vmatmul.mubr.f32.gmra.mxu0 %v4880
    %v4882 = vpop.f32.mrf.mxu0
    %v4883 = vadd.f32 %v4804, %v4882
    %v4884 = vpop.f32.mrf.mxu0
    %4885 = vmatprep.mubr.f32.mxu0 0.0
    %v4886 = vand.u32 %v4388, 4294901760
    %4887 = vmatmul.mubr.f32.gmra.mxu0 %v4886
    %v4888 = vpop.f32.mrf.mxu0
    %v4889 = vadd.f32 %v4810, %v4888
    %v4890 = vpop.f32.mrf.mxu0
    %4891 = vdwg.mxu0
    %v4908 = vrot.slane %v2609, 7
    %v4909 = vsel %vm1096, %v4908, %v2520
    %v4910 = vrot.slane %v2698, 6
    %v4911 = vsel %vm1098, %v4910, %v4909
    %v4912 = vrot.slane %v2787, 5
    %v4913 = vsel %vm1100, %v4912, %v4911
    %v4914 = vrot.slane %v2876, 4
    %v4915 = vsel %vm1102, %v4914, %v4913
    %v4916 = vrot.slane %v2965, 3
    %v4917 = vsel %vm1104, %v4916, %v4915
    %v4918 = vrot.slane %v3054, 2
    %v4919 = vsel %vm1106, %v4918, %v4917
    %v4920 = vrot.slane %v3143, 1
    %v4921 = vsel %vm1108, %v4920, %v4919
    %v4922 = vrot.slane %v3321, 7
    %v4923 = vsel %vm1096, %v4922, %v3232
    %v4924 = vrot.slane %v3410, 6
    %v4925 = vsel %vm1098, %v4924, %v4923
    %v4926 = vrot.slane %v3499, 5
    %v4927 = vsel %vm1100, %v4926, %v4925
    %v4928 = vrot.slane %v3588, 4
    %v4929 = vsel %vm1102, %v4928, %v4927
    %v4930 = vrot.slane %v3677, 3
    %v4931 = vsel %vm1104, %v4930, %v4929
    %v4932 = vrot.slane %v3766, 2
    %v4933 = vsel %vm1106, %v4932, %v4931
    %v4934 = vrot.slane %v3855, 1
    %v4935 = vsel %vm1108, %v4934, %v4933
    %4938 = vst [vmem:[#allocation17] sm:$0xff] %v4921
    %4939 = vst [vmem:[#allocation17 + $0x8] sm:$0xff] %v4935
    %4940 = vst [vmem:[#allocation18] sm:$0xff] %v4375
    %4941 = vst [vmem:[#allocation18 + $0x8] sm:$0xff] %v4381
    %4942 = vst [vmem:[#allocation20] sm:$0xff] %v4883
    %4943 = vst [vmem:[#allocation20 + $0x8] sm:$0xff] %v4889
    // Predicated region
    $region78: #{tpu_custom_call.1} parent=1 // pred_check
      _
    $region79: #{tpu_custom_call.1} parent=1 // pred_check_branch
      %4945 = sbr.rel (0) target = $region81
    $region80: #{tpu_custom_call.1} parent=1 // pred_region
      %s4947 = ssub.s32 256, 256
      %4948 = vsyncadd [#allocation4], %s4947
      %s4949 = sshll.u32 [#allocation17], 4
      %s4950 = int_to_ptr.vmem [resolvable:$true] %s4949
      %4955 = dma.vmem_to_hbm [thread:$0]  %s4950, 256, %s10, [#allocation4], 128, 128, 8
    $region81: #{tpu_custom_call.1} parent=1 // pred_fallthru
      _
    // Predicated region
    $region82: #{tpu_custom_call.1} parent=1 // pred_check
      _
    $region83: #{tpu_custom_call.1} parent=1 // pred_check_branch
      %4957 = sbr.rel (0) target = $region85
    $region84: #{tpu_custom_call.1} parent=1 // pred_region
      %s4959 = ssub.s32 256, 256
      %4960 = vsyncadd [#allocation19], %s4959
      %s4961 = sshll.u32 [#allocation18], 4
      %s4962 = int_to_ptr.vmem [resolvable:$true] %s4961
      %4967 = dma.vmem_to_hbm [thread:$0]  %s4962, 256, %s11, [#allocation19], 128, 128, 8
    $region85: #{tpu_custom_call.1} parent=1 // pred_fallthru
      _
    // Predicated region
    $region86: #{tpu_custom_call.1} parent=1 // pred_check
      _
    $region87: #{tpu_custom_call.1} parent=1 // pred_check_branch
      %4969 = sbr.rel (0) target = $region89
    $region88: #{tpu_custom_call.1} parent=1 // pred_region
      %s4971 = ssub.s32 256, 256
      %4972 = vsyncadd [#allocation19], %s4971
      %s4973 = sshll.u32 [#allocation20], 4
      %s4974 = int_to_ptr.vmem [resolvable:$true] %s4973
      %4979 = dma.vmem_to_hbm [thread:$0]  %s4974, 256, %s12, [#allocation19], 128, 128, 8
    $region89: #{tpu_custom_call.1} parent=1 // pred_fallthru
      _
    // Predicated region
    $region90: #{tpu_custom_call.1} parent=1 // pred_check
      _
    $region91: #{tpu_custom_call.1} parent=1 // pred_check_branch
      %4981 = sbr.rel (0) target = $region93
    $region92: #{tpu_custom_call.1} parent=1 // pred_region
      %4982 = dma.done [#allocation4], 256
    $region93: #{tpu_custom_call.1} parent=1 // pred_fallthru
      _
    // Predicated region
    $region94: #{tpu_custom_call.1} parent=1 // pred_check
      _
    $region95: #{tpu_custom_call.1} parent=1 // pred_check_branch
      %4984 = sbr.rel (0) target = $region97
    $region96: #{tpu_custom_call.1} parent=1 // pred_region
      %4985 = dma.done [#allocation19], 256
    $region97: #{tpu_custom_call.1} parent=1 // pred_fallthru
      _
    // Predicated region
    $region98: #{tpu_custom_call.1} parent=1 // pred_check
      _
    $region99: #{tpu_custom_call.1} parent=1 // pred_check_branch
      %4987 = sbr.rel (0) target = $region101
    $region100: #{tpu_custom_call.1} parent=1 // pred_region
      %4988 = dma.done [#allocation19], 256
    $region101: #{tpu_custom_call.1} parent=1 // pred_fallthru
      _
    %4989 = vsyncpa [#allocation3], 1
    %4990 = vsyncpa [#allocation6], 1
    %4991 = vsyncpa [#allocation9], 1
    %4992 = vsyncpa [#allocation12], 1
    %4993 = vsyncpa [#allocation15], 1
    %4994 = vsyncpa [#allocation4], 1
    %4995 = vsyncpa [#allocation19], 1

</llo_original>
